<compile_context>
chip_gen: v6e
topology: v6e:2x2x1
jax: 0.10.0
libtpu: 0.0.40
codegen_flags: <defaults>
</compile_context>

<pallas_src>
import functools

import jax
import jax.numpy as jnp
from jax import lax
from jax.experimental import pallas as pl
from jax.experimental.pallas import tpu as pltpu

COMPUTE_DTYPE = jnp.bfloat16   # MXU input dtype; accumulation is always f32


def _pick_tile(dim, target, align):
    """Largest `align`-multiple divisor of `dim` that is <= target.

    Falls back to the full dim (always a legal block shape)."""
    if dim <= target:
        return dim
    t = (min(dim, target) // align) * align
    while t >= align:
        if dim % t == 0:
            return t
        t -= align
    # TODO(synk): unaligned dims fall back to a full-dim block (no padding).
    return dim


def _pick_chunk(dim, target):
    """Largest divisor of `dim` <= target (no alignment needed: leading axis)."""
    t = min(dim, target)
    while t > 1 and dim % t != 0:
        t -= 1
    return max(t, 1)


# ----------------------------------------------------------------------------
# Tiled GEMM + bias:  out = X @ W + b   (bf16 inputs, f32 accumulation/output)
# The f32 output block is resident across k and is itself the accumulator
# (bias is the k==0 init) -- no scratch.
# ----------------------------------------------------------------------------
def _matmul_bias_kernel(x_ref, w_ref, b_ref, o_ref):
    k = pl.program_id(2)

    @pl.when(k == 0)
    def _():
        o_ref[...] = jnp.broadcast_to(b_ref[...], o_ref.shape).astype(o_ref.dtype)

    o_ref[...] += jnp.dot(x_ref[...], w_ref[...],
                          preferred_element_type=jnp.float32)


def matmul_bias(x, w, b, *, tm=256, tn=1024, tk=1024):
    """x: (N, K) bf16; w: (K, P) bf16; b: (1, P) f32  ->  (N, P) f32."""
    N, K = x.shape
    _, P = w.shape
    tm = _pick_tile(N, tm, 8)
    tn = _pick_tile(P, tn, 128)
    tk = _pick_tile(K, tk, 128)
    return pl.pallas_call(
        _matmul_bias_kernel,
        out_shape=jax.ShapeDtypeStruct((N, P), jnp.float32),
        grid_spec=pltpu.PrefetchScalarGridSpec(
            num_scalar_prefetch=0,
            grid=(N // tm, P // tn, K // tk),
            in_specs=[
                pl.BlockSpec((tm, tk), lambda i, j, k: (i, k)),   # X tile
                pl.BlockSpec((tk, tn), lambda i, j, k: (k, j)),   # W tile
                pl.BlockSpec((1, tn), lambda i, j, k: (0, j)),    # bias tile
            ],
            out_specs=pl.BlockSpec((tm, tn), lambda i, j, k: (i, j)),
        ),
        compiler_params=pltpu.CompilerParams(
            dimension_semantics=("parallel", "parallel", "arbitrary"),
            vmem_limit_bytes=48 * 1024 * 1024),
    )(x, w, b)


# ----------------------------------------------------------------------------
# LSTM recurrence kernel.
#   grid = (batch_chunks, time_chunks); time axis is the serial recurrence.
#   gates_x already contains x@W_ih^T + (b_ih+b_hh); per step we only add
#   h_prev @ W_hh^T and apply the gate math.  Gate order: [i, f, o, g]
#   (pre-permuted offline) so sigmoid covers one contiguous 3H slab.
#   W_hh^T lives in HBM (pl.ANY) and is DMA'd once per batch chunk into a
#   single-buffered VMEM scratch, overlapped with the h0/c0 init.
# ----------------------------------------------------------------------------
def _lstm_recurrence_kernel(gx_ref, whh_hbm, h0_ref, c0_ref,
                            y_ref, hN_ref, cN_ref,
                            whh_scr, h_scr, c_scr, dma_sem,
                            *, hidden_dim, chunk, compute_dtype):
    s = pl.program_id(1)   # time-chunk index (serial)

    @pl.when(s == 0)
    def _():
        cp = pltpu.make_async_copy(whh_hbm, whh_scr, dma_sem)
        cp.start()
        h_scr[...] = h0_ref[...]
        c_scr[...] = c0_ref[...]
        cp.wait()

    H = hidden_dim

    def step(i, carry):
        h_prev = h_scr[...]                # (Bc, H) f32
        c_prev = c_scr[...]                # (Bc, H) f32
        # Read the weight from VMEM scratch inside the step (no hoisted vreg
        # materialization across the whole chunk).
        gates = gx_ref[i] + jnp.dot(h_prev.astype(compute_dtype), whh_scr[...],
                                    preferred_element_type=jnp.float32)
        sig = jax.nn.sigmoid(gates[:, :3 * H])     # fused [i, f, o]
        g_g = jnp.tanh(gates[:, 3 * H:])
        i_g = sig[:, 0 * H:1 * H]
        f_g = sig[:, 1 * H:2 * H]
        o_g = sig[:, 2 * H:3 * H]
        c_new = f_g * c_prev + i_g * g_g
        h_new = o_g * jnp.tanh(c_new)
        c_scr[...] = c_new
        h_scr[...] = h_new
        y_ref[i] = h_new.astype(y_ref.dtype)
        return carry

    lax.fori_loop(0, chunk, step, 0, unroll=True)

    @pl.when(s == pl.num_programs(1) - 1)
    def _():
        hN_ref[...] = h_scr[...]
        cN_ref[...] = c_scr[...]


def lstm_recurrence(gates_x, w_hh_t, h0, c0, *, time_block, batch_block,
                    compute_dtype=COMPUTE_DTYPE):
    """gates_x: (T, B, 4H) f32; w_hh_t: (H, 4H) bf16 (gate-permuted);
    h0/c0: (B, H) f32.  Returns y (T,B,H) bf16, hN (B,H) f32, cN (B,H) f32."""
    T, B, G = gates_x.shape
    H = h0.shape[-1]
    assert T % time_block == 0
    assert B % batch_block == 0
    nb = B // batch_block
    ns = T // time_block

    kernel = functools.partial(_lstm_recurrence_kernel,
                               hidden_dim=H, chunk=time_block,
                               compute_dtype=compute_dtype)
    y, hN, cN = pl.pallas_call(
        kernel,
        out_shape=(
            jax.ShapeDtypeStruct((T, B, H), compute_dtype),   # y in bf16
            jax.ShapeDtypeStruct((B, H), jnp.float32),
            jax.ShapeDtypeStruct((B, H), jnp.float32),
        ),
        grid_spec=pltpu.PrefetchScalarGridSpec(
            num_scalar_prefetch=0,
            grid=(nb, ns),
            in_specs=[
                pl.BlockSpec((time_block, batch_block, G),
                             lambda b, s: (s, b, 0)),              # gates_x chunk
                pl.BlockSpec(memory_space=pl.ANY),                 # W_hh^T in HBM
                pl.BlockSpec((batch_block, H), lambda b, s: (b, 0)),  # h0
                pl.BlockSpec((batch_block, H), lambda b, s: (b, 0)),  # c0
            ],
            out_specs=[
                pl.BlockSpec((time_block, batch_block, H),
                             lambda b, s: (s, b, 0)),              # y chunk
                pl.BlockSpec((batch_block, H), lambda b, s: (b, 0)),  # h_final
                pl.BlockSpec((batch_block, H), lambda b, s: (b, 0)),  # c_final
            ],
            scratch_shapes=[
                pltpu.VMEM((H, G), w_hh_t.dtype),                  # W_hh^T (once)
                pltpu.VMEM((batch_block, H), jnp.float32),         # h carry
                pltpu.VMEM((batch_block, H), jnp.float32),         # c carry
                pltpu.SemaphoreType.DMA(()),                       # weight DMA sem
            ],
        ),
        compiler_params=pltpu.CompilerParams(
            # batch chunks are independent ("parallel" -> megacore when nb > 1,
            # which the caller should only do when each core keeps >=128 rows);
            # the time axis is the serial recurrence ("arbitrary").
            dimension_semantics=("parallel", "arbitrary"),
            vmem_limit_bytes=48 * 1024 * 1024),
    )(gates_x, w_hh_t, h0, c0)
    return y, hN, cN


# ----------------------------------------------------------------------------
# One LSTM layer over the full sequence (prepared/bf16 weights).
# ----------------------------------------------------------------------------
def lstm_layer(x_bf16, wih_t, whh_t, bias, h0, c0, *, time_block, batch_block):
    """x_bf16: (T, B, E_in) bf16; wih_t: (E_in, 4H) bf16; whh_t: (H, 4H) bf16;
    bias: (1, 4H) f32; h0/c0: (B, H) f32."""
    T, B, E_in = x_bf16.shape
    H = h0.shape[-1]

    # Hoisted input projection: one big MXU GEMM instead of T tiny matmuls.
    gates_x = matmul_bias(x_bf16.reshape(T * B, E_in), wih_t, bias)  # (T*B,4H) f32
    gates_x = gates_x.reshape(T, B, 4 * H)

    return lstm_recurrence(gates_x, whh_t, h0, c0,
                           time_block=time_block, batch_block=batch_block,
                           compute_dtype=wih_t.dtype)


# ----------------------------------------------------------------------------
# Final linear head: logits = X @ W^T + b  (tiled GEMM kernel)
# ----------------------------------------------------------------------------
def fc_head(x2d_bf16, fc_w_t, fc_b2d):
    """x2d: (N, H) bf16; fc_w_t: (H, V) bf16; fc_b2d: (1, V) f32 -> (N, V) f32."""
    return matmul_bias(x2d_bf16, fc_w_t, fc_b2d)


# ----------------------------------------------------------------------------
# One-time parameter preparation: transpose + bf16 cast + gate reorder.
# PyTorch gate row order is [i, f, g, o]; we permute to [i, f, o, g] so the
# kernel applies sigmoid on one contiguous 3H slab and tanh on the last H.
# ----------------------------------------------------------------------------
def _permute_gate_rows(w):
    H = w.shape[0] // 4
    return jnp.concatenate([w[:2 * H], w[3 * H:], w[2 * H:3 * H]], axis=0)


def prepare_params(params, compute_dtype=COMPUTE_DTYPE):
    prep = {
        "embedding": params["embedding"].astype(compute_dtype),
        "fc_w_t": jnp.transpose(params["fc_w"]).astype(compute_dtype),   # (H, V)
        "fc_b": params["fc_b"].astype(jnp.float32).reshape(1, -1),
        "lstm": [],
    }
    for lp in params["lstm"]:
        G = lp["w_ih"].shape[0]                    # 4H
        wih = _permute_gate_rows(lp["w_ih"])       # (4H, E_in)
        whh = _permute_gate_rows(lp["w_hh"])       # (4H, H)
        bias = _permute_gate_rows(lp["b_ih"] + lp["b_hh"]).reshape(1, G)
        prep["lstm"].append({
            "wih_t": jnp.transpose(wih).astype(compute_dtype),   # (E_in, 4H)
            "whh_t": jnp.transpose(whh).astype(compute_dtype),   # (H, 4H)
            "bias": bias.astype(jnp.float32),                    # (1, 4H)
        })
    return prep


# ----------------------------------------------------------------------------
# Full model forward (matches LM_LSTM.forward semantics, eval-mode dropout)
# ----------------------------------------------------------------------------
def lm_lstm_forward(prep, inputs, hidden, *, time_block=8, batch_block=None):
    """inputs: (T, B) int32; hidden = (h0, c0) each (L, B, H) f32."""
    T, B = inputs.shape
    V = prep["fc_w_t"].shape[1]

    tb = _pick_chunk(T, time_block)
    bb = B if batch_block is None else batch_block

    # Embedding gather (plain-JAX glue) + dropout (identity in eval).
    x = jnp.take(prep["embedding"], inputs, axis=0)     # (T, B, E) bf16

    h0, c0 = hidden
    h_finals, c_finals = [], []
    for layer_idx, lp in enumerate(prep["lstm"]):
        x, hN, cN = lstm_layer(x, lp["wih_t"], lp["whh_t"], lp["bias"],
                               h0[layer_idx], c0[layer_idx],
                               time_block=tb, batch_block=bb)
        h_finals.append(hN)
        c_finals.append(cN)
        # TODO(synk): inter-layer dropout of nn.LSTM skipped (eval semantics).
    h_n = jnp.stack(h_finals, axis=0)    # (L, B, H)
    c_n = jnp.stack(c_finals, axis=0)    # (L, B, H)

    H = x.shape[-1]
    logits = fc_head(x.reshape(T * B, H), prep["fc_w_t"], prep["fc_b"])
    return logits.reshape(T, B, V), (h_n, c_n)


# ----------------------------------------------------------------------------
# Deterministic parameter init (mirrors LM_LSTM.__init__ / init_weights)
# ----------------------------------------------------------------------------
def init_params(key, vocab_size, embedding_dim, hidden_dim, num_layers):
    init_range = 0.1
    keys = jax.random.split(key, 2 + 4 * num_layers)
    params = {}
    params["embedding"] = jax.random.uniform(
        keys[0], (vocab_size, embedding_dim), jnp.float32, -init_range, init_range)
    params["fc_w"] = jax.random.uniform(
        keys[1], (vocab_size, hidden_dim), jnp.float32, -init_range, init_range)
    params["fc_b"] = jnp.zeros((vocab_size,), jnp.float32)

    lstm_params = []
    stdv = 1.0 / jnp.sqrt(hidden_dim)    # PyTorch default LSTM init range
    for l in range(num_layers):
        in_dim = embedding_dim if l == 0 else hidden_dim
        k = keys[2 + 4 * l: 2 + 4 * (l + 1)]
        lstm_params.append({
            "w_ih": jax.random.uniform(k[0], (4 * hidden_dim, in_dim),
                                       jnp.float32, -stdv, stdv),
            "w_hh": jax.random.uniform(k[1], (4 * hidden_dim, hidden_dim),
                                       jnp.float32, -stdv, stdv),
            "b_ih": jax.random.uniform(k[2], (4 * hidden_dim,),
                                       jnp.float32, -stdv, stdv),
            "b_hh": jax.random.uniform(k[3], (4 * hidden_dim,),
                                       jnp.float32, -stdv, stdv),
        })
    params["lstm"] = lstm_params
    return params


# ----------------------------------------------------------------------------
# Pure-JAX reference (same bf16/f32 numerics, PyTorch gate order) for sanity
# check; validates the offline gate permutation too.
# ----------------------------------------------------------------------------
def lm_lstm_reference(params, inputs, hidden, compute_dtype=jnp.float32):
    cd = compute_dtype
    embeds = jnp.take(params["embedding"], inputs, axis=0)
    h0, c0 = hidden
    x = embeds
    h_fin, c_fin = [], []
    for l, lp in enumerate(params["lstm"]):
        H = lp["w_hh"].shape[-1]
        wih_t = lp["w_ih"].T.astype(cd)
        whh_t = lp["w_hh"].T.astype(cd)
        bias = (lp["b_ih"] + lp["b_hh"]).astype(jnp.float32)

        def step(carry, x_t, wih_t=wih_t, whh_t=whh_t, bias=bias, H=H):
            h, c = carry
            gates = (jnp.dot(x_t.astype(cd), wih_t,
                             preferred_element_type=jnp.float32)
                     + bias
                     + jnp.dot(h.astype(cd), whh_t,
                               preferred_element_type=jnp.float32))
            i = jax.nn.sigmoid(gates[:, 0 * H:1 * H])
            f = jax.nn.sigmoid(gates[:, 1 * H:2 * H])
            g = jnp.tanh(gates[:, 2 * H:3 * H])
            o = jax.nn.sigmoid(gates[:, 3 * H:4 * H])
            c_new = f * c + i * g
            h_new = o * jnp.tanh(c_new)
            return (h_new, c_new), h_new

        (hN, cN), y = jax.lax.scan(step, (h0[l], c0[l]), x)
        x = y
        h_fin.append(hN)
        c_fin.append(cN)
    T, B, H = x.shape
    V = params["fc_w"].shape[0]
    logits = (jnp.dot(x.reshape(T * B, H).astype(cd),
                      params["fc_w"].T.astype(cd),
                      preferred_element_type=jnp.float32)
              + params["fc_b"]).reshape(T, B, V)
    return logits, (jnp.stack(h_fin), jnp.stack(c_fin))


if __name__ == "__main__":
    # Small but lane/sublane-aligned shapes (B mult of 8, E/H/V mult of 128).
    num_steps = 16
    batch_size = 8
    vocab_size = 256
    embedding_dim = 128
    hidden_dim = 128
    num_layers = 2

    key = jax.random.PRNGKey(0)
    pkey, ikey = jax.random.split(key)
    params = init_params(pkey, vocab_size, embedding_dim, hidden_dim, num_layers)
    prep = prepare_params(params, COMPUTE_DTYPE)   # one-time transpose/cast/permute

    inputs = jax.random.randint(ikey, (num_steps, batch_size), 0, vocab_size,
                                dtype=jnp.int32)
    hidden0 = (jnp.zeros((num_layers, batch_size, hidden_dim), jnp.float32),
               jnp.zeros((num_layers, batch_size, hidden_dim), jnp.float32))

    fwd = jax.jit(functools.partial(lm_lstm_forward, time_block=8))
    logits, (h_n, c_n) = fwd(prep, inputs, hidden0)
    jax.block_until_ready((logits, h_n, c_n))

    # Sanity check against a pure-JAX reference using the same bf16/f32 numerics.
    ref_logits, (ref_h, ref_c) = lm_lstm_reference(params, inputs, hidden0,
                                                   compute_dtype=COMPUTE_DTYPE)
    assert logits.shape == (num_steps, batch_size, vocab_size)
    assert h_n.shape == (num_layers, batch_size, hidden_dim)
    assert c_n.shape == (num_layers, batch_size, hidden_dim)
    assert jnp.allclose(logits, ref_logits, atol=2e-3, rtol=2e-3)
    assert jnp.allclose(h_n, ref_h, atol=2e-3, rtol=2e-3)
    assert jnp.allclose(c_n, ref_c, atol=2e-3, rtol=2e-3)

    print("KERNEL_OK")
</pallas_src>

<mosaic_0001>
module attributes {stable_mosaic.version = 11 : i64} {
  func.func @_matmul_bias_kernel(%arg0: i32, %arg1: i32, %arg2: i32, %arg3: memref<128x128xbf16, #tpu.memory_space<vmem>>, %arg4: memref<128x512xbf16, #tpu.memory_space<vmem>>, %arg5: memref<1x512xf32, #tpu.memory_space<vmem>>, %arg6: memref<128x512xf32, #tpu.memory_space<vmem>>) attributes {dimension_semantics = [#tpu.dimension_semantics<parallel>, #tpu.dimension_semantics<parallel>, #tpu.dimension_semantics<arbitrary>], iteration_bounds = array<i64: 1, 1, 1>, scalar_prefetch = 0 : i64, scratch_operands = 0 : i64, tpu.core_type = #tpu.core_type<tc>, window_params = [{transform_indices = @transform_0, window_bounds = array<i64: 128, 128>}, {transform_indices = @transform_1, window_bounds = array<i64: 128, 512>}, {transform_indices = @transform_2, window_bounds = array<i64: 1, 512>}, {transform_indices = @transform_3, window_bounds = array<i64: 128, 512>}]} {
    %c0_i32 = arith.constant 0 : i32
    %0 = arith.cmpi eq, %arg2, %c0_i32 : i32
    %1 = arith.extui %0 : i1 to i32
    %c0_i32_0 = arith.constant 0 : i32
    %2 = arith.cmpi ne, %1, %c0_i32_0 : i32
    scf.if %2 {
      %c0_8 = arith.constant 0 : index
      %c0_9 = arith.constant 0 : index
      %9 = vector.load %arg5[%c0_8, %c0_9] : memref<1x512xf32, #tpu.memory_space<vmem>>, vector<1x512xf32>
      %10 = vector.shape_cast %9 : vector<1x512xf32> to vector<1x512xf32>
      %11 = vector.broadcast %10 : vector<1x512xf32> to vector<128x512xf32>
      %c0_10 = arith.constant 0 : index
      %c0_11 = arith.constant 0 : index
      %12 = vector.load %arg6[%c0_10, %c0_11] : memref<128x512xf32, #tpu.memory_space<vmem>>, vector<128x512xf32>
      tpu.vector_store %arg6[%c0_10, %c0_11], %11 {strides = array<i32>} : memref<128x512xf32, #tpu.memory_space<vmem>>, vector<128x512xf32>,
    } else {
    }
    %c0 = arith.constant 0 : index
    %c0_1 = arith.constant 0 : index
    %3 = vector.load %arg6[%c0, %c0_1] : memref<128x512xf32, #tpu.memory_space<vmem>>, vector<128x512xf32>
    %c0_2 = arith.constant 0 : index
    %c0_3 = arith.constant 0 : index
    %4 = vector.load %arg3[%c0_2, %c0_3] : memref<128x128xbf16, #tpu.memory_space<vmem>>, vector<128x128xbf16>
    %c0_4 = arith.constant 0 : index
    %c0_5 = arith.constant 0 : index
    %5 = vector.load %arg4[%c0_4, %c0_5] : memref<128x512xbf16, #tpu.memory_space<vmem>>, vector<128x512xbf16>
    %cst = arith.constant dense<0.000000e+00> : vector<128x512xf32>
    %6 = tpu.matmul %4, %5, %cst {dimension_numbers = #tpu.dot_dimension_numbers<[1], [0], [0], [1], [0, 0, 1, 1], [], []>} : vector<128x128xbf16>, vector<128x512xbf16>, vector<128x512xf32> -> vector<128x512xf32>
    %7 = arith.addf %3, %6 : vector<128x512xf32>
    %c0_6 = arith.constant 0 : index
    %c0_7 = arith.constant 0 : index
    %8 = vector.load %arg6[%c0_6, %c0_7] : memref<128x512xf32, #tpu.memory_space<vmem>>, vector<128x512xf32>
    tpu.vector_store %arg6[%c0_6, %c0_7], %7 {strides = array<i32>} : memref<128x512xf32, #tpu.memory_space<vmem>>, vector<128x512xf32>,
    return
  }
  func.func @transform_0(%arg0: i32, %arg1: i32, %arg2: i32) -> (i32, i32) {
    %c0_i32 = arith.constant 0 : i32
    return %arg0, %arg2 : i32, i32
  }
  func.func @transform_1(%arg0: i32, %arg1: i32, %arg2: i32) -> (i32, i32) {
    %c0_i32 = arith.constant 0 : i32
    return %arg2, %arg1 : i32, i32
  }
  func.func @transform_2(%arg0: i32, %arg1: i32, %arg2: i32) -> (i32, i32) {
    %c0_i32 = arith.constant 0 : i32
    %c0_i32_0 = arith.constant 0 : i32
    return %c0_i32, %arg1 : i32, i32
  }
  func.func @transform_3(%arg0: i32, %arg1: i32, %arg2: i32) -> (i32, i32) {
    %c0_i32 = arith.constant 0 : i32
    return %arg0, %arg1 : i32, i32
  }
}

module attributes {stable_mosaic.version = 11 : i64} {
  func.func @_lstm_recurrence_kernel(%arg0: i32, %arg1: i32, %arg2: memref<8x8x512xf32, #tpu.memory_space<vmem>>, %arg3: memref<128x512xbf16, #tpu.memory_space<any>>, %arg4: memref<8x128xf32, #tpu.memory_space<vmem>>, %arg5: memref<8x128xf32, #tpu.memory_space<vmem>>, %arg6: memref<8x8x128xbf16, #tpu.memory_space<vmem>>, %arg7: memref<8x128xf32, #tpu.memory_space<vmem>>, %arg8: memref<8x128xf32, #tpu.memory_space<vmem>>, %arg9: memref<128x512xbf16, #tpu.memory_space<vmem>>, %arg10: memref<8x128xf32, #tpu.memory_space<vmem>>, %arg11: memref<8x128xf32, #tpu.memory_space<vmem>>, %arg12: memref<!tpu.dma_semaphore, #tpu.memory_space<semaphore_mem>>) attributes {dimension_semantics = [#tpu.dimension_semantics<parallel>, #tpu.dimension_semantics<arbitrary>], iteration_bounds = array<i64: 1, 2>, scalar_prefetch = 0 : i64, scratch_operands = 4 : i64, tpu.core_type = #tpu.core_type<tc>, window_params = [{transform_indices = @transform_0, window_bounds = array<i64: 8, 8, 512>}, {}, {transform_indices = @transform_2, window_bounds = array<i64: 8, 128>}, {transform_indices = @transform_3, window_bounds = array<i64: 8, 128>}, {transform_indices = @transform_4, window_bounds = array<i64: 8, 8, 128>}, {transform_indices = @transform_5, window_bounds = array<i64: 8, 128>}, {transform_indices = @transform_6, window_bounds = array<i64: 8, 128>}]} {
    %c0_i32 = arith.constant 0 : i32
    %0 = arith.cmpi eq, %arg1, %c0_i32 : i32
    %1 = arith.extui %0 : i1 to i32
    %c0_i32_0 = arith.constant 0 : i32
    %2 = arith.cmpi ne, %1, %c0_i32_0 : i32
    scf.if %2 {
      tpu.enqueue_dma source(%arg3 : memref<128x512xbf16, #tpu.memory_space<any>>) target(%arg9 : memref<128x512xbf16, #tpu.memory_space<vmem>>) target_semaphore(%arg12 : memref<!tpu.dma_semaphore, #tpu.memory_space<semaphore_mem>>)
      %c0_130 = arith.constant 0 : index
      %c0_131 = arith.constant 0 : index
      %262 = vector.load %arg4[%c0_130, %c0_131] : memref<8x128xf32, #tpu.memory_space<vmem>>, vector<8x128xf32>
      %c0_132 = arith.constant 0 : index
      %c0_133 = arith.constant 0 : index
      %263 = vector.load %arg10[%c0_132, %c0_133] : memref<8x128xf32, #tpu.memory_space<vmem>>, vector<8x128xf32>
      tpu.vector_store %arg10[%c0_132, %c0_133], %262 {strides = array<i32>} : memref<8x128xf32, #tpu.memory_space<vmem>>, vector<8x128xf32>,
      %c0_134 = arith.constant 0 : index
      %c0_135 = arith.constant 0 : index
      %264 = vector.load %arg5[%c0_134, %c0_135] : memref<8x128xf32, #tpu.memory_space<vmem>>, vector<8x128xf32>
      %c0_136 = arith.constant 0 : index
      %c0_137 = arith.constant 0 : index
      %265 = vector.load %arg11[%c0_136, %c0_137] : memref<8x128xf32, #tpu.memory_space<vmem>>, vector<8x128xf32>
      tpu.vector_store %arg11[%c0_136, %c0_137], %264 {strides = array<i32>} : memref<8x128xf32, #tpu.memory_space<vmem>>, vector<8x128xf32>,
      tpu.wait_dma2 semaphore(%arg12 : memref<!tpu.dma_semaphore, #tpu.memory_space<semaphore_mem>>) src(%arg3 : memref<128x512xbf16, #tpu.memory_space<any>>) dst(%arg9 : memref<128x512xbf16, #tpu.memory_space<vmem>>)
    } else {
    }
    %c0_i32_1 = arith.constant 0 : i32
    %c0 = arith.constant 0 : index
    %c0_2 = arith.constant 0 : index
    %3 = vector.load %arg10[%c0, %c0_2] : memref<8x128xf32, #tpu.memory_space<vmem>>, vector<8x128xf32>
    %c0_3 = arith.constant 0 : index
    %c0_4 = arith.constant 0 : index
    %4 = vector.load %arg11[%c0_3, %c0_4] : memref<8x128xf32, #tpu.memory_space<vmem>>, vector<8x128xf32>
    %5 = arith.index_cast %c0_i32_1 : i32 to index
    %c0_5 = arith.constant 0 : index
    %c0_6 = arith.constant 0 : index
    %6 = vector.load %arg2[%5, %c0_5, %c0_6] : memref<8x8x512xf32, #tpu.memory_space<vmem>>, vector<1x8x512xf32>
    %7 = vector.shape_cast %6 : vector<1x8x512xf32> to vector<8x512xf32>
    %8 = arith.truncf %3 : vector<8x128xf32> to vector<8x128xbf16>
    %c0_7 = arith.constant 0 : index
    %c0_8 = arith.constant 0 : index
    %9 = vector.load %arg9[%c0_7, %c0_8] : memref<128x512xbf16, #tpu.memory_space<vmem>>, vector<128x512xbf16>
    %cst = arith.constant dense<0.000000e+00> : vector<8x512xf32>
    %10 = tpu.matmul %8, %9, %cst {dimension_numbers = #tpu.dot_dimension_numbers<[1], [0], [0], [1], [0, 0, 1, 1], [], []>} : vector<8x128xbf16>, vector<128x512xbf16>, vector<8x512xf32> -> vector<8x512xf32>
    %11 = arith.addf %7, %10 : vector<8x512xf32>
    %12 = vector.extract_strided_slice %11 {offsets = [0, 0], sizes = [8, 384], strides = [1, 1]} : vector<8x512xf32> to vector<8x384xf32>
    %13 = arith.negf %12 : vector<8x384xf32>
    %14 = math.exp %13 : vector<8x384xf32>
    %cst_9 = arith.constant 1.000000e+00 : f32
    %15 = vector.broadcast %cst_9 : f32 to vector<8x384xf32>
    %16 = arith.addf %15, %14 : vector<8x384xf32>
    %17 = arith.divf %15, %16 : vector<8x384xf32>
    %18 = vector.extract_strided_slice %11 {offsets = [0, 384], sizes = [8, 128], strides = [1, 1]} : vector<8x512xf32> to vector<8x128xf32>
    %19 = math.tanh %18 : vector<8x128xf32>
    %20 = vector.extract_strided_slice %17 {offsets = [0, 0], sizes = [8, 128], strides = [1, 1]} : vector<8x384xf32> to vector<8x128xf32>
    %21 = vector.extract_strided_slice %17 {offsets = [0, 128], sizes = [8, 128], strides = [1, 1]} : vector<8x384xf32> to vector<8x128xf32>
    %22 = vector.extract_strided_slice %17 {offsets = [0, 256], sizes = [8, 128], strides = [1, 1]} : vector<8x384xf32> to vector<8x128xf32>
    %23 = arith.mulf %21, %4 : vector<8x128xf32>
    %24 = arith.mulf %20, %19 : vector<8x128xf32>
    %25 = arith.addf %23, %24 : vector<8x128xf32>
    %26 = math.tanh %25 : vector<8x128xf32>
    %27 = arith.mulf %22, %26 : vector<8x128xf32>
    %c0_10 = arith.constant 0 : index
    %c0_11 = arith.constant 0 : index
    %28 = vector.load %arg11[%c0_10, %c0_11] : memref<8x128xf32, #tpu.memory_space<vmem>>, vector<8x128xf32>
    tpu.vector_store %arg11[%c0_10, %c0_11], %25 {strides = array<i32>} : memref<8x128xf32, #tpu.memory_space<vmem>>, vector<8x128xf32>,
    %c0_12 = arith.constant 0 : index
    %c0_13 = arith.constant 0 : index
    %29 = vector.load %arg10[%c0_12, %c0_13] : memref<8x128xf32, #tpu.memory_space<vmem>>, vector<8x128xf32>
    tpu.vector_store %arg10[%c0_12, %c0_13], %27 {strides = array<i32>} : memref<8x128xf32, #tpu.memory_space<vmem>>, vector<8x128xf32>,
    %30 = arith.truncf %27 : vector<8x128xf32> to vector<8x128xbf16>
    %31 = arith.index_cast %c0_i32_1 : i32 to index
    %c0_14 = arith.constant 0 : index
    %c0_15 = arith.constant 0 : index
    %32 = vector.load %arg6[%31, %c0_14, %c0_15] : memref<8x8x128xbf16, #tpu.memory_space<vmem>>, vector<1x8x128xbf16>
    %33 = vector.shape_cast %32 : vector<1x8x128xbf16> to vector<8x128xbf16>
    %34 = vector.shape_cast %30 : vector<8x128xbf16> to vector<1x8x128xbf16>
    tpu.vector_store %arg6[%31, %c0_14, %c0_15], %34 {strides = array<i32>} : memref<8x8x128xbf16, #tpu.memory_space<vmem>>, vector<1x8x128xbf16>,
    %c1_i32 = arith.constant 1 : i32
    %c0_16 = arith.constant 0 : index
    %c0_17 = arith.constant 0 : index
    %35 = vector.load %arg10[%c0_16, %c0_17] : memref<8x128xf32, #tpu.memory_space<vmem>>, vector<8x128xf32>
    %c0_18 = arith.constant 0 : index
    %c0_19 = arith.constant 0 : index
    %36 = vector.load %arg11[%c0_18, %c0_19] : memref<8x128xf32, #tpu.memory_space<vmem>>, vector<8x128xf32>
    %37 = arith.index_cast %c1_i32 : i32 to index
    %c0_20 = arith.constant 0 : index
    %c0_21 = arith.constant 0 : index
    %38 = vector.load %arg2[%37, %c0_20, %c0_21] : memref<8x8x512xf32, #tpu.memory_space<vmem>>, vector<1x8x512xf32>
    %39 = vector.shape_cast %38 : vector<1x8x512xf32> to vector<8x512xf32>
    %40 = arith.truncf %35 : vector<8x128xf32> to vector<8x128xbf16>
    %c0_22 = arith.constant 0 : index
    %c0_23 = arith.constant 0 : index
    %41 = vector.load %arg9[%c0_22, %c0_23] : memref<128x512xbf16, #tpu.memory_space<vmem>>, vector<128x512xbf16>
    %cst_24 = arith.constant dense<0.000000e+00> : vector<8x512xf32>
    %42 = tpu.matmul %40, %41, %cst_24 {dimension_numbers = #tpu.dot_dimension_numbers<[1], [0], [0], [1], [0, 0, 1, 1], [], []>} : vector<8x128xbf16>, vector<128x512xbf16>, vector<8x512xf32> -> vector<8x512xf32>
    %43 = arith.addf %39, %42 : vector<8x512xf32>
    %44 = vector.extract_strided_slice %43 {offsets = [0, 0], sizes = [8, 384], strides = [1, 1]} : vector<8x512xf32> to vector<8x384xf32>
    %45 = arith.negf %44 : vector<8x384xf32>
    %46 = math.exp %45 : vector<8x384xf32>
    %cst_25 = arith.constant 1.000000e+00 : f32
    %47 = vector.broadcast %cst_25 : f32 to vector<8x384xf32>
    %48 = arith.addf %47, %46 : vector<8x384xf32>
    %49 = arith.divf %47, %48 : vector<8x384xf32>
    %50 = vector.extract_strided_slice %43 {offsets = [0, 384], sizes = [8, 128], strides = [1, 1]} : vector<8x512xf32> to vector<8x128xf32>
    %51 = math.tanh %50 : vector<8x128xf32>
    %52 = vector.extract_strided_slice %49 {offsets = [0, 0], sizes = [8, 128], strides = [1, 1]} : vector<8x384xf32> to vector<8x128xf32>
    %53 = vector.extract_strided_slice %49 {offsets = [0, 128], sizes = [8, 128], strides = [1, 1]} : vector<8x384xf32> to vector<8x128xf32>
    %54 = vector.extract_strided_slice %49 {offsets = [0, 256], sizes = [8, 128], strides = [1, 1]} : vector<8x384xf32> to vector<8x128xf32>
    %55 = arith.mulf %53, %36 : vector<8x128xf32>
    %56 = arith.mulf %52, %51 : vector<8x128xf32>
    %57 = arith.addf %55, %56 : vector<8x128xf32>
    %58 = math.tanh %57 : vector<8x128xf32>
    %59 = arith.mulf %54, %58 : vector<8x128xf32>
    %c0_26 = arith.constant 0 : index
    %c0_27 = arith.constant 0 : index
    %60 = vector.load %arg11[%c0_26, %c0_27] : memref<8x128xf32, #tpu.memory_space<vmem>>, vector<8x128xf32>
    tpu.vector_store %arg11[%c0_26, %c0_27], %57 {strides = array<i32>} : memref<8x128xf32, #tpu.memory_space<vmem>>, vector<8x128xf32>,
    %c0_28 = arith.constant 0 : index
    %c0_29 = arith.constant 0 : index
    %61 = vector.load %arg10[%c0_28, %c0_29] : memref<8x128xf32, #tpu.memory_space<vmem>>, vector<8x128xf32>
    tpu.vector_store %arg10[%c0_28, %c0_29], %59 {strides = array<i32>} : memref<8x128xf32, #tpu.memory_space<vmem>>, vector<8x128xf32>,
    %62 = arith.truncf %59 : vector<8x128xf32> to vector<8x128xbf16>
    %63 = arith.index_cast %c1_i32 : i32 to index
    %c0_30 = arith.constant 0 : index
    %c0_31 = arith.constant 0 : index
    %64 = vector.load %arg6[%63, %c0_30, %c0_31] : memref<8x8x128xbf16, #tpu.memory_space<vmem>>, vector<1x8x128xbf16>
    %65 = vector.shape_cast %64 : vector<1x8x128xbf16> to vector<8x128xbf16>
    %66 = vector.shape_cast %62 : vector<8x128xbf16> to vector<1x8x128xbf16>
    tpu.vector_store %arg6[%63, %c0_30, %c0_31], %66 {strides = array<i32>} : memref<8x8x128xbf16, #tpu.memory_space<vmem>>, vector<1x8x128xbf16>,
    %c2_i32 = arith.constant 2 : i32
    %c0_32 = arith.constant 0 : index
    %c0_33 = arith.constant 0 : index
    %67 = vector.load %arg10[%c0_32, %c0_33] : memref<8x128xf32, #tpu.memory_space<vmem>>, vector<8x128xf32>
    %c0_34 = arith.constant 0 : index
    %c0_35 = arith.constant 0 : index
    %68 = vector.load %arg11[%c0_34, %c0_35] : memref<8x128xf32, #tpu.memory_space<vmem>>, vector<8x128xf32>
    %69 = arith.index_cast %c2_i32 : i32 to index
    %c0_36 = arith.constant 0 : index
    %c0_37 = arith.constant 0 : index
    %70 = vector.load %arg2[%69, %c0_36, %c0_37] : memref<8x8x512xf32, #tpu.memory_space<vmem>>, vector<1x8x512xf32>
    %71 = vector.shape_cast %70 : vector<1x8x512xf32> to vector<8x512xf32>
    %72 = arith.truncf %67 : vector<8x128xf32> to vector<8x128xbf16>
    %c0_38 = arith.constant 0 : index
    %c0_39 = arith.constant 0 : index
    %73 = vector.load %arg9[%c0_38, %c0_39] : memref<128x512xbf16, #tpu.memory_space<vmem>>, vector<128x512xbf16>
    %cst_40 = arith.constant dense<0.000000e+00> : vector<8x512xf32>
    %74 = tpu.matmul %72, %73, %cst_40 {dimension_numbers = #tpu.dot_dimension_numbers<[1], [0], [0], [1], [0, 0, 1, 1], [], []>} : vector<8x128xbf16>, vector<128x512xbf16>, vector<8x512xf32> -> vector<8x512xf32>
    %75 = arith.addf %71, %74 : vector<8x512xf32>
    %76 = vector.extract_strided_slice %75 {offsets = [0, 0], sizes = [8, 384], strides = [1, 1]} : vector<8x512xf32> to vector<8x384xf32>
    %77 = arith.negf %76 : vector<8x384xf32>
    %78 = math.exp %77 : vector<8x384xf32>
    %cst_41 = arith.constant 1.000000e+00 : f32
    %79 = vector.broadcast %cst_41 : f32 to vector<8x384xf32>
    %80 = arith.addf %79, %78 : vector<8x384xf32>
    %81 = arith.divf %79, %80 : vector<8x384xf32>
    %82 = vector.extract_strided_slice %75 {offsets = [0, 384], sizes = [8, 128], strides = [1, 1]} : vector<8x512xf32> to vector<8x128xf32>
    %83 = math.tanh %82 : vector<8x128xf32>
    %84 = vector.extract_strided_slice %81 {offsets = [0, 0], sizes = [8, 128], strides = [1, 1]} : vector<8x384xf32> to vector<8x128xf32>
    %85 = vector.extract_strided_slice %81 {offsets = [0, 128], sizes = [8, 128], strides = [1, 1]} : vector<8x384xf32> to vector<8x128xf32>
    %86 = vector.extract_strided_slice %81 {offsets = [0, 256], sizes = [8, 128], strides = [1, 1]} : vector<8x384xf32> to vector<8x128xf32>
    %87 = arith.mulf %85, %68 : vector<8x128xf32>
    %88 = arith.mulf %84, %83 : vector<8x128xf32>
    %89 = arith.addf %87, %88 : vector<8x128xf32>
    %90 = math.tanh %89 : vector<8x128xf32>
    %91 = arith.mulf %86, %90 : vector<8x128xf32>
    %c0_42 = arith.constant 0 : index
    %c0_43 = arith.constant 0 : index
    %92 = vector.load %arg11[%c0_42, %c0_43] : memref<8x128xf32, #tpu.memory_space<vmem>>, vector<8x128xf32>
    tpu.vector_store %arg11[%c0_42, %c0_43], %89 {strides = array<i32>} : memref<8x128xf32, #tpu.memory_space<vmem>>, vector<8x128xf32>,
    %c0_44 = arith.constant 0 : index
    %c0_45 = arith.constant 0 : index
    %93 = vector.load %arg10[%c0_44, %c0_45] : memref<8x128xf32, #tpu.memory_space<vmem>>, vector<8x128xf32>
    tpu.vector_store %arg10[%c0_44, %c0_45], %91 {strides = array<i32>} : memref<8x128xf32, #tpu.memory_space<vmem>>, vector<8x128xf32>,
    %94 = arith.truncf %91 : vector<8x128xf32> to vector<8x128xbf16>
    %95 = arith.index_cast %c2_i32 : i32 to index
    %c0_46 = arith.constant 0 : index
    %c0_47 = arith.constant 0 : index
    %96 = vector.load %arg6[%95, %c0_46, %c0_47] : memref<8x8x128xbf16, #tpu.memory_space<vmem>>, vector<1x8x128xbf16>
    %97 = vector.shape_cast %96 : vector<1x8x128xbf16> to vector<8x128xbf16>
    %98 = vector.shape_cast %94 : vector<8x128xbf16> to vector<1x8x128xbf16>
    tpu.vector_store %arg6[%95, %c0_46, %c0_47], %98 {strides = array<i32>} : memref<8x8x128xbf16, #tpu.memory_space<vmem>>, vector<1x8x128xbf16>,
    %c3_i32 = arith.constant 3 : i32
    %c0_48 = arith.constant 0 : index
    %c0_49 = arith.constant 0 : index
    %99 = vector.load %arg10[%c0_48, %c0_49] : memref<8x128xf32, #tpu.memory_space<vmem>>, vector<8x128xf32>
    %c0_50 = arith.constant 0 : index
    %c0_51 = arith.constant 0 : index
    %100 = vector.load %arg11[%c0_50, %c0_51] : memref<8x128xf32, #tpu.memory_space<vmem>>, vector<8x128xf32>
    %101 = arith.index_cast %c3_i32 : i32 to index
    %c0_52 = arith.constant 0 : index
    %c0_53 = arith.constant 0 : index
    %102 = vector.load %arg2[%101, %c0_52, %c0_53] : memref<8x8x512xf32, #tpu.memory_space<vmem>>, vector<1x8x512xf32>
    %103 = vector.shape_cast %102 : vector<1x8x512xf32> to vector<8x512xf32>
    %104 = arith.truncf %99 : vector<8x128xf32> to vector<8x128xbf16>
    %c0_54 = arith.constant 0 : index
    %c0_55 = arith.constant 0 : index
    %105 = vector.load %arg9[%c0_54, %c0_55] : memref<128x512xbf16, #tpu.memory_space<vmem>>, vector<128x512xbf16>
    %cst_56 = arith.constant dense<0.000000e+00> : vector<8x512xf32>
    %106 = tpu.matmul %104, %105, %cst_56 {dimension_numbers = #tpu.dot_dimension_numbers<[1], [0], [0], [1], [0, 0, 1, 1], [], []>} : vector<8x128xbf16>, vector<128x512xbf16>, vector<8x512xf32> -> vector<8x512xf32>
    %107 = arith.addf %103, %106 : vector<8x512xf32>
    %108 = vector.extract_strided_slice %107 {offsets = [0, 0], sizes = [8, 384], strides = [1, 1]} : vector<8x512xf32> to vector<8x384xf32>
    %109 = arith.negf %108 : vector<8x384xf32>
    %110 = math.exp %109 : vector<8x384xf32>
    %cst_57 = arith.constant 1.000000e+00 : f32
    %111 = vector.broadcast %cst_57 : f32 to vector<8x384xf32>
    %112 = arith.addf %111, %110 : vector<8x384xf32>
    %113 = arith.divf %111, %112 : vector<8x384xf32>
    %114 = vector.extract_strided_slice %107 {offsets = [0, 384], sizes = [8, 128], strides = [1, 1]} : vector<8x512xf32> to vector<8x128xf32>
    %115 = math.tanh %114 : vector<8x128xf32>
    %116 = vector.extract_strided_slice %113 {offsets = [0, 0], sizes = [8, 128], strides = [1, 1]} : vector<8x384xf32> to vector<8x128xf32>
    %117 = vector.extract_strided_slice %113 {offsets = [0, 128], sizes = [8, 128], strides = [1, 1]} : vector<8x384xf32> to vector<8x128xf32>
    %118 = vector.extract_strided_slice %113 {offsets = [0, 256], sizes = [8, 128], strides = [1, 1]} : vector<8x384xf32> to vector<8x128xf32>
    %119 = arith.mulf %117, %100 : vector<8x128xf32>
    %120 = arith.mulf %116, %115 : vector<8x128xf32>
    %121 = arith.addf %119, %120 : vector<8x128xf32>
    %122 = math.tanh %121 : vector<8x128xf32>
    %123 = arith.mulf %118, %122 : vector<8x128xf32>
    %c0_58 = arith.constant 0 : index
    %c0_59 = arith.constant 0 : index
    %124 = vector.load %arg11[%c0_58, %c0_59] : memref<8x128xf32, #tpu.memory_space<vmem>>, vector<8x128xf32>
    tpu.vector_store %arg11[%c0_58, %c0_59], %121 {strides = array<i32>} : memref<8x128xf32, #tpu.memory_space<vmem>>, vector<8x128xf32>,
    %c0_60 = arith.constant 0 : index
    %c0_61 = arith.constant 0 : index
    %125 = vector.load %arg10[%c0_60, %c0_61] : memref<8x128xf32, #tpu.memory_space<vmem>>, vector<8x128xf32>
    tpu.vector_store %arg10[%c0_60, %c0_61], %123 {strides = array<i32>} : memref<8x128xf32, #tpu.memory_space<vmem>>, vector<8x128xf32>,
    %126 = arith.truncf %123 : vector<8x128xf32> to vector<8x128xbf16>
    %127 = arith.index_cast %c3_i32 : i32 to index
    %c0_62 = arith.constant 0 : index
    %c0_63 = arith.constant 0 : index
    %128 = vector.load %arg6[%127, %c0_62, %c0_63] : memref<8x8x128xbf16, #tpu.memory_space<vmem>>, vector<1x8x128xbf16>
    %129 = vector.shape_cast %128 : vector<1x8x128xbf16> to vector<8x128xbf16>
    %130 = vector.shape_cast %126 : vector<8x128xbf16> to vector<1x8x128xbf16>
    tpu.vector_store %arg6[%127, %c0_62, %c0_63], %130 {strides = array<i32>} : memref<8x8x128xbf16, #tpu.memory_space<vmem>>, vector<1x8x128xbf16>,
    %c4_i32 = arith.constant 4 : i32
    %c0_64 = arith.constant 0 : index
    %c0_65 = arith.constant 0 : index
    %131 = vector.load %arg10[%c0_64, %c0_65] : memref<8x128xf32, #tpu.memory_space<vmem>>, vector<8x128xf32>
    %c0_66 = arith.constant 0 : index
    %c0_67 = arith.constant 0 : index
    %132 = vector.load %arg11[%c0_66, %c0_67] : memref<8x128xf32, #tpu.memory_space<vmem>>, vector<8x128xf32>
    %133 = arith.index_cast %c4_i32 : i32 to index
    %c0_68 = arith.constant 0 : index
    %c0_69 = arith.constant 0 : index
    %134 = vector.load %arg2[%133, %c0_68, %c0_69] : memref<8x8x512xf32, #tpu.memory_space<vmem>>, vector<1x8x512xf32>
    %135 = vector.shape_cast %134 : vector<1x8x512xf32> to vector<8x512xf32>
    %136 = arith.truncf %131 : vector<8x128xf32> to vector<8x128xbf16>
    %c0_70 = arith.constant 0 : index
    %c0_71 = arith.constant 0 : index
    %137 = vector.load %arg9[%c0_70, %c0_71] : memref<128x512xbf16, #tpu.memory_space<vmem>>, vector<128x512xbf16>
    %cst_72 = arith.constant dense<0.000000e+00> : vector<8x512xf32>
    %138 = tpu.matmul %136, %137, %cst_72 {dimension_numbers = #tpu.dot_dimension_numbers<[1], [0], [0], [1], [0, 0, 1, 1], [], []>} : vector<8x128xbf16>, vector<128x512xbf16>, vector<8x512xf32> -> vector<8x512xf32>
    %139 = arith.addf %135, %138 : vector<8x512xf32>
    %140 = vector.extract_strided_slice %139 {offsets = [0, 0], sizes = [8, 384], strides = [1, 1]} : vector<8x512xf32> to vector<8x384xf32>
    %141 = arith.negf %140 : vector<8x384xf32>
    %142 = math.exp %141 : vector<8x384xf32>
    %cst_73 = arith.constant 1.000000e+00 : f32
    %143 = vector.broadcast %cst_73 : f32 to vector<8x384xf32>
    %144 = arith.addf %143, %142 : vector<8x384xf32>
    %145 = arith.divf %143, %144 : vector<8x384xf32>
    %146 = vector.extract_strided_slice %139 {offsets = [0, 384], sizes = [8, 128], strides = [1, 1]} : vector<8x512xf32> to vector<8x128xf32>
    %147 = math.tanh %146 : vector<8x128xf32>
    %148 = vector.extract_strided_slice %145 {offsets = [0, 0], sizes = [8, 128], strides = [1, 1]} : vector<8x384xf32> to vector<8x128xf32>
    %149 = vector.extract_strided_slice %145 {offsets = [0, 128], sizes = [8, 128], strides = [1, 1]} : vector<8x384xf32> to vector<8x128xf32>
    %150 = vector.extract_strided_slice %145 {offsets = [0, 256], sizes = [8, 128], strides = [1, 1]} : vector<8x384xf32> to vector<8x128xf32>
    %151 = arith.mulf %149, %132 : vector<8x128xf32>
    %152 = arith.mulf %148, %147 : vector<8x128xf32>
    %153 = arith.addf %151, %152 : vector<8x128xf32>
    %154 = math.tanh %153 : vector<8x128xf32>
    %155 = arith.mulf %150, %154 : vector<8x128xf32>
    %c0_74 = arith.constant 0 : index
    %c0_75 = arith.constant 0 : index
    %156 = vector.load %arg11[%c0_74, %c0_75] : memref<8x128xf32, #tpu.memory_space<vmem>>, vector<8x128xf32>
    tpu.vector_store %arg11[%c0_74, %c0_75], %153 {strides = array<i32>} : memref<8x128xf32, #tpu.memory_space<vmem>>, vector<8x128xf32>,
    %c0_76 = arith.constant 0 : index
    %c0_77 = arith.constant 0 : index
    %157 = vector.load %arg10[%c0_76, %c0_77] : memref<8x128xf32, #tpu.memory_space<vmem>>, vector<8x128xf32>
    tpu.vector_store %arg10[%c0_76, %c0_77], %155 {strides = array<i32>} : memref<8x128xf32, #tpu.memory_space<vmem>>, vector<8x128xf32>,
    %158 = arith.truncf %155 : vector<8x128xf32> to vector<8x128xbf16>
    %159 = arith.index_cast %c4_i32 : i32 to index
    %c0_78 = arith.constant 0 : index
    %c0_79 = arith.constant 0 : index
    %160 = vector.load %arg6[%159, %c0_78, %c0_79] : memref<8x8x128xbf16, #tpu.memory_space<vmem>>, vector<1x8x128xbf16>
    %161 = vector.shape_cast %160 : vector<1x8x128xbf16> to vector<8x128xbf16>
    %162 = vector.shape_cast %158 : vector<8x128xbf16> to vector<1x8x128xbf16>
    tpu.vector_store %arg6[%159, %c0_78, %c0_79], %162 {strides = array<i32>} : memref<8x8x128xbf16, #tpu.memory_space<vmem>>, vector<1x8x128xbf16>,
    %c5_i32 = arith.constant 5 : i32
    %c0_80 = arith.constant 0 : index
    %c0_81 = arith.constant 0 : index
    %163 = vector.load %arg10[%c0_80, %c0_81] : memref<8x128xf32, #tpu.memory_space<vmem>>, vector<8x128xf32>
    %c0_82 = arith.constant 0 : index
    %c0_83 = arith.constant 0 : index
    %164 = vector.load %arg11[%c0_82, %c0_83] : memref<8x128xf32, #tpu.memory_space<vmem>>, vector<8x128xf32>
    %165 = arith.index_cast %c5_i32 : i32 to index
    %c0_84 = arith.constant 0 : index
    %c0_85 = arith.constant 0 : index
    %166 = vector.load %arg2[%165, %c0_84, %c0_85] : memref<8x8x512xf32, #tpu.memory_space<vmem>>, vector<1x8x512xf32>
    %167 = vector.shape_cast %166 : vector<1x8x512xf32> to vector<8x512xf32>
    %168 = arith.truncf %163 : vector<8x128xf32> to vector<8x128xbf16>
    %c0_86 = arith.constant 0 : index
    %c0_87 = arith.constant 0 : index
    %169 = vector.load %arg9[%c0_86, %c0_87] : memref<128x512xbf16, #tpu.memory_space<vmem>>, vector<128x512xbf16>
    %cst_88 = arith.constant dense<0.000000e+00> : vector<8x512xf32>
    %170 = tpu.matmul %168, %169, %cst_88 {dimension_numbers = #tpu.dot_dimension_numbers<[1], [0], [0], [1], [0, 0, 1, 1], [], []>} : vector<8x128xbf16>, vector<128x512xbf16>, vector<8x512xf32> -> vector<8x512xf32>
    %171 = arith.addf %167, %170 : vector<8x512xf32>
    %172 = vector.extract_strided_slice %171 {offsets = [0, 0], sizes = [8, 384], strides = [1, 1]} : vector<8x512xf32> to vector<8x384xf32>
    %173 = arith.negf %172 : vector<8x384xf32>
    %174 = math.exp %173 : vector<8x384xf32>
    %cst_89 = arith.constant 1.000000e+00 : f32
    %175 = vector.broadcast %cst_89 : f32 to vector<8x384xf32>
    %176 = arith.addf %175, %174 : vector<8x384xf32>
    %177 = arith.divf %175, %176 : vector<8x384xf32>
    %178 = vector.extract_strided_slice %171 {offsets = [0, 384], sizes = [8, 128], strides = [1, 1]} : vector<8x512xf32> to vector<8x128xf32>
    %179 = math.tanh %178 : vector<8x128xf32>
    %180 = vector.extract_strided_slice %177 {offsets = [0, 0], sizes = [8, 128], strides = [1, 1]} : vector<8x384xf32> to vector<8x128xf32>
    %181 = vector.extract_strided_slice %177 {offsets = [0, 128], sizes = [8, 128], strides = [1, 1]} : vector<8x384xf32> to vector<8x128xf32>
    %182 = vector.extract_strided_slice %177 {offsets = [0, 256], sizes = [8, 128], strides = [1, 1]} : vector<8x384xf32> to vector<8x128xf32>
    %183 = arith.mulf %181, %164 : vector<8x128xf32>
    %184 = arith.mulf %180, %179 : vector<8x128xf32>
    %185 = arith.addf %183, %184 : vector<8x128xf32>
    %186 = math.tanh %185 : vector<8x128xf32>
    %187 = arith.mulf %182, %186 : vector<8x128xf32>
    %c0_90 = arith.constant 0 : index
    %c0_91 = arith.constant 0 : index
    %188 = vector.load %arg11[%c0_90, %c0_91] : memref<8x128xf32, #tpu.memory_space<vmem>>, vector<8x128xf32>
    tpu.vector_store %arg11[%c0_90, %c0_91], %185 {strides = array<i32>} : memref<8x128xf32, #tpu.memory_space<vmem>>, vector<8x128xf32>,
    %c0_92 = arith.constant 0 : index
    %c0_93 = arith.constant 0 : index
    %189 = vector.load %arg10[%c0_92, %c0_93] : memref<8x128xf32, #tpu.memory_space<vmem>>, vector<8x128xf32>
    tpu.vector_store %arg10[%c0_92, %c0_93], %187 {strides = array<i32>} : memref<8x128xf32, #tpu.memory_space<vmem>>, vector<8x128xf32>,
    %190 = arith.truncf %187 : vector<8x128xf32> to vector<8x128xbf16>
    %191 = arith.index_cast %c5_i32 : i32 to index
    %c0_94 = arith.constant 0 : index
    %c0_95 = arith.constant 0 : index
    %192 = vector.load %arg6[%191, %c0_94, %c0_95] : memref<8x8x128xbf16, #tpu.memory_space<vmem>>, vector<1x8x128xbf16>
    %193 = vector.shape_cast %192 : vector<1x8x128xbf16> to vector<8x128xbf16>
    %194 = vector.shape_cast %190 : vector<8x128xbf16> to vector<1x8x128xbf16>
    tpu.vector_store %arg6[%191, %c0_94, %c0_95], %194 {strides = array<i32>} : memref<8x8x128xbf16, #tpu.memory_space<vmem>>, vector<1x8x128xbf16>,
    %c6_i32 = arith.constant 6 : i32
    %c0_96 = arith.constant 0 : index
    %c0_97 = arith.constant 0 : index
    %195 = vector.load %arg10[%c0_96, %c0_97] : memref<8x128xf32, #tpu.memory_space<vmem>>, vector<8x128xf32>
    %c0_98 = arith.constant 0 : index
    %c0_99 = arith.constant 0 : index
    %196 = vector.load %arg11[%c0_98, %c0_99] : memref<8x128xf32, #tpu.memory_space<vmem>>, vector<8x128xf32>
    %197 = arith.index_cast %c6_i32 : i32 to index
    %c0_100 = arith.constant 0 : index
    %c0_101 = arith.constant 0 : index
    %198 = vector.load %arg2[%197, %c0_100, %c0_101] : memref<8x8x512xf32, #tpu.memory_space<vmem>>, vector<1x8x512xf32>
    %199 = vector.shape_cast %198 : vector<1x8x512xf32> to vector<8x512xf32>
    %200 = arith.truncf %195 : vector<8x128xf32> to vector<8x128xbf16>
    %c0_102 = arith.constant 0 : index
    %c0_103 = arith.constant 0 : index
    %201 = vector.load %arg9[%c0_102, %c0_103] : memref<128x512xbf16, #tpu.memory_space<vmem>>, vector<128x512xbf16>
    %cst_104 = arith.constant dense<0.000000e+00> : vector<8x512xf32>
    %202 = tpu.matmul %200, %201, %cst_104 {dimension_numbers = #tpu.dot_dimension_numbers<[1], [0], [0], [1], [0, 0, 1, 1], [], []>} : vector<8x128xbf16>, vector<128x512xbf16>, vector<8x512xf32> -> vector<8x512xf32>
    %203 = arith.addf %199, %202 : vector<8x512xf32>
    %204 = vector.extract_strided_slice %203 {offsets = [0, 0], sizes = [8, 384], strides = [1, 1]} : vector<8x512xf32> to vector<8x384xf32>
    %205 = arith.negf %204 : vector<8x384xf32>
    %206 = math.exp %205 : vector<8x384xf32>
    %cst_105 = arith.constant 1.000000e+00 : f32
    %207 = vector.broadcast %cst_105 : f32 to vector<8x384xf32>
    %208 = arith.addf %207, %206 : vector<8x384xf32>
    %209 = arith.divf %207, %208 : vector<8x384xf32>
    %210 = vector.extract_strided_slice %203 {offsets = [0, 384], sizes = [8, 128], strides = [1, 1]} : vector<8x512xf32> to vector<8x128xf32>
    %211 = math.tanh %210 : vector<8x128xf32>
    %212 = vector.extract_strided_slice %209 {offsets = [0, 0], sizes = [8, 128], strides = [1, 1]} : vector<8x384xf32> to vector<8x128xf32>
    %213 = vector.extract_strided_slice %209 {offsets = [0, 128], sizes = [8, 128], strides = [1, 1]} : vector<8x384xf32> to vector<8x128xf32>
    %214 = vector.extract_strided_slice %209 {offsets = [0, 256], sizes = [8, 128], strides = [1, 1]} : vector<8x384xf32> to vector<8x128xf32>
    %215 = arith.mulf %213, %196 : vector<8x128xf32>
    %216 = arith.mulf %212, %211 : vector<8x128xf32>
    %217 = arith.addf %215, %216 : vector<8x128xf32>
    %218 = math.tanh %217 : vector<8x128xf32>
    %219 = arith.mulf %214, %218 : vector<8x128xf32>
    %c0_106 = arith.constant 0 : index
    %c0_107 = arith.constant 0 : index
    %220 = vector.load %arg11[%c0_106, %c0_107] : memref<8x128xf32, #tpu.memory_space<vmem>>, vector<8x128xf32>
    tpu.vector_store %arg11[%c0_106, %c0_107], %217 {strides = array<i32>} : memref<8x128xf32, #tpu.memory_space<vmem>>, vector<8x128xf32>,
    %c0_108 = arith.constant 0 : index
    %c0_109 = arith.constant 0 : index
    %221 = vector.load %arg10[%c0_108, %c0_109] : memref<8x128xf32, #tpu.memory_space<vmem>>, vector<8x128xf32>
    tpu.vector_store %arg10[%c0_108, %c0_109], %219 {strides = array<i32>} : memref<8x128xf32, #tpu.memory_space<vmem>>, vector<8x128xf32>,
    %222 = arith.truncf %219 : vector<8x128xf32> to vector<8x128xbf16>
    %223 = arith.index_cast %c6_i32 : i32 to index
    %c0_110 = arith.constant 0 : index
    %c0_111 = arith.constant 0 : index
    %224 = vector.load %arg6[%223, %c0_110, %c0_111] : memref<8x8x128xbf16, #tpu.memory_space<vmem>>, vector<1x8x128xbf16>
    %225 = vector.shape_cast %224 : vector<1x8x128xbf16> to vector<8x128xbf16>
    %226 = vector.shape_cast %222 : vector<8x128xbf16> to vector<1x8x128xbf16>
    tpu.vector_store %arg6[%223, %c0_110, %c0_111], %226 {strides = array<i32>} : memref<8x8x128xbf16, #tpu.memory_space<vmem>>, vector<1x8x128xbf16>,
    %c7_i32 = arith.constant 7 : i32
    %c0_112 = arith.constant 0 : index
    %c0_113 = arith.constant 0 : index
    %227 = vector.load %arg10[%c0_112, %c0_113] : memref<8x128xf32, #tpu.memory_space<vmem>>, vector<8x128xf32>
    %c0_114 = arith.constant 0 : index
    %c0_115 = arith.constant 0 : index
    %228 = vector.load %arg11[%c0_114, %c0_115] : memref<8x128xf32, #tpu.memory_space<vmem>>, vector<8x128xf32>
    %229 = arith.index_cast %c7_i32 : i32 to index
    %c0_116 = arith.constant 0 : index
    %c0_117 = arith.constant 0 : index
    %230 = vector.load %arg2[%229, %c0_116, %c0_117] : memref<8x8x512xf32, #tpu.memory_space<vmem>>, vector<1x8x512xf32>
    %231 = vector.shape_cast %230 : vector<1x8x512xf32> to vector<8x512xf32>
    %232 = arith.truncf %227 : vector<8x128xf32> to vector<8x128xbf16>
    %c0_118 = arith.constant 0 : index
    %c0_119 = arith.constant 0 : index
    %233 = vector.load %arg9[%c0_118, %c0_119] : memref<128x512xbf16, #tpu.memory_space<vmem>>, vector<128x512xbf16>
    %cst_120 = arith.constant dense<0.000000e+00> : vector<8x512xf32>
    %234 = tpu.matmul %232, %233, %cst_120 {dimension_numbers = #tpu.dot_dimension_numbers<[1], [0], [0], [1], [0, 0, 1, 1], [], []>} : vector<8x128xbf16>, vector<128x512xbf16>, vector<8x512xf32> -> vector<8x512xf32>
    %235 = arith.addf %231, %234 : vector<8x512xf32>
    %236 = vector.extract_strided_slice %235 {offsets = [0, 0], sizes = [8, 384], strides = [1, 1]} : vector<8x512xf32> to vector<8x384xf32>
    %237 = arith.negf %236 : vector<8x384xf32>
    %238 = math.exp %237 : vector<8x384xf32>
    %cst_121 = arith.constant 1.000000e+00 : f32
    %239 = vector.broadcast %cst_121 : f32 to vector<8x384xf32>
    %240 = arith.addf %239, %238 : vector<8x384xf32>
    %241 = arith.divf %239, %240 : vector<8x384xf32>
    %242 = vector.extract_strided_slice %235 {offsets = [0, 384], sizes = [8, 128], strides = [1, 1]} : vector<8x512xf32> to vector<8x128xf32>
    %243 = math.tanh %242 : vector<8x128xf32>
    %244 = vector.extract_strided_slice %241 {offsets = [0, 0], sizes = [8, 128], strides = [1, 1]} : vector<8x384xf32> to vector<8x128xf32>
    %245 = vector.extract_strided_slice %241 {offsets = [0, 128], sizes = [8, 128], strides = [1, 1]} : vector<8x384xf32> to vector<8x128xf32>
    %246 = vector.extract_strided_slice %241 {offsets = [0, 256], sizes = [8, 128], strides = [1, 1]} : vector<8x384xf32> to vector<8x128xf32>
    %247 = arith.mulf %245, %228 : vector<8x128xf32>
    %248 = arith.mulf %244, %243 : vector<8x128xf32>
    %249 = arith.addf %247, %248 : vector<8x128xf32>
    %250 = math.tanh %249 : vector<8x128xf32>
    %251 = arith.mulf %246, %250 : vector<8x128xf32>
    %c0_122 = arith.constant 0 : index
    %c0_123 = arith.constant 0 : index
    %252 = vector.load %arg11[%c0_122, %c0_123] : memref<8x128xf32, #tpu.memory_space<vmem>>, vector<8x128xf32>
    tpu.vector_store %arg11[%c0_122, %c0_123], %249 {strides = array<i32>} : memref<8x128xf32, #tpu.memory_space<vmem>>, vector<8x128xf32>,
    %c0_124 = arith.constant 0 : index
    %c0_125 = arith.constant 0 : index
    %253 = vector.load %arg10[%c0_124, %c0_125] : memref<8x128xf32, #tpu.memory_space<vmem>>, vector<8x128xf32>
    tpu.vector_store %arg10[%c0_124, %c0_125], %251 {strides = array<i32>} : memref<8x128xf32, #tpu.memory_space<vmem>>, vector<8x128xf32>,
    %254 = arith.truncf %251 : vector<8x128xf32> to vector<8x128xbf16>
    %255 = arith.index_cast %c7_i32 : i32 to index
    %c0_126 = arith.constant 0 : index
    %c0_127 = arith.constant 0 : index
    %256 = vector.load %arg6[%255, %c0_126, %c0_127] : memref<8x8x128xbf16, #tpu.memory_space<vmem>>, vector<1x8x128xbf16>
    %257 = vector.shape_cast %256 : vector<1x8x128xbf16> to vector<8x128xbf16>
    %258 = vector.shape_cast %254 : vector<8x128xbf16> to vector<1x8x128xbf16>
    tpu.vector_store %arg6[%255, %c0_126, %c0_127], %258 {strides = array<i32>} : memref<8x8x128xbf16, #tpu.memory_space<vmem>>, vector<1x8x128xbf16>,
    %c8_i32 = arith.constant 8 : i32
    %c1_i32_128 = arith.constant 1 : i32
    %259 = arith.cmpi eq, %arg1, %c1_i32_128 : i32
    %260 = arith.extui %259 : i1 to i32
    %c0_i32_129 = arith.constant 0 : i32
    %261 = arith.cmpi ne, %260, %c0_i32_129 : i32
    scf.if %261 {
      %c0_130 = arith.constant 0 : index
      %c0_131 = arith.constant 0 : index
      %262 = vector.load %arg10[%c0_130, %c0_131] : memref<8x128xf32, #tpu.memory_space<vmem>>, vector<8x128xf32>
      %c0_132 = arith.constant 0 : index
      %c0_133 = arith.constant 0 : index
      %263 = vector.load %arg7[%c0_132, %c0_133] : memref<8x128xf32, #tpu.memory_space<vmem>>, vector<8x128xf32>
      tpu.vector_store %arg7[%c0_132, %c0_133], %262 {strides = array<i32>} : memref<8x128xf32, #tpu.memory_space<vmem>>, vector<8x128xf32>,
      %c0_134 = arith.constant 0 : index
      %c0_135 = arith.constant 0 : index
      %264 = vector.load %arg11[%c0_134, %c0_135] : memref<8x128xf32, #tpu.memory_space<vmem>>, vector<8x128xf32>
      %c0_136 = arith.constant 0 : index
      %c0_137 = arith.constant 0 : index
      %265 = vector.load %arg8[%c0_136, %c0_137] : memref<8x128xf32, #tpu.memory_space<vmem>>, vector<8x128xf32>
      tpu.vector_store %arg8[%c0_136, %c0_137], %264 {strides = array<i32>} : memref<8x128xf32, #tpu.memory_space<vmem>>, vector<8x128xf32>,
    } else {
    }
    return
  }
  func.func @transform_0(%arg0: i32, %arg1: i32) -> (i32, i32, i32) {
    %c0_i32 = arith.constant 0 : i32
    %c0_i32_0 = arith.constant 0 : i32
    return %arg1, %arg0, %c0_i32 : i32, i32, i32
  }
  func.func @transform_2(%arg0: i32, %arg1: i32) -> (i32, i32) {
    %c0_i32 = arith.constant 0 : i32
    %c0_i32_0 = arith.constant 0 : i32
    return %arg0, %c0_i32 : i32, i32
  }
  func.func @transform_3(%arg0: i32, %arg1: i32) -> (i32, i32) {
    %c0_i32 = arith.constant 0 : i32
    %c0_i32_0 = arith.constant 0 : i32
    return %arg0, %c0_i32 : i32, i32
  }
  func.func @transform_4(%arg0: i32, %arg1: i32) -> (i32, i32, i32) {
    %c0_i32 = arith.constant 0 : i32
    %c0_i32_0 = arith.constant 0 : i32
    return %arg1, %arg0, %c0_i32 : i32, i32, i32
  }
  func.func @transform_5(%arg0: i32, %arg1: i32) -> (i32, i32) {
    %c0_i32 = arith.constant 0 : i32
    %c0_i32_0 = arith.constant 0 : i32
    return %arg0, %c0_i32 : i32, i32
  }
  func.func @transform_6(%arg0: i32, %arg1: i32) -> (i32, i32) {
    %c0_i32 = arith.constant 0 : i32
    %c0_i32_0 = arith.constant 0 : i32
    return %arg0, %c0_i32 : i32, i32
  }
}

module attributes {stable_mosaic.version = 11 : i64} {
  func.func @_matmul_bias_kernel(%arg0: i32, %arg1: i32, %arg2: i32, %arg3: memref<128x128xbf16, #tpu.memory_space<vmem>>, %arg4: memref<128x256xbf16, #tpu.memory_space<vmem>>, %arg5: memref<1x256xf32, #tpu.memory_space<vmem>>, %arg6: memref<128x256xf32, #tpu.memory_space<vmem>>) attributes {dimension_semantics = [#tpu.dimension_semantics<parallel>, #tpu.dimension_semantics<parallel>, #tpu.dimension_semantics<arbitrary>], iteration_bounds = array<i64: 1, 1, 1>, scalar_prefetch = 0 : i64, scratch_operands = 0 : i64, tpu.core_type = #tpu.core_type<tc>, window_params = [{transform_indices = @transform_0, window_bounds = array<i64: 128, 128>}, {transform_indices = @transform_1, window_bounds = array<i64: 128, 256>}, {transform_indices = @transform_2, window_bounds = array<i64: 1, 256>}, {transform_indices = @transform_3, window_bounds = array<i64: 128, 256>}]} {
    %c0_i32 = arith.constant 0 : i32
    %0 = arith.cmpi eq, %arg2, %c0_i32 : i32
    %1 = arith.extui %0 : i1 to i32
    %c0_i32_0 = arith.constant 0 : i32
    %2 = arith.cmpi ne, %1, %c0_i32_0 : i32
    scf.if %2 {
      %c0_8 = arith.constant 0 : index
      %c0_9 = arith.constant 0 : index
      %9 = vector.load %arg5[%c0_8, %c0_9] : memref<1x256xf32, #tpu.memory_space<vmem>>, vector<1x256xf32>
      %10 = vector.shape_cast %9 : vector<1x256xf32> to vector<1x256xf32>
      %11 = vector.broadcast %10 : vector<1x256xf32> to vector<128x256xf32>
      %c0_10 = arith.constant 0 : index
      %c0_11 = arith.constant 0 : index
      %12 = vector.load %arg6[%c0_10, %c0_11] : memref<128x256xf32, #tpu.memory_space<vmem>>, vector<128x256xf32>
      tpu.vector_store %arg6[%c0_10, %c0_11], %11 {strides = array<i32>} : memref<128x256xf32, #tpu.memory_space<vmem>>, vector<128x256xf32>,
    } else {
    }
    %c0 = arith.constant 0 : index
    %c0_1 = arith.constant 0 : index
    %3 = vector.load %arg6[%c0, %c0_1] : memref<128x256xf32, #tpu.memory_space<vmem>>, vector<128x256xf32>
    %c0_2 = arith.constant 0 : index
    %c0_3 = arith.constant 0 : index
    %4 = vector.load %arg3[%c0_2, %c0_3] : memref<128x128xbf16, #tpu.memory_space<vmem>>, vector<128x128xbf16>
    %c0_4 = arith.constant 0 : index
    %c0_5 = arith.constant 0 : index
    %5 = vector.load %arg4[%c0_4, %c0_5] : memref<128x256xbf16, #tpu.memory_space<vmem>>, vector<128x256xbf16>
    %cst = arith.constant dense<0.000000e+00> : vector<128x256xf32>
    %6 = tpu.matmul %4, %5, %cst {dimension_numbers = #tpu.dot_dimension_numbers<[1], [0], [0], [1], [0, 0, 1, 1], [], []>} : vector<128x128xbf16>, vector<128x256xbf16>, vector<128x256xf32> -> vector<128x256xf32>
    %7 = arith.addf %3, %6 : vector<128x256xf32>
    %c0_6 = arith.constant 0 : index
    %c0_7 = arith.constant 0 : index
    %8 = vector.load %arg6[%c0_6, %c0_7] : memref<128x256xf32, #tpu.memory_space<vmem>>, vector<128x256xf32>
    tpu.vector_store %arg6[%c0_6, %c0_7], %7 {strides = array<i32>} : memref<128x256xf32, #tpu.memory_space<vmem>>, vector<128x256xf32>,
    return
  }
  func.func @transform_0(%arg0: i32, %arg1: i32, %arg2: i32) -> (i32, i32) {
    %c0_i32 = arith.constant 0 : i32
    return %arg0, %arg2 : i32, i32
  }
  func.func @transform_1(%arg0: i32, %arg1: i32, %arg2: i32) -> (i32, i32) {
    %c0_i32 = arith.constant 0 : i32
    return %arg2, %arg1 : i32, i32
  }
  func.func @transform_2(%arg0: i32, %arg1: i32, %arg2: i32) -> (i32, i32) {
    %c0_i32 = arith.constant 0 : i32
    %c0_i32_0 = arith.constant 0 : i32
    return %c0_i32, %arg1 : i32, i32
  }
  func.func @transform_3(%arg0: i32, %arg1: i32, %arg2: i32) -> (i32, i32) {
    %c0_i32 = arith.constant 0 : i32
    return %arg0, %arg1 : i32, i32
  }
}

</mosaic_0001>

<llo_original>
// kernel: lm_lstm_forward.9
$region0: #{lm_lstm_forward.9}
  #allocation0 [shape = 'u32[]', space=smem, size = 0x4, offset = 0x4, fixed_abs, tag = 'smem constant byte address 0x4 - core index']
  #allocation1 [shape = 'u32[144,128]{1,0:T(1,128)}', space=vmem, size = 0x12000, scoped, tag = 'internal scratch']
  %s0 = inlined_call_operand.vmem [shape: bf16[128,128], index: 0, kind: input, shape index: {}]
  %s1 = inlined_call_operand.vmem [shape: bf16[128,256], index: 1, kind: input, shape index: {}]
  %s2 = inlined_call_operand.vmem [shape: f32[1,256], index: 2, kind: input, shape index: {}]
  %s3 = inlined_call_operand.hbm [shape: f32[128,256], index: 3, kind: output, shape index: {}]
  %s4 = sld [smem:[#allocation0]]
  $region26: #{lm_lstm_forward.9} parent=0
    _
  %s6 = ssub.s32 1, %s4
  %s7 = scalar_select 0, %s6, %s4
  $region1: #{lm_lstm_forward.9} parent=0
    #allocation2 [shape = 'u8[131072]{0}', space=vmem, size = 0x20000, scoped, tag = 'output window, operand 0, single buffered']
    #allocation3 [shape = 's32[1]{0}', space=sflag, size = 0x4, scoped, tag = 'scoped memory for lm_lstm_forward.9']
    %8 = vsyncpa [#allocation3], 0
    // Predicated region
    $region2: #{lm_lstm_forward.9} parent=1 // pred_check
      _
    $region3: #{lm_lstm_forward.9} parent=1 // pred_check_branch
      %10 = sbr.rel (0) target = $region5
    $region4: #{lm_lstm_forward.9} parent=1 // pred_region
      _
    $region5: #{lm_lstm_forward.9} parent=1 // pred_fallthru
      _
    // Predicated region
    $region6: #{lm_lstm_forward.9} parent=1 // pred_check
      _
    $region7: #{lm_lstm_forward.9} parent=1 // pred_check_branch
      %12 = sbr.rel (0) target = $region9
    $region8: #{lm_lstm_forward.9} parent=1 // pred_region
      _
    $region9: #{lm_lstm_forward.9} parent=1 // pred_fallthru
      _
    // Predicated region
    $region10: #{lm_lstm_forward.9} parent=1 // pred_check
      _
    $region11: #{lm_lstm_forward.9} parent=1 // pred_check_branch
      %14 = sbr.rel (0) target = $region13
    $region12: #{lm_lstm_forward.9} parent=1 // pred_region
      _
    $region13: #{lm_lstm_forward.9} parent=1 // pred_fallthru
      _
    %p16 = scmp.eq.s32.totalorder 0, 0
    // Predicated region
    $region14: #{lm_lstm_forward.9} parent=1 // pred_check
      %p17 = pneg %p16
    $region15: #{lm_lstm_forward.9} parent=1 // pred_check_branch
      %19 = sbr.rel (%p17) target = $region17
    $region16: #{lm_lstm_forward.9} parent=1 // pred_region
      %v20 = vld [vmem:[%s2] sm:$0x3]
      %v22 = vlaneseq
      %v23 = vshrl.u32 %v22, 7
      %v24 = vsub.s32 0, %v23
      %v25 = vrot.slane %v20, %v24
      %v26 = vlaneseq
      %v27 = vshrl.u32 %v26, 7
      %v28 = vsub.s32 1, %v27
      %v29 = vrot.slane %v20, %v28
      %32 = vst [vmem:[#allocation2] sm:$0xff] %v25
      %33 = vst [vmem:[#allocation2 + $0x8] sm:$0xff] %v29
      %34 = vst [vmem:[#allocation2 + $0x10] sm:$0xff] %v25
      %35 = vst [vmem:[#allocation2 + $0x18] sm:$0xff] %v29
      %36 = vst [vmem:[#allocation2 + $0x20] sm:$0xff] %v25
      %37 = vst [vmem:[#allocation2 + $0x28] sm:$0xff] %v29
      %38 = vst [vmem:[#allocation2 + $0x30] sm:$0xff] %v25
      %39 = vst [vmem:[#allocation2 + $0x38] sm:$0xff] %v29
      %40 = vst [vmem:[#allocation2 + $0x40] sm:$0xff] %v25
      %41 = vst [vmem:[#allocation2 + $0x48] sm:$0xff] %v29
      %42 = vst [vmem:[#allocation2 + $0x50] sm:$0xff] %v25
      %43 = vst [vmem:[#allocation2 + $0x58] sm:$0xff] %v29
      %44 = vst [vmem:[#allocation2 + $0x60] sm:$0xff] %v25
      %45 = vst [vmem:[#allocation2 + $0x68] sm:$0xff] %v29
      %46 = vst [vmem:[#allocation2 + $0x70] sm:$0xff] %v25
      %47 = vst [vmem:[#allocation2 + $0x78] sm:$0xff] %v29
      %48 = vst [vmem:[#allocation2 + $0x80] sm:$0xff] %v25
      %49 = vst [vmem:[#allocation2 + $0x88] sm:$0xff] %v29
      %50 = vst [vmem:[#allocation2 + $0x90] sm:$0xff] %v25
      %51 = vst [vmem:[#allocation2 + $0x98] sm:$0xff] %v29
      %52 = vst [vmem:[#allocation2 + $0xa0] sm:$0xff] %v25
      %53 = vst [vmem:[#allocation2 + $0xa8] sm:$0xff] %v29
      %54 = vst [vmem:[#allocation2 + $0xb0] sm:$0xff] %v25
      %55 = vst [vmem:[#allocation2 + $0xb8] sm:$0xff] %v29
      %56 = vst [vmem:[#allocation2 + $0xc0] sm:$0xff] %v25
      %57 = vst [vmem:[#allocation2 + $0xc8] sm:$0xff] %v29
      %58 = vst [vmem:[#allocation2 + $0xd0] sm:$0xff] %v25
      %59 = vst [vmem:[#allocation2 + $0xd8] sm:$0xff] %v29
      %60 = vst [vmem:[#allocation2 + $0xe0] sm:$0xff] %v25
      %61 = vst [vmem:[#allocation2 + $0xe8] sm:$0xff] %v29
      %62 = vst [vmem:[#allocation2 + $0xf0] sm:$0xff] %v25
      %63 = vst [vmem:[#allocation2 + $0xf8] sm:$0xff] %v29
    $region17: #{lm_lstm_forward.9} parent=1 // pred_fallthru
      _
    %v64 = vld [vmem:[#allocation2] sm:$0xff]
    %v65 = vld [vmem:[#allocation2 + $0x8] sm:$0xff]
    %v66 = vld [vmem:[#allocation2 + $0x10] sm:$0xff]
    %v67 = vld [vmem:[#allocation2 + $0x18] sm:$0xff]
    %v68 = vld [vmem:[#allocation2 + $0x20] sm:$0xff]
    %v69 = vld [vmem:[#allocation2 + $0x28] sm:$0xff]
    %v70 = vld [vmem:[#allocation2 + $0x30] sm:$0xff]
    %v71 = vld [vmem:[#allocation2 + $0x38] sm:$0xff]
    %v72 = vld [vmem:[#allocation2 + $0x40] sm:$0xff]
    %v73 = vld [vmem:[#allocation2 + $0x48] sm:$0xff]
    %v74 = vld [vmem:[#allocation2 + $0x50] sm:$0xff]
    %v75 = vld [vmem:[#allocation2 + $0x58] sm:$0xff]
    %v76 = vld [vmem:[#allocation2 + $0x60] sm:$0xff]
    %v77 = vld [vmem:[#allocation2 + $0x68] sm:$0xff]
    %v78 = vld [vmem:[#allocation2 + $0x70] sm:$0xff]
    %v79 = vld [vmem:[#allocation2 + $0x78] sm:$0xff]
    %v80 = vld [vmem:[#allocation2 + $0x80] sm:$0xff]
    %v81 = vld [vmem:[#allocation2 + $0x88] sm:$0xff]
    %v82 = vld [vmem:[#allocation2 + $0x90] sm:$0xff]
    %v83 = vld [vmem:[#allocation2 + $0x98] sm:$0xff]
    %v84 = vld [vmem:[#allocation2 + $0xa0] sm:$0xff]
    %v85 = vld [vmem:[#allocation2 + $0xa8] sm:$0xff]
    %v86 = vld [vmem:[#allocation2 + $0xb0] sm:$0xff]
    %v87 = vld [vmem:[#allocation2 + $0xb8] sm:$0xff]
    %v88 = vld [vmem:[#allocation2 + $0xc0] sm:$0xff]
    %v89 = vld [vmem:[#allocation2 + $0xc8] sm:$0xff]
    %v90 = vld [vmem:[#allocation2 + $0xd0] sm:$0xff]
    %v91 = vld [vmem:[#allocation2 + $0xd8] sm:$0xff]
    %v92 = vld [vmem:[#allocation2 + $0xe0] sm:$0xff]
    %v93 = vld [vmem:[#allocation2 + $0xe8] sm:$0xff]
    %v94 = vld [vmem:[#allocation2 + $0xf0] sm:$0xff]
    %v95 = vld [vmem:[#allocation2 + $0xf8] sm:$0xff]
    %v96 = vld [vmem:[%s0] sm:$0xf]
    %v97 = vld [vmem:[%s0 + $0x4] sm:$0xf]
    %v98 = vld [vmem:[%s0 + $0x8] sm:$0xf]
    %v99 = vld [vmem:[%s0 + $0xc] sm:$0xf]
    %v100 = vld [vmem:[%s0 + $0x10] sm:$0xf]
    %v101 = vld [vmem:[%s0 + $0x14] sm:$0xf]
    %v102 = vld [vmem:[%s0 + $0x18] sm:$0xf]
    %v103 = vld [vmem:[%s0 + $0x1c] sm:$0xf]
    %v104 = vld [vmem:[%s0 + $0x20] sm:$0xf]
    %v105 = vld [vmem:[%s0 + $0x24] sm:$0xf]
    %v106 = vld [vmem:[%s0 + $0x28] sm:$0xf]
    %v107 = vld [vmem:[%s0 + $0x2c] sm:$0xf]
    %v108 = vld [vmem:[%s0 + $0x30] sm:$0xf]
    %v109 = vld [vmem:[%s0 + $0x34] sm:$0xf]
    %v110 = vld [vmem:[%s0 + $0x38] sm:$0xf]
    %v111 = vld [vmem:[%s0 + $0x3c] sm:$0xf]
    %v112 = vld [vmem:[%s1] sm:$0xff]
    %v113 = vld [vmem:[%s1 + $0x8] sm:$0xff]
    %v114 = vld [vmem:[%s1 + $0x10] sm:$0xff]
    %v115 = vld [vmem:[%s1 + $0x18] sm:$0xff]
    %v116 = vld [vmem:[%s1 + $0x20] sm:$0xff]
    %v117 = vld [vmem:[%s1 + $0x28] sm:$0xff]
    %v118 = vld [vmem:[%s1 + $0x30] sm:$0xff]
    %v119 = vld [vmem:[%s1 + $0x38] sm:$0xff]
    %v120 = vld [vmem:[%s1 + $0x40] sm:$0xff]
    %v121 = vld [vmem:[%s1 + $0x48] sm:$0xff]
    %v122 = vld [vmem:[%s1 + $0x50] sm:$0xff]
    %v123 = vld [vmem:[%s1 + $0x58] sm:$0xff]
    %v124 = vld [vmem:[%s1 + $0x60] sm:$0xff]
    %v125 = vld [vmem:[%s1 + $0x68] sm:$0xff]
    %v126 = vld [vmem:[%s1 + $0x70] sm:$0xff]
    %v127 = vld [vmem:[%s1 + $0x78] sm:$0xff]
    %v144 = vunpack.c.l.b16 %v96
    %v145 = vunpack.c.l.b16 %v97
    %v146 = vunpack.c.l.b16 %v98
    %v147 = vunpack.c.l.b16 %v99
    %v148 = vunpack.c.l.b16 %v100
    %v149 = vunpack.c.l.b16 %v101
    %v150 = vunpack.c.l.b16 %v102
    %v151 = vunpack.c.l.b16 %v103
    %v152 = vunpack.c.l.b16 %v104
    %v153 = vunpack.c.l.b16 %v105
    %v154 = vunpack.c.l.b16 %v106
    %v155 = vunpack.c.l.b16 %v107
    %v156 = vunpack.c.l.b16 %v108
    %v157 = vunpack.c.l.b16 %v109
    %v158 = vunpack.c.l.b16 %v110
    %v159 = vunpack.c.l.b16 %v111
    %v160 = vpack.c.b16 %v145, %v144
    %v161 = vpack.c.b16 %v147, %v146
    %v162 = vpack.c.b16 %v149, %v148
    %v163 = vpack.c.b16 %v151, %v150
    %v164 = vpack.c.b16 %v153, %v152
    %v165 = vpack.c.b16 %v155, %v154
    %v166 = vpack.c.b16 %v157, %v156
    %v167 = vpack.c.b16 %v159, %v158
    %v192 = vunpack.c.l.b16 %v112
    %v193 = vunpack.c.h.b16 %v112
    %v194 = vunpack.c.l.b16 %v113
    %v195 = vunpack.c.h.b16 %v113
    %v196 = vunpack.c.l.b16 %v114
    %v197 = vunpack.c.h.b16 %v114
    %v198 = vunpack.c.l.b16 %v115
    %v199 = vunpack.c.h.b16 %v115
    %v200 = vunpack.c.l.b16 %v116
    %v201 = vunpack.c.h.b16 %v116
    %v202 = vunpack.c.l.b16 %v117
    %v203 = vunpack.c.h.b16 %v117
    %v204 = vunpack.c.l.b16 %v118
    %v205 = vunpack.c.h.b16 %v118
    %v206 = vunpack.c.l.b16 %v119
    %v207 = vunpack.c.h.b16 %v119
    %v208 = vunpack.c.l.b16 %v120
    %v209 = vunpack.c.h.b16 %v120
    %v210 = vunpack.c.l.b16 %v121
    %v211 = vunpack.c.h.b16 %v121
    %v212 = vunpack.c.l.b16 %v122
    %v213 = vunpack.c.h.b16 %v122
    %v214 = vunpack.c.l.b16 %v123
    %v215 = vunpack.c.h.b16 %v123
    %v216 = vunpack.c.l.b16 %v124
    %v217 = vunpack.c.h.b16 %v124
    %v218 = vunpack.c.l.b16 %v125
    %v219 = vunpack.c.h.b16 %v125
    %v220 = vunpack.c.l.b16 %v126
    %v221 = vunpack.c.h.b16 %v126
    %v222 = vunpack.c.l.b16 %v127
    %v223 = vunpack.c.h.b16 %v127
    %v224 = vpack.c.b16 %v194, %v192
    %v225 = vpack.c.b16 %v195, %v193
    %v226 = vpack.c.b16 %v198, %v196
    %v227 = vpack.c.b16 %v199, %v197
    %v228 = vpack.c.b16 %v202, %v200
    %v229 = vpack.c.b16 %v203, %v201
    %v230 = vpack.c.b16 %v206, %v204
    %v231 = vpack.c.b16 %v207, %v205
    %v232 = vpack.c.b16 %v210, %v208
    %v233 = vpack.c.b16 %v211, %v209
    %v234 = vpack.c.b16 %v214, %v212
    %v235 = vpack.c.b16 %v215, %v213
    %v236 = vpack.c.b16 %v218, %v216
    %v237 = vpack.c.b16 %v219, %v217
    %v238 = vpack.c.b16 %v222, %v220
    %v239 = vpack.c.b16 %v223, %v221
    %256 = vmatprep.subr.bf16.mxu0 %v239
    %257 = vmatpush1.bf16.msra.mxu0 %v238
    %258 = vmatprep.subr.bf16.mxu0 %v237
    %259 = vmatpush1.bf16.msra.mxu0 %v236
    %260 = vmatprep.subr.bf16.mxu0 %v235
    %261 = vmatpush1.bf16.msra.mxu0 %v234
    %262 = vmatprep.subr.bf16.mxu0 %v233
    %263 = vmatpush1.bf16.msra.mxu0 %v232
    %264 = vmatprep.subr.bf16.mxu0 %v231
    %265 = vmatpush1.bf16.msra.mxu0 %v230
    %266 = vmatprep.subr.bf16.mxu0 %v229
    %267 = vmatpush1.bf16.msra.mxu0 %v228
    %268 = vmatprep.subr.bf16.mxu0 %v227
    %269 = vmatpush1.bf16.msra.mxu0 %v226
    %270 = vmatprep.subr.bf16.mxu0 %v225
    %271 = vmatpush1.bf16.msra.mxu0 %v224
    %272 = vmatprep.subr.bf16.mxu0 0
    %273 = vmatpush2.bf16.msra.mxu0 0
    %274 = vmatprep.subr.bf16.mxu0 0
    %275 = vmatpush2.bf16.msra.mxu0 0
    %276 = vmatprep.subr.bf16.mxu0 0
    %277 = vmatpush2.bf16.msra.mxu0 0
    %278 = vmatprep.subr.bf16.mxu0 0
    %279 = vmatpush2.bf16.msra.mxu0 0
    %280 = vmatprep.subr.bf16.mxu0 0
    %281 = vmatpush2.bf16.msra.mxu0 0
    %282 = vmatprep.subr.bf16.mxu0 0
    %283 = vmatpush2.bf16.msra.mxu0 0
    %284 = vmatprep.subr.bf16.mxu0 0
    %285 = vmatpush2.bf16.msra.mxu0 0
    %286 = vmatprep.subr.bf16.mxu0 0
    %287 = vmatpush2.bf16.msra.mxu0 0
    %288 = vmatprep.mubr.bf16.mxu0 0
    %289 = vmatmul.mubr.bf16.gmra.mxu0 %v160
    %v290 = vpop.f32.mrf.mxu0
    %v291 = vadd.f32 0.0, %v290
    %v292 = vpop.f32.mrf.mxu0
    %v293 = vadd.f32 0.0, %v292
    %v294 = vpop.f32.mrf.mxu0
    %v295 = vadd.f32 0.0, %v294
    %v296 = vpop.f32.mrf.mxu0
    %v297 = vadd.f32 0.0, %v296
    %298 = vmatprep.mubr.bf16.mxu0 0
    %299 = vmatmul.mubr.bf16.gmra.mxu0 %v161
    %v300 = vpop.f32.mrf.mxu0
    %v301 = vadd.f32 0.0, %v300
    %v302 = vpop.f32.mrf.mxu0
    %v303 = vadd.f32 0.0, %v302
    %v304 = vpop.f32.mrf.mxu0
    %v305 = vadd.f32 0.0, %v304
    %v306 = vpop.f32.mrf.mxu0
    %v307 = vadd.f32 0.0, %v306
    %308 = vmatprep.mubr.bf16.mxu0 0
    %309 = vmatmul.mubr.bf16.gmra.mxu0 %v162
    %v310 = vpop.f32.mrf.mxu0
    %v311 = vadd.f32 0.0, %v310
    %v312 = vpop.f32.mrf.mxu0
    %v313 = vadd.f32 0.0, %v312
    %v314 = vpop.f32.mrf.mxu0
    %v315 = vadd.f32 0.0, %v314
    %v316 = vpop.f32.mrf.mxu0
    %v317 = vadd.f32 0.0, %v316
    %318 = vmatprep.mubr.bf16.mxu0 0
    %319 = vmatmul.mubr.bf16.gmra.mxu0 %v163
    %v320 = vpop.f32.mrf.mxu0
    %v321 = vadd.f32 0.0, %v320
    %v322 = vpop.f32.mrf.mxu0
    %v323 = vadd.f32 0.0, %v322
    %v324 = vpop.f32.mrf.mxu0
    %v325 = vadd.f32 0.0, %v324
    %v326 = vpop.f32.mrf.mxu0
    %v327 = vadd.f32 0.0, %v326
    %328 = vmatprep.mubr.bf16.mxu0 0
    %329 = vmatmul.mubr.bf16.gmra.mxu0 %v164
    %v330 = vpop.f32.mrf.mxu0
    %v331 = vadd.f32 0.0, %v330
    %v332 = vpop.f32.mrf.mxu0
    %v333 = vadd.f32 0.0, %v332
    %v334 = vpop.f32.mrf.mxu0
    %v335 = vadd.f32 0.0, %v334
    %v336 = vpop.f32.mrf.mxu0
    %v337 = vadd.f32 0.0, %v336
    %338 = vmatprep.mubr.bf16.mxu0 0
    %339 = vmatmul.mubr.bf16.gmra.mxu0 %v165
    %v340 = vpop.f32.mrf.mxu0
    %v341 = vadd.f32 0.0, %v340
    %v342 = vpop.f32.mrf.mxu0
    %v343 = vadd.f32 0.0, %v342
    %v344 = vpop.f32.mrf.mxu0
    %v345 = vadd.f32 0.0, %v344
    %v346 = vpop.f32.mrf.mxu0
    %v347 = vadd.f32 0.0, %v346
    %348 = vmatprep.mubr.bf16.mxu0 0
    %349 = vmatmul.mubr.bf16.gmra.mxu0 %v166
    %v350 = vpop.f32.mrf.mxu0
    %v351 = vadd.f32 0.0, %v350
    %v352 = vpop.f32.mrf.mxu0
    %v353 = vadd.f32 0.0, %v352
    %v354 = vpop.f32.mrf.mxu0
    %v355 = vadd.f32 0.0, %v354
    %v356 = vpop.f32.mrf.mxu0
    %v357 = vadd.f32 0.0, %v356
    %358 = vmatprep.mubr.bf16.mxu0 0
    %359 = vmatmul.mubr.bf16.gmra.mxu0 %v167
    %v360 = vpop.f32.mrf.mxu0
    %v361 = vadd.f32 0.0, %v360
    %v362 = vpop.f32.mrf.mxu0
    %v363 = vadd.f32 0.0, %v362
    %v364 = vpop.f32.mrf.mxu0
    %v365 = vadd.f32 0.0, %v364
    %v366 = vpop.f32.mrf.mxu0
    %v367 = vadd.f32 0.0, %v366
    %368 = vdwg.mxu0
    %v369 = vadd.f32 %v64, %v291
    %v370 = vadd.f32 %v65, %v293
    %v371 = vadd.f32 %v66, %v295
    %v372 = vadd.f32 %v67, %v297
    %v373 = vadd.f32 %v68, %v301
    %v374 = vadd.f32 %v69, %v303
    %v375 = vadd.f32 %v70, %v305
    %v376 = vadd.f32 %v71, %v307
    %v377 = vadd.f32 %v72, %v311
    %v378 = vadd.f32 %v73, %v313
    %v379 = vadd.f32 %v74, %v315
    %v380 = vadd.f32 %v75, %v317
    %v381 = vadd.f32 %v76, %v321
    %v382 = vadd.f32 %v77, %v323
    %v383 = vadd.f32 %v78, %v325
    %v384 = vadd.f32 %v79, %v327
    %v385 = vadd.f32 %v80, %v331
    %v386 = vadd.f32 %v81, %v333
    %v387 = vadd.f32 %v82, %v335
    %v388 = vadd.f32 %v83, %v337
    %v389 = vadd.f32 %v84, %v341
    %v390 = vadd.f32 %v85, %v343
    %v391 = vadd.f32 %v86, %v345
    %v392 = vadd.f32 %v87, %v347
    %v393 = vadd.f32 %v88, %v351
    %v394 = vadd.f32 %v89, %v353
    %v395 = vadd.f32 %v90, %v355
    %v396 = vadd.f32 %v91, %v357
    %v397 = vadd.f32 %v92, %v361
    %v398 = vadd.f32 %v93, %v363
    %v399 = vadd.f32 %v94, %v365
    %v400 = vadd.f32 %v95, %v367
    %401 = vst [vmem:[#allocation2] sm:$0xff] %v369
    %402 = vst [vmem:[#allocation2 + $0x8] sm:$0xff] %v370
    %403 = vst [vmem:[#allocation2 + $0x10] sm:$0xff] %v371
    %404 = vst [vmem:[#allocation2 + $0x18] sm:$0xff] %v372
    %405 = vst [vmem:[#allocation2 + $0x20] sm:$0xff] %v373
    %406 = vst [vmem:[#allocation2 + $0x28] sm:$0xff] %v374
    %407 = vst [vmem:[#allocation2 + $0x30] sm:$0xff] %v375
    %408 = vst [vmem:[#allocation2 + $0x38] sm:$0xff] %v376
    %409 = vst [vmem:[#allocation2 + $0x40] sm:$0xff] %v377
    %410 = vst [vmem:[#allocation2 + $0x48] sm:$0xff] %v378
    %411 = vst [vmem:[#allocation2 + $0x50] sm:$0xff] %v379
    %412 = vst [vmem:[#allocation2 + $0x58] sm:$0xff] %v380
    %413 = vst [vmem:[#allocation2 + $0x60] sm:$0xff] %v381
    %414 = vst [vmem:[#allocation2 + $0x68] sm:$0xff] %v382
    %415 = vst [vmem:[#allocation2 + $0x70] sm:$0xff] %v383
    %416 = vst [vmem:[#allocation2 + $0x78] sm:$0xff] %v384
    %417 = vst [vmem:[#allocation2 + $0x80] sm:$0xff] %v385
    %418 = vst [vmem:[#allocation2 + $0x88] sm:$0xff] %v386
    %419 = vst [vmem:[#allocation2 + $0x90] sm:$0xff] %v387
    %420 = vst [vmem:[#allocation2 + $0x98] sm:$0xff] %v388
    %421 = vst [vmem:[#allocation2 + $0xa0] sm:$0xff] %v389
    %422 = vst [vmem:[#allocation2 + $0xa8] sm:$0xff] %v390
    %423 = vst [vmem:[#allocation2 + $0xb0] sm:$0xff] %v391
    %424 = vst [vmem:[#allocation2 + $0xb8] sm:$0xff] %v392
    %425 = vst [vmem:[#allocation2 + $0xc0] sm:$0xff] %v393
    %426 = vst [vmem:[#allocation2 + $0xc8] sm:$0xff] %v394
    %427 = vst [vmem:[#allocation2 + $0xd0] sm:$0xff] %v395
    %428 = vst [vmem:[#allocation2 + $0xd8] sm:$0xff] %v396
    %429 = vst [vmem:[#allocation2 + $0xe0] sm:$0xff] %v397
    %430 = vst [vmem:[#allocation2 + $0xe8] sm:$0xff] %v398
    %431 = vst [vmem:[#allocation2 + $0xf0] sm:$0xff] %v399
    %432 = vst [vmem:[#allocation2 + $0xf8] sm:$0xff] %v400
    // Predicated region
    $region18: #{lm_lstm_forward.9} parent=1 // pred_check
      _
    $region19: #{lm_lstm_forward.9} parent=1 // pred_check_branch
      %434 = sbr.rel (0) target = $region21
    $region20: #{lm_lstm_forward.9} parent=1 // pred_region
      %s436 = ssub.s32 4096, 4096
      %437 = vsyncadd [#allocation3], %s436
      %s438 = sshll.u32 [#allocation2], 4
      %s439 = int_to_ptr.vmem [resolvable:$true] %s438
      %444 = dma.vmem_to_hbm [thread:$0]  %s439, 4096, %s3, [#allocation3], 256, 256, 16
    $region21: #{lm_lstm_forward.9} parent=1 // pred_fallthru
      _
    // Predicated region
    $region22: #{lm_lstm_forward.9} parent=1 // pred_check
      _
    $region23: #{lm_lstm_forward.9} parent=1 // pred_check_branch
      %446 = sbr.rel (0) target = $region25
    $region24: #{lm_lstm_forward.9} parent=1 // pred_region
      %447 = dma.done [#allocation3], 4096
    $region25: #{lm_lstm_forward.9} parent=1 // pred_fallthru
      _
    %448 = vsyncpa [#allocation3], 1

// kernel: lm_lstm_forward.5
$region0: #{lm_lstm_forward.5}
  #allocation0 [shape = 'u32[]', space=smem, size = 0x4, offset = 0x4, fixed_abs, tag = 'smem constant byte address 0x4 - core index']
  #allocation1 [shape = 'u32[144,128]{1,0:T(1,128)}', space=vmem, size = 0x12000, scoped, tag = 'internal scratch']
  %s0 = inlined_call_operand.vmem [shape: bf16[128,128], index: 0, kind: input, shape index: {}]
  %s1 = inlined_call_operand.vmem [shape: bf16[128,512], index: 1, kind: input, shape index: {}]
  %s2 = inlined_call_operand.vmem [shape: f32[1,512], index: 2, kind: input, shape index: {}]
  %s3 = inlined_call_operand.vmem [shape: f32[128,512], index: 3, kind: output, shape index: {}]
  %s4 = sld [smem:[#allocation0]]
  $region26: #{lm_lstm_forward.5} parent=0
    _
  %s6 = ssub.s32 1, %s4
  %s7 = scalar_select 0, %s6, %s4
  // Predicated region
  $region2: #{lm_lstm_forward.5} parent=0 // pred_check
    _
  $region3: #{lm_lstm_forward.5} parent=0 // pred_check_branch
    %9 = sbr.rel (0) target = $region5
  $region4: #{lm_lstm_forward.5} parent=0 // pred_region
    _
  $region5: #{lm_lstm_forward.5} parent=0 // pred_fallthru
    _
  // Predicated region
  $region6: #{lm_lstm_forward.5} parent=0 // pred_check
    _
  $region7: #{lm_lstm_forward.5} parent=0 // pred_check_branch
    %11 = sbr.rel (0) target = $region9
  $region8: #{lm_lstm_forward.5} parent=0 // pred_region
    _
  $region9: #{lm_lstm_forward.5} parent=0 // pred_fallthru
    _
  // Predicated region
  $region10: #{lm_lstm_forward.5} parent=0 // pred_check
    _
  $region11: #{lm_lstm_forward.5} parent=0 // pred_check_branch
    %13 = sbr.rel (0) target = $region13
  $region12: #{lm_lstm_forward.5} parent=0 // pred_region
    _
  $region13: #{lm_lstm_forward.5} parent=0 // pred_fallthru
    _
  %p15 = scmp.eq.s32.totalorder 0, 0
  // Predicated region
  $region14: #{lm_lstm_forward.5} parent=0 // pred_check
    %p16 = pneg %p15
  $region15: #{lm_lstm_forward.5} parent=0 // pred_check_branch
    %18 = sbr.rel (%p16) target = $region17
  $region16: #{lm_lstm_forward.5} parent=0 // pred_region
    %v19 = vld [vmem:[%s2] sm:$0xf]
    %v21 = vlaneseq
    %v22 = vshrl.u32 %v21, 7
    %v23 = vsub.s32 0, %v22
    %v24 = vrot.slane %v19, %v23
    %v25 = vlaneseq
    %v26 = vshrl.u32 %v25, 7
    %v27 = vsub.s32 1, %v26
    %v28 = vrot.slane %v19, %v27
    %v29 = vlaneseq
    %v30 = vshrl.u32 %v29, 7
    %v31 = vsub.s32 2, %v30
    %v32 = vrot.slane %v19, %v31
    %v33 = vlaneseq
    %v34 = vshrl.u32 %v33, 7
    %v35 = vsub.s32 3, %v34
    %v36 = vrot.slane %v19, %v35
    %41 = vst [vmem:[%s3] sm:$0xff] %v24
    %42 = vst [vmem:[%s3 + $0x8] sm:$0xff] %v28
    %43 = vst [vmem:[%s3 + $0x10] sm:$0xff] %v32
    %44 = vst [vmem:[%s3 + $0x18] sm:$0xff] %v36
    %45 = vst [vmem:[%s3 + $0x20] sm:$0xff] %v24
    %46 = vst [vmem:[%s3 + $0x28] sm:$0xff] %v28
    %47 = vst [vmem:[%s3 + $0x30] sm:$0xff] %v32
    %48 = vst [vmem:[%s3 + $0x38] sm:$0xff] %v36
    %49 = vst [vmem:[%s3 + $0x40] sm:$0xff] %v24
    %50 = vst [vmem:[%s3 + $0x48] sm:$0xff] %v28
    %51 = vst [vmem:[%s3 + $0x50] sm:$0xff] %v32
    %52 = vst [vmem:[%s3 + $0x58] sm:$0xff] %v36
    %53 = vst [vmem:[%s3 + $0x60] sm:$0xff] %v24
    %54 = vst [vmem:[%s3 + $0x68] sm:$0xff] %v28
    %55 = vst [vmem:[%s3 + $0x70] sm:$0xff] %v32
    %56 = vst [vmem:[%s3 + $0x78] sm:$0xff] %v36
    %57 = vst [vmem:[%s3 + $0x80] sm:$0xff] %v24
    %58 = vst [vmem:[%s3 + $0x88] sm:$0xff] %v28
    %59 = vst [vmem:[%s3 + $0x90] sm:$0xff] %v32
    %60 = vst [vmem:[%s3 + $0x98] sm:$0xff] %v36
    %61 = vst [vmem:[%s3 + $0xa0] sm:$0xff] %v24
    %62 = vst [vmem:[%s3 + $0xa8] sm:$0xff] %v28
    %63 = vst [vmem:[%s3 + $0xb0] sm:$0xff] %v32
    %64 = vst [vmem:[%s3 + $0xb8] sm:$0xff] %v36
    %65 = vst [vmem:[%s3 + $0xc0] sm:$0xff] %v24
    %66 = vst [vmem:[%s3 + $0xc8] sm:$0xff] %v28
    %67 = vst [vmem:[%s3 + $0xd0] sm:$0xff] %v32
    %68 = vst [vmem:[%s3 + $0xd8] sm:$0xff] %v36
    %69 = vst [vmem:[%s3 + $0xe0] sm:$0xff] %v24
    %70 = vst [vmem:[%s3 + $0xe8] sm:$0xff] %v28
    %71 = vst [vmem:[%s3 + $0xf0] sm:$0xff] %v32
    %72 = vst [vmem:[%s3 + $0xf8] sm:$0xff] %v36
    %73 = vst [vmem:[%s3 + $0x100] sm:$0xff] %v24
    %74 = vst [vmem:[%s3 + $0x108] sm:$0xff] %v28
    %75 = vst [vmem:[%s3 + $0x110] sm:$0xff] %v32
    %76 = vst [vmem:[%s3 + $0x118] sm:$0xff] %v36
    %77 = vst [vmem:[%s3 + $0x120] sm:$0xff] %v24
    %78 = vst [vmem:[%s3 + $0x128] sm:$0xff] %v28
    %79 = vst [vmem:[%s3 + $0x130] sm:$0xff] %v32
    %80 = vst [vmem:[%s3 + $0x138] sm:$0xff] %v36
    %81 = vst [vmem:[%s3 + $0x140] sm:$0xff] %v24
    %82 = vst [vmem:[%s3 + $0x148] sm:$0xff] %v28
    %83 = vst [vmem:[%s3 + $0x150] sm:$0xff] %v32
    %84 = vst [vmem:[%s3 + $0x158] sm:$0xff] %v36
    %85 = vst [vmem:[%s3 + $0x160] sm:$0xff] %v24
    %86 = vst [vmem:[%s3 + $0x168] sm:$0xff] %v28
    %87 = vst [vmem:[%s3 + $0x170] sm:$0xff] %v32
    %88 = vst [vmem:[%s3 + $0x178] sm:$0xff] %v36
    %89 = vst [vmem:[%s3 + $0x180] sm:$0xff] %v24
    %90 = vst [vmem:[%s3 + $0x188] sm:$0xff] %v28
    %91 = vst [vmem:[%s3 + $0x190] sm:$0xff] %v32
    %92 = vst [vmem:[%s3 + $0x198] sm:$0xff] %v36
    %93 = vst [vmem:[%s3 + $0x1a0] sm:$0xff] %v24
    %94 = vst [vmem:[%s3 + $0x1a8] sm:$0xff] %v28
    %95 = vst [vmem:[%s3 + $0x1b0] sm:$0xff] %v32
    %96 = vst [vmem:[%s3 + $0x1b8] sm:$0xff] %v36
    %97 = vst [vmem:[%s3 + $0x1c0] sm:$0xff] %v24
    %98 = vst [vmem:[%s3 + $0x1c8] sm:$0xff] %v28
    %99 = vst [vmem:[%s3 + $0x1d0] sm:$0xff] %v32
    %100 = vst [vmem:[%s3 + $0x1d8] sm:$0xff] %v36
    %101 = vst [vmem:[%s3 + $0x1e0] sm:$0xff] %v24
    %102 = vst [vmem:[%s3 + $0x1e8] sm:$0xff] %v28
    %103 = vst [vmem:[%s3 + $0x1f0] sm:$0xff] %v32
    %104 = vst [vmem:[%s3 + $0x1f8] sm:$0xff] %v36
  $region17: #{lm_lstm_forward.5} parent=0 // pred_fallthru
    _
  %v105 = vld [vmem:[%s3] sm:$0xff]
  %v106 = vld [vmem:[%s3 + $0x8] sm:$0xff]
  %v107 = vld [vmem:[%s3 + $0x10] sm:$0xff]
  %v108 = vld [vmem:[%s3 + $0x18] sm:$0xff]
  %v109 = vld [vmem:[%s3 + $0x20] sm:$0xff]
  %v110 = vld [vmem:[%s3 + $0x28] sm:$0xff]
  %v111 = vld [vmem:[%s3 + $0x30] sm:$0xff]
  %v112 = vld [vmem:[%s3 + $0x38] sm:$0xff]
  %v113 = vld [vmem:[%s3 + $0x40] sm:$0xff]
  %v114 = vld [vmem:[%s3 + $0x48] sm:$0xff]
  %v115 = vld [vmem:[%s3 + $0x50] sm:$0xff]
  %v116 = vld [vmem:[%s3 + $0x58] sm:$0xff]
  %v117 = vld [vmem:[%s3 + $0x60] sm:$0xff]
  %v118 = vld [vmem:[%s3 + $0x68] sm:$0xff]
  %v119 = vld [vmem:[%s3 + $0x70] sm:$0xff]
  %v120 = vld [vmem:[%s3 + $0x78] sm:$0xff]
  %v121 = vld [vmem:[%s3 + $0x80] sm:$0xff]
  %v122 = vld [vmem:[%s3 + $0x88] sm:$0xff]
  %v123 = vld [vmem:[%s3 + $0x90] sm:$0xff]
  %v124 = vld [vmem:[%s3 + $0x98] sm:$0xff]
  %v125 = vld [vmem:[%s3 + $0xa0] sm:$0xff]
  %v126 = vld [vmem:[%s3 + $0xa8] sm:$0xff]
  %v127 = vld [vmem:[%s3 + $0xb0] sm:$0xff]
  %v128 = vld [vmem:[%s3 + $0xb8] sm:$0xff]
  %v129 = vld [vmem:[%s3 + $0xc0] sm:$0xff]
  %v130 = vld [vmem:[%s3 + $0xc8] sm:$0xff]
  %v131 = vld [vmem:[%s3 + $0xd0] sm:$0xff]
  %v132 = vld [vmem:[%s3 + $0xd8] sm:$0xff]
  %v133 = vld [vmem:[%s3 + $0xe0] sm:$0xff]
  %v134 = vld [vmem:[%s3 + $0xe8] sm:$0xff]
  %v135 = vld [vmem:[%s3 + $0xf0] sm:$0xff]
  %v136 = vld [vmem:[%s3 + $0xf8] sm:$0xff]
  %v137 = vld [vmem:[%s3 + $0x100] sm:$0xff]
  %v138 = vld [vmem:[%s3 + $0x108] sm:$0xff]
  %v139 = vld [vmem:[%s3 + $0x110] sm:$0xff]
  %v140 = vld [vmem:[%s3 + $0x118] sm:$0xff]
  %v141 = vld [vmem:[%s3 + $0x120] sm:$0xff]
  %v142 = vld [vmem:[%s3 + $0x128] sm:$0xff]
  %v143 = vld [vmem:[%s3 + $0x130] sm:$0xff]
  %v144 = vld [vmem:[%s3 + $0x138] sm:$0xff]
  %v145 = vld [vmem:[%s3 + $0x140] sm:$0xff]
  %v146 = vld [vmem:[%s3 + $0x148] sm:$0xff]
  %v147 = vld [vmem:[%s3 + $0x150] sm:$0xff]
  %v148 = vld [vmem:[%s3 + $0x158] sm:$0xff]
  %v149 = vld [vmem:[%s3 + $0x160] sm:$0xff]
  %v150 = vld [vmem:[%s3 + $0x168] sm:$0xff]
  %v151 = vld [vmem:[%s3 + $0x170] sm:$0xff]
  %v152 = vld [vmem:[%s3 + $0x178] sm:$0xff]
  %v153 = vld [vmem:[%s3 + $0x180] sm:$0xff]
  %v154 = vld [vmem:[%s3 + $0x188] sm:$0xff]
  %v155 = vld [vmem:[%s3 + $0x190] sm:$0xff]
  %v156 = vld [vmem:[%s3 + $0x198] sm:$0xff]
  %v157 = vld [vmem:[%s3 + $0x1a0] sm:$0xff]
  %v158 = vld [vmem:[%s3 + $0x1a8] sm:$0xff]
  %v159 = vld [vmem:[%s3 + $0x1b0] sm:$0xff]
  %v160 = vld [vmem:[%s3 + $0x1b8] sm:$0xff]
  %v161 = vld [vmem:[%s3 + $0x1c0] sm:$0xff]
  %v162 = vld [vmem:[%s3 + $0x1c8] sm:$0xff]
  %v163 = vld [vmem:[%s3 + $0x1d0] sm:$0xff]
  %v164 = vld [vmem:[%s3 + $0x1d8] sm:$0xff]
  %v165 = vld [vmem:[%s3 + $0x1e0] sm:$0xff]
  %v166 = vld [vmem:[%s3 + $0x1e8] sm:$0xff]
  %v167 = vld [vmem:[%s3 + $0x1f0] sm:$0xff]
  %v168 = vld [vmem:[%s3 + $0x1f8] sm:$0xff]
  %v169 = vld [vmem:[%s0] sm:$0xf]
  %v170 = vld [vmem:[%s0 + $0x4] sm:$0xf]
  %v171 = vld [vmem:[%s0 + $0x8] sm:$0xf]
  %v172 = vld [vmem:[%s0 + $0xc] sm:$0xf]
  %v173 = vld [vmem:[%s0 + $0x10] sm:$0xf]
  %v174 = vld [vmem:[%s0 + $0x14] sm:$0xf]
  %v175 = vld [vmem:[%s0 + $0x18] sm:$0xf]
  %v176 = vld [vmem:[%s0 + $0x1c] sm:$0xf]
  %v177 = vld [vmem:[%s0 + $0x20] sm:$0xf]
  %v178 = vld [vmem:[%s0 + $0x24] sm:$0xf]
  %v179 = vld [vmem:[%s0 + $0x28] sm:$0xf]
  %v180 = vld [vmem:[%s0 + $0x2c] sm:$0xf]
  %v181 = vld [vmem:[%s0 + $0x30] sm:$0xf]
  %v182 = vld [vmem:[%s0 + $0x34] sm:$0xf]
  %v183 = vld [vmem:[%s0 + $0x38] sm:$0xf]
  %v184 = vld [vmem:[%s0 + $0x3c] sm:$0xf]
  %v185 = vld [vmem:[%s1] sm:$0xff]
  %v186 = vld [vmem:[%s1 + $0x8] sm:$0xff]
  %v187 = vld [vmem:[%s1 + $0x10] sm:$0xff]
  %v188 = vld [vmem:[%s1 + $0x18] sm:$0xff]
  %v189 = vld [vmem:[%s1 + $0x20] sm:$0xff]
  %v190 = vld [vmem:[%s1 + $0x28] sm:$0xff]
  %v191 = vld [vmem:[%s1 + $0x30] sm:$0xff]
  %v192 = vld [vmem:[%s1 + $0x38] sm:$0xff]
  %v193 = vld [vmem:[%s1 + $0x40] sm:$0xff]
  %v194 = vld [vmem:[%s1 + $0x48] sm:$0xff]
  %v195 = vld [vmem:[%s1 + $0x50] sm:$0xff]
  %v196 = vld [vmem:[%s1 + $0x58] sm:$0xff]
  %v197 = vld [vmem:[%s1 + $0x60] sm:$0xff]
  %v198 = vld [vmem:[%s1 + $0x68] sm:$0xff]
  %v199 = vld [vmem:[%s1 + $0x70] sm:$0xff]
  %v200 = vld [vmem:[%s1 + $0x78] sm:$0xff]
  %v201 = vld [vmem:[%s1 + $0x80] sm:$0xff]
  %v202 = vld [vmem:[%s1 + $0x88] sm:$0xff]
  %v203 = vld [vmem:[%s1 + $0x90] sm:$0xff]
  %v204 = vld [vmem:[%s1 + $0x98] sm:$0xff]
  %v205 = vld [vmem:[%s1 + $0xa0] sm:$0xff]
  %v206 = vld [vmem:[%s1 + $0xa8] sm:$0xff]
  %v207 = vld [vmem:[%s1 + $0xb0] sm:$0xff]
  %v208 = vld [vmem:[%s1 + $0xb8] sm:$0xff]
  %v209 = vld [vmem:[%s1 + $0xc0] sm:$0xff]
  %v210 = vld [vmem:[%s1 + $0xc8] sm:$0xff]
  %v211 = vld [vmem:[%s1 + $0xd0] sm:$0xff]
  %v212 = vld [vmem:[%s1 + $0xd8] sm:$0xff]
  %v213 = vld [vmem:[%s1 + $0xe0] sm:$0xff]
  %v214 = vld [vmem:[%s1 + $0xe8] sm:$0xff]
  %v215 = vld [vmem:[%s1 + $0xf0] sm:$0xff]
  %v216 = vld [vmem:[%s1 + $0xf8] sm:$0xff]
  %v233 = vunpack.c.l.b16 %v169
  %v234 = vunpack.c.l.b16 %v170
  %v235 = vunpack.c.l.b16 %v171
  %v236 = vunpack.c.l.b16 %v172
  %v237 = vunpack.c.l.b16 %v173
  %v238 = vunpack.c.l.b16 %v174
  %v239 = vunpack.c.l.b16 %v175
  %v240 = vunpack.c.l.b16 %v176
  %v241 = vunpack.c.l.b16 %v177
  %v242 = vunpack.c.l.b16 %v178
  %v243 = vunpack.c.l.b16 %v179
  %v244 = vunpack.c.l.b16 %v180
  %v245 = vunpack.c.l.b16 %v181
  %v246 = vunpack.c.l.b16 %v182
  %v247 = vunpack.c.l.b16 %v183
  %v248 = vunpack.c.l.b16 %v184
  %v249 = vpack.c.b16 %v234, %v233
  %v250 = vpack.c.b16 %v236, %v235
  %v251 = vpack.c.b16 %v238, %v237
  %v252 = vpack.c.b16 %v240, %v239
  %v253 = vpack.c.b16 %v242, %v241
  %v254 = vpack.c.b16 %v244, %v243
  %v255 = vpack.c.b16 %v246, %v245
  %v256 = vpack.c.b16 %v248, %v247
  %v297 = vunpack.c.l.b16 %v185
  %v298 = vunpack.c.h.b16 %v185
  %v299 = vunpack.c.l.b16 %v186
  %v300 = vunpack.c.h.b16 %v186
  %v301 = vunpack.c.l.b16 %v187
  %v302 = vunpack.c.h.b16 %v187
  %v303 = vunpack.c.l.b16 %v188
  %v304 = vunpack.c.h.b16 %v188
  %v305 = vunpack.c.l.b16 %v189
  %v306 = vunpack.c.h.b16 %v189
  %v307 = vunpack.c.l.b16 %v190
  %v308 = vunpack.c.h.b16 %v190
  %v309 = vunpack.c.l.b16 %v191
  %v310 = vunpack.c.h.b16 %v191
  %v311 = vunpack.c.l.b16 %v192
  %v312 = vunpack.c.h.b16 %v192
  %v313 = vunpack.c.l.b16 %v193
  %v314 = vunpack.c.h.b16 %v193
  %v315 = vunpack.c.l.b16 %v194
  %v316 = vunpack.c.h.b16 %v194
  %v317 = vunpack.c.l.b16 %v195
  %v318 = vunpack.c.h.b16 %v195
  %v319 = vunpack.c.l.b16 %v196
  %v320 = vunpack.c.h.b16 %v196
  %v321 = vunpack.c.l.b16 %v197
  %v322 = vunpack.c.h.b16 %v197
  %v323 = vunpack.c.l.b16 %v198
  %v324 = vunpack.c.h.b16 %v198
  %v325 = vunpack.c.l.b16 %v199
  %v326 = vunpack.c.h.b16 %v199
  %v327 = vunpack.c.l.b16 %v200
  %v328 = vunpack.c.h.b16 %v200
  %v329 = vunpack.c.l.b16 %v201
  %v330 = vunpack.c.h.b16 %v201
  %v331 = vunpack.c.l.b16 %v202
  %v332 = vunpack.c.h.b16 %v202
  %v333 = vunpack.c.l.b16 %v203
  %v334 = vunpack.c.h.b16 %v203
  %v335 = vunpack.c.l.b16 %v204
  %v336 = vunpack.c.h.b16 %v204
  %v337 = vunpack.c.l.b16 %v205
  %v338 = vunpack.c.h.b16 %v205
  %v339 = vunpack.c.l.b16 %v206
  %v340 = vunpack.c.h.b16 %v206
  %v341 = vunpack.c.l.b16 %v207
  %v342 = vunpack.c.h.b16 %v207
  %v343 = vunpack.c.l.b16 %v208
  %v344 = vunpack.c.h.b16 %v208
  %v345 = vunpack.c.l.b16 %v209
  %v346 = vunpack.c.h.b16 %v209
  %v347 = vunpack.c.l.b16 %v210
  %v348 = vunpack.c.h.b16 %v210
  %v349 = vunpack.c.l.b16 %v211
  %v350 = vunpack.c.h.b16 %v211
  %v351 = vunpack.c.l.b16 %v212
  %v352 = vunpack.c.h.b16 %v212
  %v353 = vunpack.c.l.b16 %v213
  %v354 = vunpack.c.h.b16 %v213
  %v355 = vunpack.c.l.b16 %v214
  %v356 = vunpack.c.h.b16 %v214
  %v357 = vunpack.c.l.b16 %v215
  %v358 = vunpack.c.h.b16 %v215
  %v359 = vunpack.c.l.b16 %v216
  %v360 = vunpack.c.h.b16 %v216
  %v361 = vpack.c.b16 %v301, %v297
  %v362 = vpack.c.b16 %v302, %v298
  %v363 = vpack.c.b16 %v303, %v299
  %v364 = vpack.c.b16 %v304, %v300
  %v365 = vpack.c.b16 %v309, %v305
  %v366 = vpack.c.b16 %v310, %v306
  %v367 = vpack.c.b16 %v311, %v307
  %v368 = vpack.c.b16 %v312, %v308
  %v369 = vpack.c.b16 %v317, %v313
  %v370 = vpack.c.b16 %v318, %v314
  %v371 = vpack.c.b16 %v319, %v315
  %v372 = vpack.c.b16 %v320, %v316
  %v373 = vpack.c.b16 %v325, %v321
  %v374 = vpack.c.b16 %v326, %v322
  %v375 = vpack.c.b16 %v327, %v323
  %v376 = vpack.c.b16 %v328, %v324
  %v377 = vpack.c.b16 %v333, %v329
  %v378 = vpack.c.b16 %v334, %v330
  %v379 = vpack.c.b16 %v335, %v331
  %v380 = vpack.c.b16 %v336, %v332
  %v381 = vpack.c.b16 %v341, %v337
  %v382 = vpack.c.b16 %v342, %v338
  %v383 = vpack.c.b16 %v343, %v339
  %v384 = vpack.c.b16 %v344, %v340
  %v385 = vpack.c.b16 %v349, %v345
  %v386 = vpack.c.b16 %v350, %v346
  %v387 = vpack.c.b16 %v351, %v347
  %v388 = vpack.c.b16 %v352, %v348
  %v389 = vpack.c.b16 %v357, %v353
  %v390 = vpack.c.b16 %v358, %v354
  %v391 = vpack.c.b16 %v359, %v355
  %v392 = vpack.c.b16 %v360, %v356
  %425 = vmatprep.subr.bf16.mxu0 %v390
  %426 = vmatpush1.bf16.msra.mxu0 %v389
  %427 = vmatprep.subr.bf16.mxu0 %v386
  %428 = vmatpush1.bf16.msra.mxu0 %v385
  %429 = vmatprep.subr.bf16.mxu0 %v382
  %430 = vmatpush1.bf16.msra.mxu0 %v381
  %431 = vmatprep.subr.bf16.mxu0 %v378
  %432 = vmatpush1.bf16.msra.mxu0 %v377
  %433 = vmatprep.subr.bf16.mxu0 %v374
  %434 = vmatpush1.bf16.msra.mxu0 %v373
  %435 = vmatprep.subr.bf16.mxu0 %v370
  %436 = vmatpush1.bf16.msra.mxu0 %v369
  %437 = vmatprep.subr.bf16.mxu0 %v366
  %438 = vmatpush1.bf16.msra.mxu0 %v365
  %439 = vmatprep.subr.bf16.mxu0 %v362
  %440 = vmatpush1.bf16.msra.mxu0 %v361
  %441 = vmatprep.subr.bf16.mxu0 0
  %442 = vmatpush2.bf16.msra.mxu0 0
  %443 = vmatprep.subr.bf16.mxu0 0
  %444 = vmatpush2.bf16.msra.mxu0 0
  %445 = vmatprep.subr.bf16.mxu0 0
  %446 = vmatpush2.bf16.msra.mxu0 0
  %447 = vmatprep.subr.bf16.mxu0 0
  %448 = vmatpush2.bf16.msra.mxu0 0
  %449 = vmatprep.subr.bf16.mxu0 0
  %450 = vmatpush2.bf16.msra.mxu0 0
  %451 = vmatprep.subr.bf16.mxu0 0
  %452 = vmatpush2.bf16.msra.mxu0 0
  %453 = vmatprep.subr.bf16.mxu0 0
  %454 = vmatpush2.bf16.msra.mxu0 0
  %455 = vmatprep.subr.bf16.mxu0 0
  %456 = vmatpush2.bf16.msra.mxu0 0
  %457 = vmatprep.mubr.bf16.mxu0 0
  %458 = vmatmul.mubr.bf16.gmra.mxu0 %v249
  %v459 = vpop.f32.mrf.mxu0
  %v460 = vadd.f32 0.0, %v459
  %v461 = vpop.f32.mrf.mxu0
  %v462 = vadd.f32 0.0, %v461
  %v463 = vpop.f32.mrf.mxu0
  %v464 = vadd.f32 0.0, %v463
  %v465 = vpop.f32.mrf.mxu0
  %v466 = vadd.f32 0.0, %v465
  %467 = vmatprep.mubr.bf16.mxu0 0
  %468 = vmatmul.mubr.bf16.gmra.mxu0 %v250
  %v469 = vpop.f32.mrf.mxu0
  %v470 = vadd.f32 0.0, %v469
  %v471 = vpop.f32.mrf.mxu0
  %v472 = vadd.f32 0.0, %v471
  %v473 = vpop.f32.mrf.mxu0
  %v474 = vadd.f32 0.0, %v473
  %v475 = vpop.f32.mrf.mxu0
  %v476 = vadd.f32 0.0, %v475
  %477 = vmatprep.mubr.bf16.mxu0 0
  %478 = vmatmul.mubr.bf16.gmra.mxu0 %v251
  %v479 = vpop.f32.mrf.mxu0
  %v480 = vadd.f32 0.0, %v479
  %v481 = vpop.f32.mrf.mxu0
  %v482 = vadd.f32 0.0, %v481
  %v483 = vpop.f32.mrf.mxu0
  %v484 = vadd.f32 0.0, %v483
  %v485 = vpop.f32.mrf.mxu0
  %v486 = vadd.f32 0.0, %v485
  %487 = vmatprep.mubr.bf16.mxu0 0
  %488 = vmatmul.mubr.bf16.gmra.mxu0 %v252
  %v489 = vpop.f32.mrf.mxu0
  %v490 = vadd.f32 0.0, %v489
  %v491 = vpop.f32.mrf.mxu0
  %v492 = vadd.f32 0.0, %v491
  %v493 = vpop.f32.mrf.mxu0
  %v494 = vadd.f32 0.0, %v493
  %v495 = vpop.f32.mrf.mxu0
  %v496 = vadd.f32 0.0, %v495
  %497 = vmatprep.mubr.bf16.mxu0 0
  %498 = vmatmul.mubr.bf16.gmra.mxu0 %v253
  %v499 = vpop.f32.mrf.mxu0
  %v500 = vadd.f32 0.0, %v499
  %v501 = vpop.f32.mrf.mxu0
  %v502 = vadd.f32 0.0, %v501
  %v503 = vpop.f32.mrf.mxu0
  %v504 = vadd.f32 0.0, %v503
  %v505 = vpop.f32.mrf.mxu0
  %v506 = vadd.f32 0.0, %v505
  %507 = vmatprep.mubr.bf16.mxu0 0
  %508 = vmatmul.mubr.bf16.gmra.mxu0 %v254
  %v509 = vpop.f32.mrf.mxu0
  %v510 = vadd.f32 0.0, %v509
  %v511 = vpop.f32.mrf.mxu0
  %v512 = vadd.f32 0.0, %v511
  %v513 = vpop.f32.mrf.mxu0
  %v514 = vadd.f32 0.0, %v513
  %v515 = vpop.f32.mrf.mxu0
  %v516 = vadd.f32 0.0, %v515
  %517 = vmatprep.mubr.bf16.mxu0 0
  %518 = vmatmul.mubr.bf16.gmra.mxu0 %v255
  %v519 = vpop.f32.mrf.mxu0
  %v520 = vadd.f32 0.0, %v519
  %v521 = vpop.f32.mrf.mxu0
  %v522 = vadd.f32 0.0, %v521
  %v523 = vpop.f32.mrf.mxu0
  %v524 = vadd.f32 0.0, %v523
  %v525 = vpop.f32.mrf.mxu0
  %v526 = vadd.f32 0.0, %v525
  %527 = vmatprep.mubr.bf16.mxu0 0
  %528 = vmatmul.mubr.bf16.gmra.mxu0 %v256
  %v529 = vpop.f32.mrf.mxu0
  %v530 = vadd.f32 0.0, %v529
  %v531 = vpop.f32.mrf.mxu0
  %v532 = vadd.f32 0.0, %v531
  %v533 = vpop.f32.mrf.mxu0
  %v534 = vadd.f32 0.0, %v533
  %v535 = vpop.f32.mrf.mxu0
  %v536 = vadd.f32 0.0, %v535
  %537 = vdwg.mxu0
  %538 = vmatprep.subr.bf16.mxu0 %v392
  %539 = vmatpush1.bf16.msra.mxu0 %v391
  %540 = vmatprep.subr.bf16.mxu0 %v388
  %541 = vmatpush1.bf16.msra.mxu0 %v387
  %542 = vmatprep.subr.bf16.mxu0 %v384
  %543 = vmatpush1.bf16.msra.mxu0 %v383
  %544 = vmatprep.subr.bf16.mxu0 %v380
  %545 = vmatpush1.bf16.msra.mxu0 %v379
  %546 = vmatprep.subr.bf16.mxu0 %v376
  %547 = vmatpush1.bf16.msra.mxu0 %v375
  %548 = vmatprep.subr.bf16.mxu0 %v372
  %549 = vmatpush1.bf16.msra.mxu0 %v371
  %550 = vmatprep.subr.bf16.mxu0 %v368
  %551 = vmatpush1.bf16.msra.mxu0 %v367
  %552 = vmatprep.subr.bf16.mxu0 %v364
  %553 = vmatpush1.bf16.msra.mxu0 %v363
  %554 = vmatprep.subr.bf16.mxu0 0
  %555 = vmatpush2.bf16.msra.mxu0 0
  %556 = vmatprep.subr.bf16.mxu0 0
  %557 = vmatpush2.bf16.msra.mxu0 0
  %558 = vmatprep.subr.bf16.mxu0 0
  %559 = vmatpush2.bf16.msra.mxu0 0
  %560 = vmatprep.subr.bf16.mxu0 0
  %561 = vmatpush2.bf16.msra.mxu0 0
  %562 = vmatprep.subr.bf16.mxu0 0
  %563 = vmatpush2.bf16.msra.mxu0 0
  %564 = vmatprep.subr.bf16.mxu0 0
  %565 = vmatpush2.bf16.msra.mxu0 0
  %566 = vmatprep.subr.bf16.mxu0 0
  %567 = vmatpush2.bf16.msra.mxu0 0
  %568 = vmatprep.subr.bf16.mxu0 0
  %569 = vmatpush2.bf16.msra.mxu0 0
  %570 = vmatprep.mubr.bf16.mxu0 0
  %571 = vmatmul.mubr.bf16.gmra.mxu0 %v249
  %v572 = vpop.f32.mrf.mxu0
  %v573 = vadd.f32 0.0, %v572
  %v574 = vpop.f32.mrf.mxu0
  %v575 = vadd.f32 0.0, %v574
  %v576 = vpop.f32.mrf.mxu0
  %v577 = vadd.f32 0.0, %v576
  %v578 = vpop.f32.mrf.mxu0
  %v579 = vadd.f32 0.0, %v578
  %580 = vmatprep.mubr.bf16.mxu0 0
  %581 = vmatmul.mubr.bf16.gmra.mxu0 %v250
  %v582 = vpop.f32.mrf.mxu0
  %v583 = vadd.f32 0.0, %v582
  %v584 = vpop.f32.mrf.mxu0
  %v585 = vadd.f32 0.0, %v584
  %v586 = vpop.f32.mrf.mxu0
  %v587 = vadd.f32 0.0, %v586
  %v588 = vpop.f32.mrf.mxu0
  %v589 = vadd.f32 0.0, %v588
  %590 = vmatprep.mubr.bf16.mxu0 0
  %591 = vmatmul.mubr.bf16.gmra.mxu0 %v251
  %v592 = vpop.f32.mrf.mxu0
  %v593 = vadd.f32 0.0, %v592
  %v594 = vpop.f32.mrf.mxu0
  %v595 = vadd.f32 0.0, %v594
  %v596 = vpop.f32.mrf.mxu0
  %v597 = vadd.f32 0.0, %v596
  %v598 = vpop.f32.mrf.mxu0
  %v599 = vadd.f32 0.0, %v598
  %600 = vmatprep.mubr.bf16.mxu0 0
  %601 = vmatmul.mubr.bf16.gmra.mxu0 %v252
  %v602 = vpop.f32.mrf.mxu0
  %v603 = vadd.f32 0.0, %v602
  %v604 = vpop.f32.mrf.mxu0
  %v605 = vadd.f32 0.0, %v604
  %v606 = vpop.f32.mrf.mxu0
  %v607 = vadd.f32 0.0, %v606
  %v608 = vpop.f32.mrf.mxu0
  %v609 = vadd.f32 0.0, %v608
  %610 = vmatprep.mubr.bf16.mxu0 0
  %611 = vmatmul.mubr.bf16.gmra.mxu0 %v253
  %v612 = vpop.f32.mrf.mxu0
  %v613 = vadd.f32 0.0, %v612
  %v614 = vpop.f32.mrf.mxu0
  %v615 = vadd.f32 0.0, %v614
  %v616 = vpop.f32.mrf.mxu0
  %v617 = vadd.f32 0.0, %v616
  %v618 = vpop.f32.mrf.mxu0
  %v619 = vadd.f32 0.0, %v618
  %620 = vmatprep.mubr.bf16.mxu0 0
  %621 = vmatmul.mubr.bf16.gmra.mxu0 %v254
  %v622 = vpop.f32.mrf.mxu0
  %v623 = vadd.f32 0.0, %v622
  %v624 = vpop.f32.mrf.mxu0
  %v625 = vadd.f32 0.0, %v624
  %v626 = vpop.f32.mrf.mxu0
  %v627 = vadd.f32 0.0, %v626
  %v628 = vpop.f32.mrf.mxu0
  %v629 = vadd.f32 0.0, %v628
  %630 = vmatprep.mubr.bf16.mxu0 0
  %631 = vmatmul.mubr.bf16.gmra.mxu0 %v255
  %v632 = vpop.f32.mrf.mxu0
  %v633 = vadd.f32 0.0, %v632
  %v634 = vpop.f32.mrf.mxu0
  %v635 = vadd.f32 0.0, %v634
  %v636 = vpop.f32.mrf.mxu0
  %v637 = vadd.f32 0.0, %v636
  %v638 = vpop.f32.mrf.mxu0
  %v639 = vadd.f32 0.0, %v638
  %640 = vmatprep.mubr.bf16.mxu0 0
  %641 = vmatmul.mubr.bf16.gmra.mxu0 %v256
  %v642 = vpop.f32.mrf.mxu0
  %v643 = vadd.f32 0.0, %v642
  %v644 = vpop.f32.mrf.mxu0
  %v645 = vadd.f32 0.0, %v644
  %v646 = vpop.f32.mrf.mxu0
  %v647 = vadd.f32 0.0, %v646
  %v648 = vpop.f32.mrf.mxu0
  %v649 = vadd.f32 0.0, %v648
  %650 = vdwg.mxu0
  %v651 = vadd.f32 %v105, %v460
  %v652 = vadd.f32 %v106, %v462
  %v653 = vadd.f32 %v107, %v573
  %v654 = vadd.f32 %v108, %v575
  %v655 = vadd.f32 %v109, %v464
  %v656 = vadd.f32 %v110, %v466
  %v657 = vadd.f32 %v111, %v577
  %v658 = vadd.f32 %v112, %v579
  %v659 = vadd.f32 %v113, %v470
  %v660 = vadd.f32 %v114, %v472
  %v661 = vadd.f32 %v115, %v583
  %v662 = vadd.f32 %v116, %v585
  %v663 = vadd.f32 %v117, %v474
  %v664 = vadd.f32 %v118, %v476
  %v665 = vadd.f32 %v119, %v587
  %v666 = vadd.f32 %v120, %v589
  %v667 = vadd.f32 %v121, %v480
  %v668 = vadd.f32 %v122, %v482
  %v669 = vadd.f32 %v123, %v593
  %v670 = vadd.f32 %v124, %v595
  %v671 = vadd.f32 %v125, %v484
  %v672 = vadd.f32 %v126, %v486
  %v673 = vadd.f32 %v127, %v597
  %v674 = vadd.f32 %v128, %v599
  %v675 = vadd.f32 %v129, %v490
  %v676 = vadd.f32 %v130, %v492
  %v677 = vadd.f32 %v131, %v603
  %v678 = vadd.f32 %v132, %v605
  %v679 = vadd.f32 %v133, %v494
  %v680 = vadd.f32 %v134, %v496
  %v681 = vadd.f32 %v135, %v607
  %v682 = vadd.f32 %v136, %v609
  %v683 = vadd.f32 %v137, %v500
  %v684 = vadd.f32 %v138, %v502
  %v685 = vadd.f32 %v139, %v613
  %v686 = vadd.f32 %v140, %v615
  %v687 = vadd.f32 %v141, %v504
  %v688 = vadd.f32 %v142, %v506
  %v689 = vadd.f32 %v143, %v617
  %v690 = vadd.f32 %v144, %v619
  %v691 = vadd.f32 %v145, %v510
  %v692 = vadd.f32 %v146, %v512
  %v693 = vadd.f32 %v147, %v623
  %v694 = vadd.f32 %v148, %v625
  %v695 = vadd.f32 %v149, %v514
  %v696 = vadd.f32 %v150, %v516
  %v697 = vadd.f32 %v151, %v627
  %v698 = vadd.f32 %v152, %v629
  %v699 = vadd.f32 %v153, %v520
  %v700 = vadd.f32 %v154, %v522
  %v701 = vadd.f32 %v155, %v633
  %v702 = vadd.f32 %v156, %v635
  %v703 = vadd.f32 %v157, %v524
  %v704 = vadd.f32 %v158, %v526
  %v705 = vadd.f32 %v159, %v637
  %v706 = vadd.f32 %v160, %v639
  %v707 = vadd.f32 %v161, %v530
  %v708 = vadd.f32 %v162, %v532
  %v709 = vadd.f32 %v163, %v643
  %v710 = vadd.f32 %v164, %v645
  %v711 = vadd.f32 %v165, %v534
  %v712 = vadd.f32 %v166, %v536
  %v713 = vadd.f32 %v167, %v647
  %v714 = vadd.f32 %v168, %v649
  %715 = vst [vmem:[%s3] sm:$0xff] %v651
  %716 = vst [vmem:[%s3 + $0x8] sm:$0xff] %v652
  %717 = vst [vmem:[%s3 + $0x10] sm:$0xff] %v653
  %718 = vst [vmem:[%s3 + $0x18] sm:$0xff] %v654
  %719 = vst [vmem:[%s3 + $0x20] sm:$0xff] %v655
  %720 = vst [vmem:[%s3 + $0x28] sm:$0xff] %v656
  %721 = vst [vmem:[%s3 + $0x30] sm:$0xff] %v657
  %722 = vst [vmem:[%s3 + $0x38] sm:$0xff] %v658
  %723 = vst [vmem:[%s3 + $0x40] sm:$0xff] %v659
  %724 = vst [vmem:[%s3 + $0x48] sm:$0xff] %v660
  %725 = vst [vmem:[%s3 + $0x50] sm:$0xff] %v661
  %726 = vst [vmem:[%s3 + $0x58] sm:$0xff] %v662
  %727 = vst [vmem:[%s3 + $0x60] sm:$0xff] %v663
  %728 = vst [vmem:[%s3 + $0x68] sm:$0xff] %v664
  %729 = vst [vmem:[%s3 + $0x70] sm:$0xff] %v665
  %730 = vst [vmem:[%s3 + $0x78] sm:$0xff] %v666
  %731 = vst [vmem:[%s3 + $0x80] sm:$0xff] %v667
  %732 = vst [vmem:[%s3 + $0x88] sm:$0xff] %v668
  %733 = vst [vmem:[%s3 + $0x90] sm:$0xff] %v669
  %734 = vst [vmem:[%s3 + $0x98] sm:$0xff] %v670
  %735 = vst [vmem:[%s3 + $0xa0] sm:$0xff] %v671
  %736 = vst [vmem:[%s3 + $0xa8] sm:$0xff] %v672
  %737 = vst [vmem:[%s3 + $0xb0] sm:$0xff] %v673
  %738 = vst [vmem:[%s3 + $0xb8] sm:$0xff] %v674
  %739 = vst [vmem:[%s3 + $0xc0] sm:$0xff] %v675
  %740 = vst [vmem:[%s3 + $0xc8] sm:$0xff] %v676
  %741 = vst [vmem:[%s3 + $0xd0] sm:$0xff] %v677
  %742 = vst [vmem:[%s3 + $0xd8] sm:$0xff] %v678
  %743 = vst [vmem:[%s3 + $0xe0] sm:$0xff] %v679
  %744 = vst [vmem:[%s3 + $0xe8] sm:$0xff] %v680
  %745 = vst [vmem:[%s3 + $0xf0] sm:$0xff] %v681
  %746 = vst [vmem:[%s3 + $0xf8] sm:$0xff] %v682
  %747 = vst [vmem:[%s3 + $0x100] sm:$0xff] %v683
  %748 = vst [vmem:[%s3 + $0x108] sm:$0xff] %v684
  %749 = vst [vmem:[%s3 + $0x110] sm:$0xff] %v685
  %750 = vst [vmem:[%s3 + $0x118] sm:$0xff] %v686
  %751 = vst [vmem:[%s3 + $0x120] sm:$0xff] %v687
  %752 = vst [vmem:[%s3 + $0x128] sm:$0xff] %v688
  %753 = vst [vmem:[%s3 + $0x130] sm:$0xff] %v689
  %754 = vst [vmem:[%s3 + $0x138] sm:$0xff] %v690
  %755 = vst [vmem:[%s3 + $0x140] sm:$0xff] %v691
  %756 = vst [vmem:[%s3 + $0x148] sm:$0xff] %v692
  %757 = vst [vmem:[%s3 + $0x150] sm:$0xff] %v693
  %758 = vst [vmem:[%s3 + $0x158] sm:$0xff] %v694
  %759 = vst [vmem:[%s3 + $0x160] sm:$0xff] %v695
  %760 = vst [vmem:[%s3 + $0x168] sm:$0xff] %v696
  %761 = vst [vmem:[%s3 + $0x170] sm:$0xff] %v697
  %762 = vst [vmem:[%s3 + $0x178] sm:$0xff] %v698
  %763 = vst [vmem:[%s3 + $0x180] sm:$0xff] %v699
  %764 = vst [vmem:[%s3 + $0x188] sm:$0xff] %v700
  %765 = vst [vmem:[%s3 + $0x190] sm:$0xff] %v701
  %766 = vst [vmem:[%s3 + $0x198] sm:$0xff] %v702
  %767 = vst [vmem:[%s3 + $0x1a0] sm:$0xff] %v703
  %768 = vst [vmem:[%s3 + $0x1a8] sm:$0xff] %v704
  %769 = vst [vmem:[%s3 + $0x1b0] sm:$0xff] %v705
  %770 = vst [vmem:[%s3 + $0x1b8] sm:$0xff] %v706
  %771 = vst [vmem:[%s3 + $0x1c0] sm:$0xff] %v707
  %772 = vst [vmem:[%s3 + $0x1c8] sm:$0xff] %v708
  %773 = vst [vmem:[%s3 + $0x1d0] sm:$0xff] %v709
  %774 = vst [vmem:[%s3 + $0x1d8] sm:$0xff] %v710
  %775 = vst [vmem:[%s3 + $0x1e0] sm:$0xff] %v711
  %776 = vst [vmem:[%s3 + $0x1e8] sm:$0xff] %v712
  %777 = vst [vmem:[%s3 + $0x1f0] sm:$0xff] %v713
  %778 = vst [vmem:[%s3 + $0x1f8] sm:$0xff] %v714
  // Predicated region
  $region18: #{lm_lstm_forward.5} parent=0 // pred_check
    _
  $region19: #{lm_lstm_forward.5} parent=0 // pred_check_branch
    %780 = sbr.rel (0) target = $region21
  $region20: #{lm_lstm_forward.5} parent=0 // pred_region
    _
  $region21: #{lm_lstm_forward.5} parent=0 // pred_fallthru
    _
  // Predicated region
  $region22: #{lm_lstm_forward.5} parent=0 // pred_check
    _
  $region23: #{lm_lstm_forward.5} parent=0 // pred_check_branch
    %782 = sbr.rel (0) target = $region25
  $region24: #{lm_lstm_forward.5} parent=0 // pred_region
    _
  $region25: #{lm_lstm_forward.5} parent=0 // pred_fallthru
    _

// kernel: lm_lstm_forward.6
$region0: #{lm_lstm_forward.6}
  #allocation0 [shape = 'u32[]', space=smem, size = 0x4, offset = 0x4, fixed_abs, tag = 'smem constant byte address 0x4 - core index']
  #allocation1 [shape = 'u32[144,128]{1,0:T(1,128)}', space=vmem, size = 0x12000, scoped, tag = 'internal scratch']
  #allocation2 [shape = 'bf16[128,512]{1,0:T(8,128)(2,1)}', space=vmem, size = 0x20000, scoped, tag = 'scratch operand']
  #allocation3 [shape = 'f32[8,128]{1,0:T(8,128)}', space=vmem, size = 0x1000, scoped, tag = 'scratch operand']
  #allocation4 [shape = 'f32[8,128]{1,0:T(8,128)}', space=vmem, size = 0x1000, scoped, tag = 'scratch operand']
  #allocation5 [shape = 's32[1]{0}', space=sflag, size = 0x4, scoped, tag = 'scratch operand']
  #allocation6 [shape = 's32[]', space=sflag, size = 0x4, offset = 0, fixed_abs, tag = 'sflag constant byte address 0x0 - dummy sync flag']
  %s0 = inlined_call_operand.vmem [shape: f32[16,8,512], index: 0, kind: input, shape index: {}]
  %s1 = inlined_call_operand.vmem [shape: bf16[128,512], index: 1, kind: input, shape index: {}]
  %s2 = inlined_call_operand.vmem [shape: f32[8,128], index: 2, kind: input, shape index: {}]
  %s3 = inlined_call_operand.vmem [shape: f32[8,128], index: 3, kind: input, shape index: {}]
  %s4 = inlined_call_operand.vmem [shape: bf16[16,8,128], index: 4, kind: output, shape index: {0}]
  %s5 = inlined_call_operand.vmem [shape: f32[8,128], index: 5, kind: output, shape index: {1}]
  %s6 = inlined_call_operand.vmem [shape: f32[8,128], index: 6, kind: output, shape index: {2}]
  %7 = xla_tuple %s4, %s5, %s6
  %s8 = sld [smem:[#allocation0]]
  $region103: #{lm_lstm_forward.6} parent=0
    _
  %s10 = ssub.s32 1, %s8
  %s11 = scalar_select 0, %s10, %s8
  loop: start=0, step=1, limit=4
  $region2: #{lm_lstm_forward.6} parent=0 // loop_pre_header
    _
  $region3: #{lm_lstm_forward.6} parent=0 // loop_header
    %s13 = sphi 0, %s17
    %p14 = scmp.ge.s32.totalorder %s13, 4
    %s20 = sphi 0, %s32
    %s21 = sphi 0, %s28
    %s22 = sphi 0, %s20
    %s23 = sphi 0, %s21
    %s24 = sphi 0, %s22
    %s25 = sphi 0, %s23
    %s37 = sphi 0, %s39
    %s40 = sphi 0, %s37
    %s41 = sphi 0, %s40
    %s57 = sphi 0, %s41
    %s63 = sphi 0, %s65
    %s66 = sphi 0, %s63
    %s67 = sphi 0, %s66
    %s83 = sphi 0, %s67
    %s89 = sphi 0, %s91
    %s92 = sphi 0, %s89
    %s93 = sphi 0, %s92
    %s109 = sphi 0, %s93
    %s117 = sphi 0, %s119
    %s120 = sphi 0, %s117
    %s121 = sphi 0, %s120
    %s137 = sphi 0, %s121
    %s143 = sphi 0, %s145
    %s146 = sphi 0, %s143
    %s147 = sphi 0, %s146
    %s163 = sphi 0, %s147
    %s169 = sphi 0, %s171
    %s172 = sphi 0, %s169
    %s173 = sphi 0, %s172
    %s189 = sphi 0, %s173
  $region4: #{lm_lstm_forward.6} parent=0 // loop_header_branch
    %16 = sbr.rel (%p14) target = $region8
  $region5: #{lm_lstm_forward.6} parent=0 // loop_body
    %s18 = ssub.s32 %s13, 1
    %s19 = ssub.s32 %s13, 2
    %s26 = sadd.s32 1, %s21
    %p27 = scmp.ge.s32.totalorder %s26, 2
    %s28 = scalar_select %p27, 0, %s26
    %s29 = sadd.s32 1, %s20
    %s30 = scalar_select %p27, %s29, %s20
    %p31 = scmp.ge.s32.totalorder %s30, 1
    %s32 = scalar_select %p31, 0, %s30
    %s33 = ssub.s32 %s21, %s28
    %s34 = ssub.s32 %s20, %s32
    %s35 = sor.u32 %s33, %s34
    %p36 = scmp.eq.s32.totalorder %s35, 0
    %s38 = sadd.s32 %s37, 1
    %s39 = scalar_select %p36, %s37, %s38
    %p42 = pneg %p36
    %p43 = scmp.eq.s32.totalorder %s13, 1
    %p44 = por %p42, %p43
    %p45 = scmp.ne.s32.totalorder %s37, %s40
    %p46 = scmp.eq.s32.totalorder %s13, 0
    %p47 = por %p45, %p46
    %p48 = scmp.ne.s32.totalorder %s37, %s40
    %p49 = scmp.eq.s32.totalorder %s18, 1
    %p50 = por %p48, %p49
    %p51 = scmp.ne.s32.totalorder %s40, %s41
    %p52 = scmp.eq.s32.totalorder %s18, 0
    %p53 = por %p51, %p52
    %p54 = scmp.ne.s32.totalorder %s40, %s41
    %p55 = scmp.eq.s32.totalorder %s19, 1
    %p56 = por %p54, %p55
    %p58 = scmp.ne.s32.totalorder %s41, %s57
    %p59 = scmp.eq.s32.totalorder %s19, 0
    %p60 = por %p58, %p59
    %s61 = ssub.s32 %s20, %s32
    %p62 = scmp.eq.s32.totalorder %s61, 0
    %s64 = sadd.s32 %s63, 1
    %s65 = scalar_select %p62, %s63, %s64
    %p68 = pneg %p62
    %p69 = scmp.eq.s32.totalorder %s13, 1
    %p70 = por %p68, %p69
    %p71 = scmp.ne.s32.totalorder %s63, %s66
    %p72 = scmp.eq.s32.totalorder %s13, 0
    %p73 = por %p71, %p72
    %p74 = scmp.ne.s32.totalorder %s63, %s66
    %p75 = scmp.eq.s32.totalorder %s18, 1
    %p76 = por %p74, %p75
    %p77 = scmp.ne.s32.totalorder %s66, %s67
    %p78 = scmp.eq.s32.totalorder %s18, 0
    %p79 = por %p77, %p78
    %p80 = scmp.ne.s32.totalorder %s66, %s67
    %p81 = scmp.eq.s32.totalorder %s19, 1
    %p82 = por %p80, %p81
    %p84 = scmp.ne.s32.totalorder %s67, %s83
    %p85 = scmp.eq.s32.totalorder %s19, 0
    %p86 = por %p84, %p85
    %s87 = ssub.s32 %s20, %s32
    %p88 = scmp.eq.s32.totalorder %s87, 0
    %s90 = sadd.s32 %s89, 1
    %s91 = scalar_select %p88, %s89, %s90
    %p94 = pneg %p88
    %p95 = scmp.eq.s32.totalorder %s13, 1
    %p96 = por %p94, %p95
    %p97 = scmp.ne.s32.totalorder %s89, %s92
    %p98 = scmp.eq.s32.totalorder %s13, 0
    %p99 = por %p97, %p98
    %p100 = scmp.ne.s32.totalorder %s89, %s92
    %p101 = scmp.eq.s32.totalorder %s18, 1
    %p102 = por %p100, %p101
    %p103 = scmp.ne.s32.totalorder %s92, %s93
    %p104 = scmp.eq.s32.totalorder %s18, 0
    %p105 = por %p103, %p104
    %p106 = scmp.ne.s32.totalorder %s92, %s93
    %p107 = scmp.eq.s32.totalorder %s19, 1
    %p108 = por %p106, %p107
    %p110 = scmp.ne.s32.totalorder %s93, %s109
    %p111 = scmp.eq.s32.totalorder %s19, 0
    %p112 = por %p110, %p111
    %s113 = ssub.s32 %s21, %s28
    %s114 = ssub.s32 %s20, %s32
    %s115 = sor.u32 %s113, %s114
    %p116 = scmp.eq.s32.totalorder %s115, 0
    %s118 = sadd.s32 %s117, 1
    %s119 = scalar_select %p116, %s117, %s118
    %p122 = pneg %p116
    %p123 = scmp.eq.s32.totalorder %s13, 1
    %p124 = por %p122, %p123
    %p125 = scmp.ne.s32.totalorder %s117, %s120
    %p126 = scmp.eq.s32.totalorder %s13, 0
    %p127 = por %p125, %p126
    %p128 = scmp.ne.s32.totalorder %s117, %s120
    %p129 = scmp.eq.s32.totalorder %s18, 1
    %p130 = por %p128, %p129
    %p131 = scmp.ne.s32.totalorder %s120, %s121
    %p132 = scmp.eq.s32.totalorder %s18, 0
    %p133 = por %p131, %p132
    %p134 = scmp.ne.s32.totalorder %s120, %s121
    %p135 = scmp.eq.s32.totalorder %s19, 1
    %p136 = por %p134, %p135
    %p138 = scmp.ne.s32.totalorder %s121, %s137
    %p139 = scmp.eq.s32.totalorder %s19, 0
    %p140 = por %p138, %p139
    %s141 = ssub.s32 %s20, %s32
    %p142 = scmp.eq.s32.totalorder %s141, 0
    %s144 = sadd.s32 %s143, 1
    %s145 = scalar_select %p142, %s143, %s144
    %p148 = pneg %p142
    %p149 = scmp.eq.s32.totalorder %s13, 1
    %p150 = por %p148, %p149
    %p151 = scmp.ne.s32.totalorder %s143, %s146
    %p152 = scmp.eq.s32.totalorder %s13, 0
    %p153 = por %p151, %p152
    %p154 = scmp.ne.s32.totalorder %s143, %s146
    %p155 = scmp.eq.s32.totalorder %s18, 1
    %p156 = por %p154, %p155
    %p157 = scmp.ne.s32.totalorder %s146, %s147
    %p158 = scmp.eq.s32.totalorder %s18, 0
    %p159 = por %p157, %p158
    %p160 = scmp.ne.s32.totalorder %s146, %s147
    %p161 = scmp.eq.s32.totalorder %s19, 1
    %p162 = por %p160, %p161
    %p164 = scmp.ne.s32.totalorder %s147, %s163
    %p165 = scmp.eq.s32.totalorder %s19, 0
    %p166 = por %p164, %p165
    %s167 = ssub.s32 %s20, %s32
    %p168 = scmp.eq.s32.totalorder %s167, 0
    %s170 = sadd.s32 %s169, 1
    %s171 = scalar_select %p168, %s169, %s170
    %p174 = pneg %p168
    %p175 = scmp.eq.s32.totalorder %s13, 1
    %p176 = por %p174, %p175
    %p177 = scmp.ne.s32.totalorder %s169, %s172
    %p178 = scmp.eq.s32.totalorder %s13, 0
    %p179 = por %p177, %p178
    %p180 = scmp.ne.s32.totalorder %s169, %s172
    %p181 = scmp.eq.s32.totalorder %s18, 1
    %p182 = por %p180, %p181
    %p183 = scmp.ne.s32.totalorder %s172, %s173
    %p184 = scmp.eq.s32.totalorder %s18, 0
    %p185 = por %p183, %p184
    %p186 = scmp.ne.s32.totalorder %s172, %s173
    %p187 = scmp.eq.s32.totalorder %s19, 1
    %p188 = por %p186, %p187
    %p190 = scmp.ne.s32.totalorder %s173, %s189
    %p191 = scmp.eq.s32.totalorder %s19, 0
    %p192 = por %p190, %p191
    %p193 = scmp.le.s32.totalorder 1, %s13
    %p194 = scmp.lt.s32.totalorder %s13, 3
    %p195 = pnand %p193, %p194
    %p196 = pneg %p195
    // Predicated region
    $region9: #{lm_lstm_forward.6} parent=5 // pred_check
      _
    $region10: #{lm_lstm_forward.6} parent=5 // pred_check_branch
      %198 = sbr.rel (%p195) target = $region12
    $region11: #{lm_lstm_forward.6} parent=5 // pred_region
      %s199 = ssub.s32 %s13, 1
      // Predicated region
      $region13: #{lm_lstm_forward.6} parent=11 // pred_check
        %p200 = pneg %p79
      $region14: #{lm_lstm_forward.6} parent=11 // pred_check_branch
        %202 = sbr.rel (%p200) target = $region16
      $region15: #{lm_lstm_forward.6} parent=11 // pred_region
        %p203 = scmp.lt.s32.totalorder %s22, 0
        %s204 = scalar_select %p203, %s22, 0
        %s205 = smul.addr %s204, 8
        %s206 = scalar_lea.vmem %s2, %s205
      $region16: #{lm_lstm_forward.6} parent=11 // pred_fallthru
        _
      // Predicated region
      $region17: #{lm_lstm_forward.6} parent=11 // pred_check
        %p207 = pneg %p105
      $region18: #{lm_lstm_forward.6} parent=11 // pred_check_branch
        %209 = sbr.rel (%p207) target = $region20
      $region19: #{lm_lstm_forward.6} parent=11 // pred_region
        %p210 = scmp.lt.s32.totalorder %s22, 0
        %s211 = scalar_select %p210, %s22, 0
        %s212 = smul.addr %s211, 8
        %s213 = scalar_lea.vmem %s3, %s212
      $region20: #{lm_lstm_forward.6} parent=11 // pred_fallthru
        _
    $region12: #{lm_lstm_forward.6} parent=5 // pred_fallthru
      _
    %p214 = scmp.lt.s32.totalorder %s13, 2
    // Predicated region
    $region21: #{lm_lstm_forward.6} parent=5 // pred_check
      %p215 = pneg %p214
    $region22: #{lm_lstm_forward.6} parent=5 // pred_check_branch
      %217 = sbr.rel (%p215) target = $region24
    $region23: #{lm_lstm_forward.6} parent=5 // pred_region
      // Predicated region
      $region25: #{lm_lstm_forward.6} parent=23 // pred_check
        %p218 = pneg %p47
      $region26: #{lm_lstm_forward.6} parent=23 // pred_check_branch
        %220 = sbr.rel (%p218) target = $region28
      $region27: #{lm_lstm_forward.6} parent=23 // pred_region
        %s221 = smul.u32 8, %s21
        %p222 = scmp.lt.s32.totalorder %s221, 15
        %s223 = scalar_select %p222, %s221, 15
        %p224 = scmp.lt.s32.totalorder %s20, 0
        %s225 = scalar_select %p224, %s20, 0
        %s226 = smul.addr %s225, 4
        %s227 = smul.addr %s223, 4
        %s228 = sadd.s32 %s226, %s227
        %s229 = smul.addr %s228, 8
        %s230 = scalar_lea.vmem %s0, %s229
        %s231 = smul.u32 8, %s21
      $region28: #{lm_lstm_forward.6} parent=23 // pred_fallthru
        _
    $region24: #{lm_lstm_forward.6} parent=5 // pred_fallthru
      _
    %p232 = scmp.le.s32.totalorder 1, %s13
    %p233 = scmp.lt.s32.totalorder %s13, 3
    %p234 = pnand %p232, %p233
    %p235 = pneg %p234
    // Predicated region
    $region29: #{lm_lstm_forward.6} parent=5 // pred_check
      _
    $region30: #{lm_lstm_forward.6} parent=5 // pred_check_branch
      %237 = sbr.rel (%p234) target = $region32
    $region31: #{lm_lstm_forward.6} parent=5 // pred_region
      %s238 = ssub.s32 %s13, 1
      %s239 = smul.u32 8, %s23
      %p240 = scmp.lt.s32.totalorder %s239, 15
      %s241 = scalar_select %p240, %s239, 15
      %p242 = scmp.lt.s32.totalorder %s22, 0
      %s243 = scalar_select %p242, %s22, 0
      %s244 = smul.addr %s243, 4
      %s245 = smul.addr %s241, 4
      %s246 = sadd.s32 %s244, %s245
      %s247 = smul.addr %s246, 8
      %s248 = scalar_lea.vmem %s0, %s247
      %p249 = pneg %p53
      %p250 = pneg %p50
      %p251 = scmp.lt.s32.totalorder %s22, 0
      %s252 = scalar_select %p251, %s22, 0
      %s253 = smul.addr %s252, 8
      %s254 = scalar_lea.vmem %s2, %s253
      %p255 = pneg %p79
      %p256 = pneg %p76
      %p257 = scmp.lt.s32.totalorder %s22, 0
      %s258 = scalar_select %p257, %s22, 0
      %s259 = smul.addr %s258, 8
      %s260 = scalar_lea.vmem %s3, %s259
      %p261 = pneg %p105
      %p262 = pneg %p102
      %p263 = pneg %p133
      %p264 = pneg %p130
      %s265 = smul.u32 8, %s23
      %p266 = scmp.lt.s32.totalorder %s265, 15
      %s267 = scalar_select %p266, %s265, 15
      %p268 = scmp.lt.s32.totalorder %s22, 0
      %s269 = scalar_select %p268, %s22, 0
      %s270 = sadd.s32 %s269, %s267
      %s271 = smul.addr %s270, 4
      %s272 = scalar_lea.vmem %s4, %s271
      %p273 = pneg %p159
      %p274 = pneg %p156
      %p275 = scmp.lt.s32.totalorder %s22, 0
      %s276 = scalar_select %p275, %s22, 0
      %s277 = smul.addr %s276, 8
      %s278 = scalar_lea.vmem %s5, %s277
      %p279 = pneg %p185
      %p280 = pneg %p182
      %p281 = scmp.lt.s32.totalorder %s22, 0
      %s282 = scalar_select %p281, %s22, 0
      %s283 = smul.addr %s282, 8
      %s284 = scalar_lea.vmem %s6, %s283
      %s285 = smul.u32 8, %s23
      %p286 = scmp.lt.s32.totalorder %s285, 15
      %s287 = scalar_select %p286, %s285, 15
      %p288 = scmp.lt.s32.totalorder %s22, 0
      %s289 = scalar_select %p288, %s22, 0
      %s290 = smul.addr %s289, 4
      %s291 = smul.addr %s287, 4
      %s292 = sadd.s32 %s290, %s291
      %s293 = smul.addr %s292, 8
      %s294 = scalar_lea.vmem %s0, %s293
      %s295 = smul.u32 8, %s23
      %p296 = scmp.lt.s32.totalorder %s22, 0
      %s297 = scalar_select %p296, %s22, 0
      %s298 = smul.addr %s297, 8
      %s299 = scalar_lea.vmem %s2, %s298
      %p300 = scmp.lt.s32.totalorder %s22, 0
      %s301 = scalar_select %p300, %s22, 0
      %s302 = smul.addr %s301, 8
      %s303 = scalar_lea.vmem %s3, %s302
      %s304 = smul.u32 8, %s23
      %p305 = scmp.lt.s32.totalorder %s304, 15
      %s306 = scalar_select %p305, %s304, 15
      %p307 = scmp.lt.s32.totalorder %s22, 0
      %s308 = scalar_select %p307, %s22, 0
      %s309 = sadd.s32 %s308, %s306
      %s310 = smul.addr %s309, 4
      %s311 = scalar_lea.vmem %s4, %s310
      %s312 = smul.u32 8, %s23
      %p313 = scmp.lt.s32.totalorder %s22, 0
      %s314 = scalar_select %p313, %s22, 0
      %s315 = smul.addr %s314, 8
      %s316 = scalar_lea.vmem %s5, %s315
      %p317 = scmp.lt.s32.totalorder %s22, 0
      %s318 = scalar_select %p317, %s22, 0
      %s319 = smul.addr %s318, 8
      %s320 = scalar_lea.vmem %s6, %s319
      %p322 = scmp.eq.s32.totalorder %s23, 0
      // Predicated region
      $region33: #{lm_lstm_forward.6} parent=31 // pred_check
        %p323 = pneg %p322
      $region34: #{lm_lstm_forward.6} parent=31 // pred_check_branch
        %325 = sbr.rel (%p323) target = $region36
      $region35: #{lm_lstm_forward.6} parent=31 // pred_region
        %p327 = scmp.lt.u32.totalorder 256, 8
        %p328 = pneg %p327
        // Predicated region
        $region37: #{lm_lstm_forward.6} parent=35 // pred_check
          _
        $region38: #{lm_lstm_forward.6} parent=35 // pred_check_branch
          %330 = sbr.rel (%p327) target = $region40
        $region39: #{lm_lstm_forward.6} parent=35 // pred_region
          %s346 = sand.u32 256, 7
          %p347 = scmp.eq.s32.totalorder %s346, 0
          // Predicated region
          $region52: #{lm_lstm_forward.6} parent=39 // pred_check
            %p348 = pneg %p347
          $region53: #{lm_lstm_forward.6} parent=39 // pred_check_branch
            %350 = sbr.rel (%p348) target = $region55
          $region54: #{lm_lstm_forward.6} parent=39 // pred_region
            loop: start=0, step=1, limit=1
            $region56: #{lm_lstm_forward.6} parent=54 // loop_pre_header
              _
            $region57: #{lm_lstm_forward.6} parent=54 // loop_header
              %s352 = sphi 0, %s356
              %p353 = scmp.ge.s32.totalorder %s352, 1
              %s357 = sphi %s1, %s1
              %s358 = sphi [#allocation2], [#allocation2]
            $region58: #{lm_lstm_forward.6} parent=54 // loop_header_branch
              %355 = sbr.rel (%p353) target = $region62
            $region59: #{lm_lstm_forward.6} parent=54 // loop_body
              %v359 = vld [vmem:[%s357] sm:$0xff]
              %360 = vst [vmem:[%s358] sm:$0xff] %v359
              %v361 = vld [vmem:[%s357 + $0x8] sm:$0xff]
              %362 = vst [vmem:[%s358 + $0x8] sm:$0xff] %v361
              %v363 = vld [vmem:[%s357 + $0x10] sm:$0xff]
              %364 = vst [vmem:[%s358 + $0x10] sm:$0xff] %v363
              %v365 = vld [vmem:[%s357 + $0x18] sm:$0xff]
              %366 = vst [vmem:[%s358 + $0x18] sm:$0xff] %v365
              %v367 = vld [vmem:[%s357 + $0x20] sm:$0xff]
              %368 = vst [vmem:[%s358 + $0x20] sm:$0xff] %v367
              %v369 = vld [vmem:[%s357 + $0x28] sm:$0xff]
              %370 = vst [vmem:[%s358 + $0x28] sm:$0xff] %v369
              %v371 = vld [vmem:[%s357 + $0x30] sm:$0xff]
              %372 = vst [vmem:[%s358 + $0x30] sm:$0xff] %v371
              %v373 = vld [vmem:[%s357 + $0x38] sm:$0xff]
              %374 = vst [vmem:[%s358 + $0x38] sm:$0xff] %v373
              %v375 = vld [vmem:[%s357 + $0x40] sm:$0xff]
              %376 = vst [vmem:[%s358 + $0x40] sm:$0xff] %v375
              %v377 = vld [vmem:[%s357 + $0x48] sm:$0xff]
              %378 = vst [vmem:[%s358 + $0x48] sm:$0xff] %v377
              %v379 = vld [vmem:[%s357 + $0x50] sm:$0xff]
              %380 = vst [vmem:[%s358 + $0x50] sm:$0xff] %v379
              %v381 = vld [vmem:[%s357 + $0x58] sm:$0xff]
              %382 = vst [vmem:[%s358 + $0x58] sm:$0xff] %v381
              %v383 = vld [vmem:[%s357 + $0x60] sm:$0xff]
              %384 = vst [vmem:[%s358 + $0x60] sm:$0xff] %v383
              %v385 = vld [vmem:[%s357 + $0x68] sm:$0xff]
              %386 = vst [vmem:[%s358 + $0x68] sm:$0xff] %v385
              %v387 = vld [vmem:[%s357 + $0x70] sm:$0xff]
              %388 = vst [vmem:[%s358 + $0x70] sm:$0xff] %v387
              %v389 = vld [vmem:[%s357 + $0x78] sm:$0xff]
              %390 = vst [vmem:[%s358 + $0x78] sm:$0xff] %v389
              %v391 = vld [vmem:[%s357 + $0x80] sm:$0xff]
              %392 = vst [vmem:[%s358 + $0x80] sm:$0xff] %v391
              %v393 = vld [vmem:[%s357 + $0x88] sm:$0xff]
              %394 = vst [vmem:[%s358 + $0x88] sm:$0xff] %v393
              %v395 = vld [vmem:[%s357 + $0x90] sm:$0xff]
              %396 = vst [vmem:[%s358 + $0x90] sm:$0xff] %v395
              %v397 = vld [vmem:[%s357 + $0x98] sm:$0xff]
              %398 = vst [vmem:[%s358 + $0x98] sm:$0xff] %v397
              %v399 = vld [vmem:[%s357 + $0xa0] sm:$0xff]
              %400 = vst [vmem:[%s358 + $0xa0] sm:$0xff] %v399
              %v401 = vld [vmem:[%s357 + $0xa8] sm:$0xff]
              %402 = vst [vmem:[%s358 + $0xa8] sm:$0xff] %v401
              %v403 = vld [vmem:[%s357 + $0xb0] sm:$0xff]
              %404 = vst [vmem:[%s358 + $0xb0] sm:$0xff] %v403
              %v405 = vld [vmem:[%s357 + $0xb8] sm:$0xff]
              %406 = vst [vmem:[%s358 + $0xb8] sm:$0xff] %v405
              %v407 = vld [vmem:[%s357 + $0xc0] sm:$0xff]
              %408 = vst [vmem:[%s358 + $0xc0] sm:$0xff] %v407
              %v409 = vld [vmem:[%s357 + $0xc8] sm:$0xff]
              %410 = vst [vmem:[%s358 + $0xc8] sm:$0xff] %v409
              %v411 = vld [vmem:[%s357 + $0xd0] sm:$0xff]
              %412 = vst [vmem:[%s358 + $0xd0] sm:$0xff] %v411
              %v413 = vld [vmem:[%s357 + $0xd8] sm:$0xff]
              %414 = vst [vmem:[%s358 + $0xd8] sm:$0xff] %v413
              %v415 = vld [vmem:[%s357 + $0xe0] sm:$0xff]
              %416 = vst [vmem:[%s358 + $0xe0] sm:$0xff] %v415
              %v417 = vld [vmem:[%s357 + $0xe8] sm:$0xff]
              %418 = vst [vmem:[%s358 + $0xe8] sm:$0xff] %v417
              %v419 = vld [vmem:[%s357 + $0xf0] sm:$0xff]
              %420 = vst [vmem:[%s358 + $0xf0] sm:$0xff] %v419
              %v421 = vld [vmem:[%s357 + $0xf8] sm:$0xff]
              %422 = vst [vmem:[%s358 + $0xf8] sm:$0xff] %v421
            $region60: #{lm_lstm_forward.6} parent=54 // loop_footer
              %s356 = sadd.s32 1, %s352
            $region61: #{lm_lstm_forward.6} parent=54 // loop_footer_branch
              %351 = sbr.rel target = $region57
            $region62: #{lm_lstm_forward.6} parent=54 // loop_exit
              _
          $region55: #{lm_lstm_forward.6} parent=39 // pred_fallthru
            _
          %p423 = pneg %p347
          // Predicated region
          $region63: #{lm_lstm_forward.6} parent=39 // pred_check
            _
          $region64: #{lm_lstm_forward.6} parent=39 // pred_check_branch
            %425 = sbr.rel (%p347) target = $region66
          $region65: #{lm_lstm_forward.6} parent=39 // pred_region
            %s426 = sand.u32 256, 7
          $region66: #{lm_lstm_forward.6} parent=39 // pred_fallthru
            _
        $region40: #{lm_lstm_forward.6} parent=35 // pred_fallthru
          _
        // Predicated region
        $region41: #{lm_lstm_forward.6} parent=35 // pred_check
          %p331 = pneg %p327
        $region42: #{lm_lstm_forward.6} parent=35 // pred_check_branch
          %333 = sbr.rel (%p331) target = $region44
        $region43: #{lm_lstm_forward.6} parent=35 // pred_region
          %s334 = sshll.u32 1, 256
          %s335 = ssub.s32 %s334, 1
          loop: start=0, step=1, limit=1
          $region45: #{lm_lstm_forward.6} parent=43 // loop_pre_header
            _
          $region46: #{lm_lstm_forward.6} parent=43 // loop_header
            %s337 = sphi 0, %s341
            %p338 = scmp.ge.s32.totalorder %s337, 1
            %s342 = sphi %s1, %s1
            %s343 = sphi [#allocation2], [#allocation2]
          $region47: #{lm_lstm_forward.6} parent=43 // loop_header_branch
            %340 = sbr.rel (%p338) target = $region51
          $region48: #{lm_lstm_forward.6} parent=43 // loop_body
            %v344 = vld [vmem:[%s342] sm:%s335]
            %345 = vst [vmem:[%s343] sm:%s335] %v344
          $region49: #{lm_lstm_forward.6} parent=43 // loop_footer
            %s341 = sadd.s32 1, %s337
          $region50: #{lm_lstm_forward.6} parent=43 // loop_footer_branch
            %336 = sbr.rel target = $region46
          $region51: #{lm_lstm_forward.6} parent=43 // loop_exit
            _
        $region44: #{lm_lstm_forward.6} parent=35 // pred_fallthru
          _
        // Predicated region
        $region67: #{lm_lstm_forward.6} parent=35 // pred_check
          _
        $region68: #{lm_lstm_forward.6} parent=35 // pred_check_branch
          %429 = sbr.rel (0) target = $region70
        $region69: #{lm_lstm_forward.6} parent=35 // pred_region
          %430 = vsyncadd [#allocation5], 4096
        $region70: #{lm_lstm_forward.6} parent=35 // pred_fallthru
          _
        %v431 = vld [vmem:[%s299] sm:$0xff]
        %432 = vst [vmem:[#allocation3] sm:$0xff] %v431
        %v433 = vld [vmem:[%s303] sm:$0xff]
        %434 = vst [vmem:[#allocation4] sm:$0xff] %v433
        %s435 = smul.u32 4, 16
        %s436 = smul.u32 %s435, 4
        %s437 = sshll.u32 %s436, 4
        %438 = dma.done [#allocation5], %s437
      $region36: #{lm_lstm_forward.6} parent=31 // pred_fallthru
        _
      %v439 = vld [vmem:[#allocation3] sm:$0xff]
      %v440 = vld [vmem:[#allocation4] sm:$0xff]
      %v441 = vld [vmem:[%s294] sm:$0xff]
      %v442 = vld [vmem:[%s294 + $0x8] sm:$0xff]
      %v443 = vld [vmem:[%s294 + $0x10] sm:$0xff]
      %v444 = vld [vmem:[%s294 + $0x18] sm:$0xff]
      %v445 = vpack.c.bf16 %v439, %v439
      %v446 = vld [vmem:[#allocation2] sm:$0xff]
      %v447 = vld [vmem:[#allocation2 + $0x8] sm:$0xff]
      %v448 = vld [vmem:[#allocation2 + $0x10] sm:$0xff]
      %v449 = vld [vmem:[#allocation2 + $0x18] sm:$0xff]
      %v450 = vld [vmem:[#allocation2 + $0x20] sm:$0xff]
      %v451 = vld [vmem:[#allocation2 + $0x28] sm:$0xff]
      %v452 = vld [vmem:[#allocation2 + $0x30] sm:$0xff]
      %v453 = vld [vmem:[#allocation2 + $0x38] sm:$0xff]
      %v454 = vld [vmem:[#allocation2 + $0x40] sm:$0xff]
      %v455 = vld [vmem:[#allocation2 + $0x48] sm:$0xff]
      %v456 = vld [vmem:[#allocation2 + $0x50] sm:$0xff]
      %v457 = vld [vmem:[#allocation2 + $0x58] sm:$0xff]
      %v458 = vld [vmem:[#allocation2 + $0x60] sm:$0xff]
      %v459 = vld [vmem:[#allocation2 + $0x68] sm:$0xff]
      %v460 = vld [vmem:[#allocation2 + $0x70] sm:$0xff]
      %v461 = vld [vmem:[#allocation2 + $0x78] sm:$0xff]
      %v462 = vld [vmem:[#allocation2 + $0x80] sm:$0xff]
      %v463 = vld [vmem:[#allocation2 + $0x88] sm:$0xff]
      %v464 = vld [vmem:[#allocation2 + $0x90] sm:$0xff]
      %v465 = vld [vmem:[#allocation2 + $0x98] sm:$0xff]
      %v466 = vld [vmem:[#allocation2 + $0xa0] sm:$0xff]
      %v467 = vld [vmem:[#allocation2 + $0xa8] sm:$0xff]
      %v468 = vld [vmem:[#allocation2 + $0xb0] sm:$0xff]
      %v469 = vld [vmem:[#allocation2 + $0xb8] sm:$0xff]
      %v470 = vld [vmem:[#allocation2 + $0xc0] sm:$0xff]
      %v471 = vld [vmem:[#allocation2 + $0xc8] sm:$0xff]
      %v472 = vld [vmem:[#allocation2 + $0xd0] sm:$0xff]
      %v473 = vld [vmem:[#allocation2 + $0xd8] sm:$0xff]
      %v474 = vld [vmem:[#allocation2 + $0xe0] sm:$0xff]
      %v475 = vld [vmem:[#allocation2 + $0xe8] sm:$0xff]
      %v476 = vld [vmem:[#allocation2 + $0xf0] sm:$0xff]
      %v477 = vld [vmem:[#allocation2 + $0xf8] sm:$0xff]
      %v510 = vunpack.c.l.b16 %v446
      %v511 = vunpack.c.h.b16 %v446
      %v512 = vunpack.c.l.b16 %v447
      %v513 = vunpack.c.h.b16 %v447
      %v514 = vunpack.c.l.b16 %v448
      %v515 = vunpack.c.h.b16 %v448
      %v516 = vunpack.c.l.b16 %v449
      %v517 = vunpack.c.h.b16 %v449
      %v518 = vunpack.c.l.b16 %v450
      %v519 = vunpack.c.h.b16 %v450
      %v520 = vunpack.c.l.b16 %v451
      %v521 = vunpack.c.h.b16 %v451
      %v522 = vunpack.c.l.b16 %v452
      %v523 = vunpack.c.h.b16 %v452
      %v524 = vunpack.c.l.b16 %v453
      %v525 = vunpack.c.h.b16 %v453
      %v526 = vunpack.c.l.b16 %v454
      %v527 = vunpack.c.h.b16 %v454
      %v528 = vunpack.c.l.b16 %v455
      %v529 = vunpack.c.h.b16 %v455
      %v530 = vunpack.c.l.b16 %v456
      %v531 = vunpack.c.h.b16 %v456
      %v532 = vunpack.c.l.b16 %v457
      %v533 = vunpack.c.h.b16 %v457
      %v534 = vunpack.c.l.b16 %v458
      %v535 = vunpack.c.h.b16 %v458
      %v536 = vunpack.c.l.b16 %v459
      %v537 = vunpack.c.h.b16 %v459
      %v538 = vunpack.c.l.b16 %v460
      %v539 = vunpack.c.h.b16 %v460
      %v540 = vunpack.c.l.b16 %v461
      %v541 = vunpack.c.h.b16 %v461
      %v542 = vunpack.c.l.b16 %v462
      %v543 = vunpack.c.h.b16 %v462
      %v544 = vunpack.c.l.b16 %v463
      %v545 = vunpack.c.h.b16 %v463
      %v546 = vunpack.c.l.b16 %v464
      %v547 = vunpack.c.h.b16 %v464
      %v548 = vunpack.c.l.b16 %v465
      %v549 = vunpack.c.h.b16 %v465
      %v550 = vunpack.c.l.b16 %v466
      %v551 = vunpack.c.h.b16 %v466
      %v552 = vunpack.c.l.b16 %v467
      %v553 = vunpack.c.h.b16 %v467
      %v554 = vunpack.c.l.b16 %v468
      %v555 = vunpack.c.h.b16 %v468
      %v556 = vunpack.c.l.b16 %v469
      %v557 = vunpack.c.h.b16 %v469
      %v558 = vunpack.c.l.b16 %v470
      %v559 = vunpack.c.h.b16 %v470
      %v560 = vunpack.c.l.b16 %v471
      %v561 = vunpack.c.h.b16 %v471
      %v562 = vunpack.c.l.b16 %v472
      %v563 = vunpack.c.h.b16 %v472
      %v564 = vunpack.c.l.b16 %v473
      %v565 = vunpack.c.h.b16 %v473
      %v566 = vunpack.c.l.b16 %v474
      %v567 = vunpack.c.h.b16 %v474
      %v568 = vunpack.c.l.b16 %v475
      %v569 = vunpack.c.h.b16 %v475
      %v570 = vunpack.c.l.b16 %v476
      %v571 = vunpack.c.h.b16 %v476
      %v572 = vunpack.c.l.b16 %v477
      %v573 = vunpack.c.h.b16 %v477
      %v574 = vpack.c.b16 %v514, %v510
      %v575 = vpack.c.b16 %v515, %v511
      %v576 = vpack.c.b16 %v516, %v512
      %v577 = vpack.c.b16 %v517, %v513
      %v578 = vpack.c.b16 %v522, %v518
      %v579 = vpack.c.b16 %v523, %v519
      %v580 = vpack.c.b16 %v524, %v520
      %v581 = vpack.c.b16 %v525, %v521
      %v582 = vpack.c.b16 %v530, %v526
      %v583 = vpack.c.b16 %v531, %v527
      %v584 = vpack.c.b16 %v532, %v528
      %v585 = vpack.c.b16 %v533, %v529
      %v586 = vpack.c.b16 %v538, %v534
      %v587 = vpack.c.b16 %v539, %v535
      %v588 = vpack.c.b16 %v540, %v536
      %v589 = vpack.c.b16 %v541, %v537
      %v590 = vpack.c.b16 %v546, %v542
      %v591 = vpack.c.b16 %v547, %v543
      %v592 = vpack.c.b16 %v548, %v544
      %v593 = vpack.c.b16 %v549, %v545
      %v594 = vpack.c.b16 %v554, %v550
      %v595 = vpack.c.b16 %v555, %v551
      %v596 = vpack.c.b16 %v556, %v552
      %v597 = vpack.c.b16 %v557, %v553
      %v598 = vpack.c.b16 %v562, %v558
      %v599 = vpack.c.b16 %v563, %v559
      %v600 = vpack.c.b16 %v564, %v560
      %v601 = vpack.c.b16 %v565, %v561
      %v602 = vpack.c.b16 %v570, %v566
      %v603 = vpack.c.b16 %v571, %v567
      %v604 = vpack.c.b16 %v572, %v568
      %v605 = vpack.c.b16 %v573, %v569
      %638 = vmatprep.subr.bf16.mxu0 %v603
      %639 = vmatpush1.bf16.msra.mxu0 %v602
      %640 = vmatprep.subr.bf16.mxu0 %v599
      %641 = vmatpush1.bf16.msra.mxu0 %v598
      %642 = vmatprep.subr.bf16.mxu0 %v595
      %643 = vmatpush1.bf16.msra.mxu0 %v594
      %644 = vmatprep.subr.bf16.mxu0 %v591
      %645 = vmatpush1.bf16.msra.mxu0 %v590
      %646 = vmatprep.subr.bf16.mxu0 %v587
      %647 = vmatpush1.bf16.msra.mxu0 %v586
      %648 = vmatprep.subr.bf16.mxu0 %v583
      %649 = vmatpush1.bf16.msra.mxu0 %v582
      %650 = vmatprep.subr.bf16.mxu0 %v579
      %651 = vmatpush1.bf16.msra.mxu0 %v578
      %652 = vmatprep.subr.bf16.mxu0 %v575
      %653 = vmatpush1.bf16.msra.mxu0 %v574
      %654 = vmatprep.subr.bf16.mxu0 0
      %655 = vmatpush2.bf16.msra.mxu0 0
      %656 = vmatprep.subr.bf16.mxu0 0
      %657 = vmatpush2.bf16.msra.mxu0 0
      %658 = vmatprep.subr.bf16.mxu0 0
      %659 = vmatpush2.bf16.msra.mxu0 0
      %660 = vmatprep.subr.bf16.mxu0 0
      %661 = vmatpush2.bf16.msra.mxu0 0
      %662 = vmatprep.subr.bf16.mxu0 0
      %663 = vmatpush2.bf16.msra.mxu0 0
      %664 = vmatprep.subr.bf16.mxu0 0
      %665 = vmatpush2.bf16.msra.mxu0 0
      %666 = vmatprep.subr.bf16.mxu0 0
      %667 = vmatpush2.bf16.msra.mxu0 0
      %668 = vmatprep.subr.bf16.mxu0 0
      %669 = vmatpush2.bf16.msra.mxu0 0
      %670 = vmatprep.mubr.bf16.mxu0 0
      %671 = vmatmul.mubr.bf16.gmra.mxu0 %v445
      %v672 = vpop.f32.mrf.mxu0
      %v673 = vadd.f32 0.0, %v672
      %v674 = vpop.f32.mrf.mxu0
      %v675 = vadd.f32 0.0, %v674
      %v676 = vpop.f32.mrf.mxu0
      %v677 = vpop.f32.mrf.mxu0
      %678 = vdwg.mxu0
      %679 = vmatprep.subr.bf16.mxu0 %v605
      %680 = vmatpush1.bf16.msra.mxu0 %v604
      %681 = vmatprep.subr.bf16.mxu0 %v601
      %682 = vmatpush1.bf16.msra.mxu0 %v600
      %683 = vmatprep.subr.bf16.mxu0 %v597
      %684 = vmatpush1.bf16.msra.mxu0 %v596
      %685 = vmatprep.subr.bf16.mxu0 %v593
      %686 = vmatpush1.bf16.msra.mxu0 %v592
      %687 = vmatprep.subr.bf16.mxu0 %v589
      %688 = vmatpush1.bf16.msra.mxu0 %v588
      %689 = vmatprep.subr.bf16.mxu0 %v585
      %690 = vmatpush1.bf16.msra.mxu0 %v584
      %691 = vmatprep.subr.bf16.mxu0 %v581
      %692 = vmatpush1.bf16.msra.mxu0 %v580
      %693 = vmatprep.subr.bf16.mxu0 %v577
      %694 = vmatpush1.bf16.msra.mxu0 %v576
      %695 = vmatprep.subr.bf16.mxu0 0
      %696 = vmatpush2.bf16.msra.mxu0 0
      %697 = vmatprep.subr.bf16.mxu0 0
      %698 = vmatpush2.bf16.msra.mxu0 0
      %699 = vmatprep.subr.bf16.mxu0 0
      %700 = vmatpush2.bf16.msra.mxu0 0
      %701 = vmatprep.subr.bf16.mxu0 0
      %702 = vmatpush2.bf16.msra.mxu0 0
      %703 = vmatprep.subr.bf16.mxu0 0
      %704 = vmatpush2.bf16.msra.mxu0 0
      %705 = vmatprep.subr.bf16.mxu0 0
      %706 = vmatpush2.bf16.msra.mxu0 0
      %707 = vmatprep.subr.bf16.mxu0 0
      %708 = vmatpush2.bf16.msra.mxu0 0
      %709 = vmatprep.subr.bf16.mxu0 0
      %710 = vmatpush2.bf16.msra.mxu0 0
      %711 = vmatprep.mubr.bf16.mxu0 0
      %712 = vmatmul.mubr.bf16.gmra.mxu0 %v445
      %v713 = vpop.f32.mrf.mxu0
      %v714 = vadd.f32 0.0, %v713
      %v715 = vpop.f32.mrf.mxu0
      %v716 = vadd.f32 0.0, %v715
      %v717 = vpop.f32.mrf.mxu0
      %v718 = vpop.f32.mrf.mxu0
      %719 = vdwg.mxu0
      %v720 = vadd.f32 %v441, %v673
      %v721 = vadd.f32 %v442, %v675
      %v722 = vadd.f32 %v443, %v714
      %v723 = vadd.f32 %v444, %v716
      %v724 = vxor.u32 %v720, 2147483648
      %v725 = vxor.u32 %v721, 2147483648
      %v726 = vxor.u32 %v722, 2147483648
      %v727 = vmul.f32 %v724, 1.442695
      %v728 = vpow.pop %v727
      %v729 = vmul.f32 %v725, 1.442695
      %v730 = vpow.pop %v729
      %v731 = vmul.f32 %v726, 1.442695
      %v732 = vpow.pop %v731
      %v733 = vadd.f32 %v728, 1.0
      %v734 = vadd.f32 %v730, 1.0
      %v735 = vadd.f32 %v732, 1.0
      %v736 = vrcp.pop %v733
      %v737 = vmul.f32 1.0, %v736
      %v738 = vrcp.pop %v734
      %v739 = vmul.f32 1.0, %v738
      %v740 = vrcp.pop %v735
      %v741 = vmul.f32 1.0, %v740
      %v742 = vtanh.pop %v723
      %v743 = vmul.f32 %v739, %v440
      %v744 = vmul.f32 %v737, %v742
      %v745 = vadd.f32 %v743, %v744
      %v746 = vtanh.pop %v745
      %v747 = vmul.f32 %v741, %v746
      %748 = vst [vmem:[#allocation4] sm:$0xff] %v745
      %749 = vst [vmem:[#allocation3] sm:$0xff] %v747
      %v750 = vpack.c.bf16 %v747, %v747
      %751 = vst [vmem:[%s311] sm:$0xf] %v750
      %v752 = vld [vmem:[#allocation3] sm:$0xff]
      %v753 = vld [vmem:[#allocation4] sm:$0xff]
      %s754 = scalar_lea.vmem %s294, 32
      %v755 = vld [vmem:[%s754] sm:$0xff]
      %v756 = vld [vmem:[%s754 + $0x8] sm:$0xff]
      %v757 = vld [vmem:[%s754 + $0x10] sm:$0xff]
      %v758 = vld [vmem:[%s754 + $0x18] sm:$0xff]
      %v759 = vpack.c.bf16 %v752, %v752
      %v760 = vld [vmem:[#allocation2] sm:$0xff]
      %v761 = vld [vmem:[#allocation2 + $0x8] sm:$0xff]
      %v762 = vld [vmem:[#allocation2 + $0x10] sm:$0xff]
      %v763 = vld [vmem:[#allocation2 + $0x18] sm:$0xff]
      %v764 = vld [vmem:[#allocation2 + $0x20] sm:$0xff]
      %v765 = vld [vmem:[#allocation2 + $0x28] sm:$0xff]
      %v766 = vld [vmem:[#allocation2 + $0x30] sm:$0xff]
      %v767 = vld [vmem:[#allocation2 + $0x38] sm:$0xff]
      %v768 = vld [vmem:[#allocation2 + $0x40] sm:$0xff]
      %v769 = vld [vmem:[#allocation2 + $0x48] sm:$0xff]
      %v770 = vld [vmem:[#allocation2 + $0x50] sm:$0xff]
      %v771 = vld [vmem:[#allocation2 + $0x58] sm:$0xff]
      %v772 = vld [vmem:[#allocation2 + $0x60] sm:$0xff]
      %v773 = vld [vmem:[#allocation2 + $0x68] sm:$0xff]
      %v774 = vld [vmem:[#allocation2 + $0x70] sm:$0xff]
      %v775 = vld [vmem:[#allocation2 + $0x78] sm:$0xff]
      %v776 = vld [vmem:[#allocation2 + $0x80] sm:$0xff]
      %v777 = vld [vmem:[#allocation2 + $0x88] sm:$0xff]
      %v778 = vld [vmem:[#allocation2 + $0x90] sm:$0xff]
      %v779 = vld [vmem:[#allocation2 + $0x98] sm:$0xff]
      %v780 = vld [vmem:[#allocation2 + $0xa0] sm:$0xff]
      %v781 = vld [vmem:[#allocation2 + $0xa8] sm:$0xff]
      %v782 = vld [vmem:[#allocation2 + $0xb0] sm:$0xff]
      %v783 = vld [vmem:[#allocation2 + $0xb8] sm:$0xff]
      %v784 = vld [vmem:[#allocation2 + $0xc0] sm:$0xff]
      %v785 = vld [vmem:[#allocation2 + $0xc8] sm:$0xff]
      %v786 = vld [vmem:[#allocation2 + $0xd0] sm:$0xff]
      %v787 = vld [vmem:[#allocation2 + $0xd8] sm:$0xff]
      %v788 = vld [vmem:[#allocation2 + $0xe0] sm:$0xff]
      %v789 = vld [vmem:[#allocation2 + $0xe8] sm:$0xff]
      %v790 = vld [vmem:[#allocation2 + $0xf0] sm:$0xff]
      %v791 = vld [vmem:[#allocation2 + $0xf8] sm:$0xff]
      %v824 = vunpack.c.l.b16 %v760
      %v825 = vunpack.c.h.b16 %v760
      %v826 = vunpack.c.l.b16 %v761
      %v827 = vunpack.c.h.b16 %v761
      %v828 = vunpack.c.l.b16 %v762
      %v829 = vunpack.c.h.b16 %v762
      %v830 = vunpack.c.l.b16 %v763
      %v831 = vunpack.c.h.b16 %v763
      %v832 = vunpack.c.l.b16 %v764
      %v833 = vunpack.c.h.b16 %v764
      %v834 = vunpack.c.l.b16 %v765
      %v835 = vunpack.c.h.b16 %v765
      %v836 = vunpack.c.l.b16 %v766
      %v837 = vunpack.c.h.b16 %v766
      %v838 = vunpack.c.l.b16 %v767
      %v839 = vunpack.c.h.b16 %v767
      %v840 = vunpack.c.l.b16 %v768
      %v841 = vunpack.c.h.b16 %v768
      %v842 = vunpack.c.l.b16 %v769
      %v843 = vunpack.c.h.b16 %v769
      %v844 = vunpack.c.l.b16 %v770
      %v845 = vunpack.c.h.b16 %v770
      %v846 = vunpack.c.l.b16 %v771
      %v847 = vunpack.c.h.b16 %v771
      %v848 = vunpack.c.l.b16 %v772
      %v849 = vunpack.c.h.b16 %v772
      %v850 = vunpack.c.l.b16 %v773
      %v851 = vunpack.c.h.b16 %v773
      %v852 = vunpack.c.l.b16 %v774
      %v853 = vunpack.c.h.b16 %v774
      %v854 = vunpack.c.l.b16 %v775
      %v855 = vunpack.c.h.b16 %v775
      %v856 = vunpack.c.l.b16 %v776
      %v857 = vunpack.c.h.b16 %v776
      %v858 = vunpack.c.l.b16 %v777
      %v859 = vunpack.c.h.b16 %v777
      %v860 = vunpack.c.l.b16 %v778
      %v861 = vunpack.c.h.b16 %v778
      %v862 = vunpack.c.l.b16 %v779
      %v863 = vunpack.c.h.b16 %v779
      %v864 = vunpack.c.l.b16 %v780
      %v865 = vunpack.c.h.b16 %v780
      %v866 = vunpack.c.l.b16 %v781
      %v867 = vunpack.c.h.b16 %v781
      %v868 = vunpack.c.l.b16 %v782
      %v869 = vunpack.c.h.b16 %v782
      %v870 = vunpack.c.l.b16 %v783
      %v871 = vunpack.c.h.b16 %v783
      %v872 = vunpack.c.l.b16 %v784
      %v873 = vunpack.c.h.b16 %v784
      %v874 = vunpack.c.l.b16 %v785
      %v875 = vunpack.c.h.b16 %v785
      %v876 = vunpack.c.l.b16 %v786
      %v877 = vunpack.c.h.b16 %v786
      %v878 = vunpack.c.l.b16 %v787
      %v879 = vunpack.c.h.b16 %v787
      %v880 = vunpack.c.l.b16 %v788
      %v881 = vunpack.c.h.b16 %v788
      %v882 = vunpack.c.l.b16 %v789
      %v883 = vunpack.c.h.b16 %v789
      %v884 = vunpack.c.l.b16 %v790
      %v885 = vunpack.c.h.b16 %v790
      %v886 = vunpack.c.l.b16 %v791
      %v887 = vunpack.c.h.b16 %v791
      %v888 = vpack.c.b16 %v828, %v824
      %v889 = vpack.c.b16 %v829, %v825
      %v890 = vpack.c.b16 %v830, %v826
      %v891 = vpack.c.b16 %v831, %v827
      %v892 = vpack.c.b16 %v836, %v832
      %v893 = vpack.c.b16 %v837, %v833
      %v894 = vpack.c.b16 %v838, %v834
      %v895 = vpack.c.b16 %v839, %v835
      %v896 = vpack.c.b16 %v844, %v840
      %v897 = vpack.c.b16 %v845, %v841
      %v898 = vpack.c.b16 %v846, %v842
      %v899 = vpack.c.b16 %v847, %v843
      %v900 = vpack.c.b16 %v852, %v848
      %v901 = vpack.c.b16 %v853, %v849
      %v902 = vpack.c.b16 %v854, %v850
      %v903 = vpack.c.b16 %v855, %v851
      %v904 = vpack.c.b16 %v860, %v856
      %v905 = vpack.c.b16 %v861, %v857
      %v906 = vpack.c.b16 %v862, %v858
      %v907 = vpack.c.b16 %v863, %v859
      %v908 = vpack.c.b16 %v868, %v864
      %v909 = vpack.c.b16 %v869, %v865
      %v910 = vpack.c.b16 %v870, %v866
      %v911 = vpack.c.b16 %v871, %v867
      %v912 = vpack.c.b16 %v876, %v872
      %v913 = vpack.c.b16 %v877, %v873
      %v914 = vpack.c.b16 %v878, %v874
      %v915 = vpack.c.b16 %v879, %v875
      %v916 = vpack.c.b16 %v884, %v880
      %v917 = vpack.c.b16 %v885, %v881
      %v918 = vpack.c.b16 %v886, %v882
      %v919 = vpack.c.b16 %v887, %v883
      %952 = vmatprep.subr.bf16.mxu0 %v917
      %953 = vmatpush1.bf16.msra.mxu0 %v916
      %954 = vmatprep.subr.bf16.mxu0 %v913
      %955 = vmatpush1.bf16.msra.mxu0 %v912
      %956 = vmatprep.subr.bf16.mxu0 %v909
      %957 = vmatpush1.bf16.msra.mxu0 %v908
      %958 = vmatprep.subr.bf16.mxu0 %v905
      %959 = vmatpush1.bf16.msra.mxu0 %v904
      %960 = vmatprep.subr.bf16.mxu0 %v901
      %961 = vmatpush1.bf16.msra.mxu0 %v900
      %962 = vmatprep.subr.bf16.mxu0 %v897
      %963 = vmatpush1.bf16.msra.mxu0 %v896
      %964 = vmatprep.subr.bf16.mxu0 %v893
      %965 = vmatpush1.bf16.msra.mxu0 %v892
      %966 = vmatprep.subr.bf16.mxu0 %v889
      %967 = vmatpush1.bf16.msra.mxu0 %v888
      %968 = vmatprep.subr.bf16.mxu0 0
      %969 = vmatpush2.bf16.msra.mxu0 0
      %970 = vmatprep.subr.bf16.mxu0 0
      %971 = vmatpush2.bf16.msra.mxu0 0
      %972 = vmatprep.subr.bf16.mxu0 0
      %973 = vmatpush2.bf16.msra.mxu0 0
      %974 = vmatprep.subr.bf16.mxu0 0
      %975 = vmatpush2.bf16.msra.mxu0 0
      %976 = vmatprep.subr.bf16.mxu0 0
      %977 = vmatpush2.bf16.msra.mxu0 0
      %978 = vmatprep.subr.bf16.mxu0 0
      %979 = vmatpush2.bf16.msra.mxu0 0
      %980 = vmatprep.subr.bf16.mxu0 0
      %981 = vmatpush2.bf16.msra.mxu0 0
      %982 = vmatprep.subr.bf16.mxu0 0
      %983 = vmatpush2.bf16.msra.mxu0 0
      %984 = vmatprep.mubr.bf16.mxu0 0
      %985 = vmatmul.mubr.bf16.gmra.mxu0 %v759
      %v986 = vpop.f32.mrf.mxu0
      %v987 = vadd.f32 0.0, %v986
      %v988 = vpop.f32.mrf.mxu0
      %v989 = vadd.f32 0.0, %v988
      %v990 = vpop.f32.mrf.mxu0
      %v991 = vpop.f32.mrf.mxu0
      %992 = vdwg.mxu0
      %993 = vmatprep.subr.bf16.mxu0 %v919
      %994 = vmatpush1.bf16.msra.mxu0 %v918
      %995 = vmatprep.subr.bf16.mxu0 %v915
      %996 = vmatpush1.bf16.msra.mxu0 %v914
      %997 = vmatprep.subr.bf16.mxu0 %v911
      %998 = vmatpush1.bf16.msra.mxu0 %v910
      %999 = vmatprep.subr.bf16.mxu0 %v907
      %1000 = vmatpush1.bf16.msra.mxu0 %v906
      %1001 = vmatprep.subr.bf16.mxu0 %v903
      %1002 = vmatpush1.bf16.msra.mxu0 %v902
      %1003 = vmatprep.subr.bf16.mxu0 %v899
      %1004 = vmatpush1.bf16.msra.mxu0 %v898
      %1005 = vmatprep.subr.bf16.mxu0 %v895
      %1006 = vmatpush1.bf16.msra.mxu0 %v894
      %1007 = vmatprep.subr.bf16.mxu0 %v891
      %1008 = vmatpush1.bf16.msra.mxu0 %v890
      %1009 = vmatprep.subr.bf16.mxu0 0
      %1010 = vmatpush2.bf16.msra.mxu0 0
      %1011 = vmatprep.subr.bf16.mxu0 0
      %1012 = vmatpush2.bf16.msra.mxu0 0
      %1013 = vmatprep.subr.bf16.mxu0 0
      %1014 = vmatpush2.bf16.msra.mxu0 0
      %1015 = vmatprep.subr.bf16.mxu0 0
      %1016 = vmatpush2.bf16.msra.mxu0 0
      %1017 = vmatprep.subr.bf16.mxu0 0
      %1018 = vmatpush2.bf16.msra.mxu0 0
      %1019 = vmatprep.subr.bf16.mxu0 0
      %1020 = vmatpush2.bf16.msra.mxu0 0
      %1021 = vmatprep.subr.bf16.mxu0 0
      %1022 = vmatpush2.bf16.msra.mxu0 0
      %1023 = vmatprep.subr.bf16.mxu0 0
      %1024 = vmatpush2.bf16.msra.mxu0 0
      %1025 = vmatprep.mubr.bf16.mxu0 0
      %1026 = vmatmul.mubr.bf16.gmra.mxu0 %v759
      %v1027 = vpop.f32.mrf.mxu0
      %v1028 = vadd.f32 0.0, %v1027
      %v1029 = vpop.f32.mrf.mxu0
      %v1030 = vadd.f32 0.0, %v1029
      %v1031 = vpop.f32.mrf.mxu0
      %v1032 = vpop.f32.mrf.mxu0
      %1033 = vdwg.mxu0
      %v1034 = vadd.f32 %v755, %v987
      %v1035 = vadd.f32 %v756, %v989
      %v1036 = vadd.f32 %v757, %v1028
      %v1037 = vadd.f32 %v758, %v1030
      %v1038 = vxor.u32 %v1034, 2147483648
      %v1039 = vxor.u32 %v1035, 2147483648
      %v1040 = vxor.u32 %v1036, 2147483648
      %v1041 = vmul.f32 %v1038, 1.442695
      %v1042 = vpow.pop %v1041
      %v1043 = vmul.f32 %v1039, 1.442695
      %v1044 = vpow.pop %v1043
      %v1045 = vmul.f32 %v1040, 1.442695
      %v1046 = vpow.pop %v1045
      %v1047 = vadd.f32 %v1042, 1.0
      %v1048 = vadd.f32 %v1044, 1.0
      %v1049 = vadd.f32 %v1046, 1.0
      %v1050 = vrcp.pop %v1047
      %v1051 = vmul.f32 1.0, %v1050
      %v1052 = vrcp.pop %v1048
      %v1053 = vmul.f32 1.0, %v1052
      %v1054 = vrcp.pop %v1049
      %v1055 = vmul.f32 1.0, %v1054
      %v1056 = vtanh.pop %v1037
      %v1057 = vmul.f32 %v1053, %v753
      %v1058 = vmul.f32 %v1051, %v1056
      %v1059 = vadd.f32 %v1057, %v1058
      %v1060 = vtanh.pop %v1059
      %v1061 = vmul.f32 %v1055, %v1060
      %1062 = vst [vmem:[#allocation4] sm:$0xff] %v1059
      %1063 = vst [vmem:[#allocation3] sm:$0xff] %v1061
      %v1064 = vpack.c.bf16 %v1061, %v1061
      %s1065 = scalar_lea.vmem %s311, 4
      %1066 = vst [vmem:[%s1065] sm:$0xf] %v1064
      %v1067 = vld [vmem:[#allocation3] sm:$0xff]
      %v1068 = vld [vmem:[#allocation4] sm:$0xff]
      %s1069 = scalar_lea.vmem %s294, 64
      %v1070 = vld [vmem:[%s1069] sm:$0xff]
      %v1071 = vld [vmem:[%s1069 + $0x8] sm:$0xff]
      %v1072 = vld [vmem:[%s1069 + $0x10] sm:$0xff]
      %v1073 = vld [vmem:[%s1069 + $0x18] sm:$0xff]
      %v1074 = vpack.c.bf16 %v1067, %v1067
      %v1075 = vld [vmem:[#allocation2] sm:$0xff]
      %v1076 = vld [vmem:[#allocation2 + $0x8] sm:$0xff]
      %v1077 = vld [vmem:[#allocation2 + $0x10] sm:$0xff]
      %v1078 = vld [vmem:[#allocation2 + $0x18] sm:$0xff]
      %v1079 = vld [vmem:[#allocation2 + $0x20] sm:$0xff]
      %v1080 = vld [vmem:[#allocation2 + $0x28] sm:$0xff]
      %v1081 = vld [vmem:[#allocation2 + $0x30] sm:$0xff]
      %v1082 = vld [vmem:[#allocation2 + $0x38] sm:$0xff]
      %v1083 = vld [vmem:[#allocation2 + $0x40] sm:$0xff]
      %v1084 = vld [vmem:[#allocation2 + $0x48] sm:$0xff]
      %v1085 = vld [vmem:[#allocation2 + $0x50] sm:$0xff]
      %v1086 = vld [vmem:[#allocation2 + $0x58] sm:$0xff]
      %v1087 = vld [vmem:[#allocation2 + $0x60] sm:$0xff]
      %v1088 = vld [vmem:[#allocation2 + $0x68] sm:$0xff]
      %v1089 = vld [vmem:[#allocation2 + $0x70] sm:$0xff]
      %v1090 = vld [vmem:[#allocation2 + $0x78] sm:$0xff]
      %v1091 = vld [vmem:[#allocation2 + $0x80] sm:$0xff]
      %v1092 = vld [vmem:[#allocation2 + $0x88] sm:$0xff]
      %v1093 = vld [vmem:[#allocation2 + $0x90] sm:$0xff]
      %v1094 = vld [vmem:[#allocation2 + $0x98] sm:$0xff]
      %v1095 = vld [vmem:[#allocation2 + $0xa0] sm:$0xff]
      %v1096 = vld [vmem:[#allocation2 + $0xa8] sm:$0xff]
      %v1097 = vld [vmem:[#allocation2 + $0xb0] sm:$0xff]
      %v1098 = vld [vmem:[#allocation2 + $0xb8] sm:$0xff]
      %v1099 = vld [vmem:[#allocation2 + $0xc0] sm:$0xff]
      %v1100 = vld [vmem:[#allocation2 + $0xc8] sm:$0xff]
      %v1101 = vld [vmem:[#allocation2 + $0xd0] sm:$0xff]
      %v1102 = vld [vmem:[#allocation2 + $0xd8] sm:$0xff]
      %v1103 = vld [vmem:[#allocation2 + $0xe0] sm:$0xff]
      %v1104 = vld [vmem:[#allocation2 + $0xe8] sm:$0xff]
      %v1105 = vld [vmem:[#allocation2 + $0xf0] sm:$0xff]
      %v1106 = vld [vmem:[#allocation2 + $0xf8] sm:$0xff]
      %v1139 = vunpack.c.l.b16 %v1075
      %v1140 = vunpack.c.h.b16 %v1075
      %v1141 = vunpack.c.l.b16 %v1076
      %v1142 = vunpack.c.h.b16 %v1076
      %v1143 = vunpack.c.l.b16 %v1077
      %v1144 = vunpack.c.h.b16 %v1077
      %v1145 = vunpack.c.l.b16 %v1078
      %v1146 = vunpack.c.h.b16 %v1078
      %v1147 = vunpack.c.l.b16 %v1079
      %v1148 = vunpack.c.h.b16 %v1079
      %v1149 = vunpack.c.l.b16 %v1080
      %v1150 = vunpack.c.h.b16 %v1080
      %v1151 = vunpack.c.l.b16 %v1081
      %v1152 = vunpack.c.h.b16 %v1081
      %v1153 = vunpack.c.l.b16 %v1082
      %v1154 = vunpack.c.h.b16 %v1082
      %v1155 = vunpack.c.l.b16 %v1083
      %v1156 = vunpack.c.h.b16 %v1083
      %v1157 = vunpack.c.l.b16 %v1084
      %v1158 = vunpack.c.h.b16 %v1084
      %v1159 = vunpack.c.l.b16 %v1085
      %v1160 = vunpack.c.h.b16 %v1085
      %v1161 = vunpack.c.l.b16 %v1086
      %v1162 = vunpack.c.h.b16 %v1086
      %v1163 = vunpack.c.l.b16 %v1087
      %v1164 = vunpack.c.h.b16 %v1087
      %v1165 = vunpack.c.l.b16 %v1088
      %v1166 = vunpack.c.h.b16 %v1088
      %v1167 = vunpack.c.l.b16 %v1089
      %v1168 = vunpack.c.h.b16 %v1089
      %v1169 = vunpack.c.l.b16 %v1090
      %v1170 = vunpack.c.h.b16 %v1090
      %v1171 = vunpack.c.l.b16 %v1091
      %v1172 = vunpack.c.h.b16 %v1091
      %v1173 = vunpack.c.l.b16 %v1092
      %v1174 = vunpack.c.h.b16 %v1092
      %v1175 = vunpack.c.l.b16 %v1093
      %v1176 = vunpack.c.h.b16 %v1093
      %v1177 = vunpack.c.l.b16 %v1094
      %v1178 = vunpack.c.h.b16 %v1094
      %v1179 = vunpack.c.l.b16 %v1095
      %v1180 = vunpack.c.h.b16 %v1095
      %v1181 = vunpack.c.l.b16 %v1096
      %v1182 = vunpack.c.h.b16 %v1096
      %v1183 = vunpack.c.l.b16 %v1097
      %v1184 = vunpack.c.h.b16 %v1097
      %v1185 = vunpack.c.l.b16 %v1098
      %v1186 = vunpack.c.h.b16 %v1098
      %v1187 = vunpack.c.l.b16 %v1099
      %v1188 = vunpack.c.h.b16 %v1099
      %v1189 = vunpack.c.l.b16 %v1100
      %v1190 = vunpack.c.h.b16 %v1100
      %v1191 = vunpack.c.l.b16 %v1101
      %v1192 = vunpack.c.h.b16 %v1101
      %v1193 = vunpack.c.l.b16 %v1102
      %v1194 = vunpack.c.h.b16 %v1102
      %v1195 = vunpack.c.l.b16 %v1103
      %v1196 = vunpack.c.h.b16 %v1103
      %v1197 = vunpack.c.l.b16 %v1104
      %v1198 = vunpack.c.h.b16 %v1104
      %v1199 = vunpack.c.l.b16 %v1105
      %v1200 = vunpack.c.h.b16 %v1105
      %v1201 = vunpack.c.l.b16 %v1106
      %v1202 = vunpack.c.h.b16 %v1106
      %v1203 = vpack.c.b16 %v1143, %v1139
      %v1204 = vpack.c.b16 %v1144, %v1140
      %v1205 = vpack.c.b16 %v1145, %v1141
      %v1206 = vpack.c.b16 %v1146, %v1142
      %v1207 = vpack.c.b16 %v1151, %v1147
      %v1208 = vpack.c.b16 %v1152, %v1148
      %v1209 = vpack.c.b16 %v1153, %v1149
      %v1210 = vpack.c.b16 %v1154, %v1150
      %v1211 = vpack.c.b16 %v1159, %v1155
      %v1212 = vpack.c.b16 %v1160, %v1156
      %v1213 = vpack.c.b16 %v1161, %v1157
      %v1214 = vpack.c.b16 %v1162, %v1158
      %v1215 = vpack.c.b16 %v1167, %v1163
      %v1216 = vpack.c.b16 %v1168, %v1164
      %v1217 = vpack.c.b16 %v1169, %v1165
      %v1218 = vpack.c.b16 %v1170, %v1166
      %v1219 = vpack.c.b16 %v1175, %v1171
      %v1220 = vpack.c.b16 %v1176, %v1172
      %v1221 = vpack.c.b16 %v1177, %v1173
      %v1222 = vpack.c.b16 %v1178, %v1174
      %v1223 = vpack.c.b16 %v1183, %v1179
      %v1224 = vpack.c.b16 %v1184, %v1180
      %v1225 = vpack.c.b16 %v1185, %v1181
      %v1226 = vpack.c.b16 %v1186, %v1182
      %v1227 = vpack.c.b16 %v1191, %v1187
      %v1228 = vpack.c.b16 %v1192, %v1188
      %v1229 = vpack.c.b16 %v1193, %v1189
      %v1230 = vpack.c.b16 %v1194, %v1190
      %v1231 = vpack.c.b16 %v1199, %v1195
      %v1232 = vpack.c.b16 %v1200, %v1196
      %v1233 = vpack.c.b16 %v1201, %v1197
      %v1234 = vpack.c.b16 %v1202, %v1198
      %1267 = vmatprep.subr.bf16.mxu0 %v1232
      %1268 = vmatpush1.bf16.msra.mxu0 %v1231
      %1269 = vmatprep.subr.bf16.mxu0 %v1228
      %1270 = vmatpush1.bf16.msra.mxu0 %v1227
      %1271 = vmatprep.subr.bf16.mxu0 %v1224
      %1272 = vmatpush1.bf16.msra.mxu0 %v1223
      %1273 = vmatprep.subr.bf16.mxu0 %v1220
      %1274 = vmatpush1.bf16.msra.mxu0 %v1219
      %1275 = vmatprep.subr.bf16.mxu0 %v1216
      %1276 = vmatpush1.bf16.msra.mxu0 %v1215
      %1277 = vmatprep.subr.bf16.mxu0 %v1212
      %1278 = vmatpush1.bf16.msra.mxu0 %v1211
      %1279 = vmatprep.subr.bf16.mxu0 %v1208
      %1280 = vmatpush1.bf16.msra.mxu0 %v1207
      %1281 = vmatprep.subr.bf16.mxu0 %v1204
      %1282 = vmatpush1.bf16.msra.mxu0 %v1203
      %1283 = vmatprep.subr.bf16.mxu0 0
      %1284 = vmatpush2.bf16.msra.mxu0 0
      %1285 = vmatprep.subr.bf16.mxu0 0
      %1286 = vmatpush2.bf16.msra.mxu0 0
      %1287 = vmatprep.subr.bf16.mxu0 0
      %1288 = vmatpush2.bf16.msra.mxu0 0
      %1289 = vmatprep.subr.bf16.mxu0 0
      %1290 = vmatpush2.bf16.msra.mxu0 0
      %1291 = vmatprep.subr.bf16.mxu0 0
      %1292 = vmatpush2.bf16.msra.mxu0 0
      %1293 = vmatprep.subr.bf16.mxu0 0
      %1294 = vmatpush2.bf16.msra.mxu0 0
      %1295 = vmatprep.subr.bf16.mxu0 0
      %1296 = vmatpush2.bf16.msra.mxu0 0
      %1297 = vmatprep.subr.bf16.mxu0 0
      %1298 = vmatpush2.bf16.msra.mxu0 0
      %1299 = vmatprep.mubr.bf16.mxu0 0
      %1300 = vmatmul.mubr.bf16.gmra.mxu0 %v1074
      %v1301 = vpop.f32.mrf.mxu0
      %v1302 = vadd.f32 0.0, %v1301
      %v1303 = vpop.f32.mrf.mxu0
      %v1304 = vadd.f32 0.0, %v1303
      %v1305 = vpop.f32.mrf.mxu0
      %v1306 = vpop.f32.mrf.mxu0
      %1307 = vdwg.mxu0
      %1308 = vmatprep.subr.bf16.mxu0 %v1234
      %1309 = vmatpush1.bf16.msra.mxu0 %v1233
      %1310 = vmatprep.subr.bf16.mxu0 %v1230
      %1311 = vmatpush1.bf16.msra.mxu0 %v1229
      %1312 = vmatprep.subr.bf16.mxu0 %v1226
      %1313 = vmatpush1.bf16.msra.mxu0 %v1225
      %1314 = vmatprep.subr.bf16.mxu0 %v1222
      %1315 = vmatpush1.bf16.msra.mxu0 %v1221
      %1316 = vmatprep.subr.bf16.mxu0 %v1218
      %1317 = vmatpush1.bf16.msra.mxu0 %v1217
      %1318 = vmatprep.subr.bf16.mxu0 %v1214
      %1319 = vmatpush1.bf16.msra.mxu0 %v1213
      %1320 = vmatprep.subr.bf16.mxu0 %v1210
      %1321 = vmatpush1.bf16.msra.mxu0 %v1209
      %1322 = vmatprep.subr.bf16.mxu0 %v1206
      %1323 = vmatpush1.bf16.msra.mxu0 %v1205
      %1324 = vmatprep.subr.bf16.mxu0 0
      %1325 = vmatpush2.bf16.msra.mxu0 0
      %1326 = vmatprep.subr.bf16.mxu0 0
      %1327 = vmatpush2.bf16.msra.mxu0 0
      %1328 = vmatprep.subr.bf16.mxu0 0
      %1329 = vmatpush2.bf16.msra.mxu0 0
      %1330 = vmatprep.subr.bf16.mxu0 0
      %1331 = vmatpush2.bf16.msra.mxu0 0
      %1332 = vmatprep.subr.bf16.mxu0 0
      %1333 = vmatpush2.bf16.msra.mxu0 0
      %1334 = vmatprep.subr.bf16.mxu0 0
      %1335 = vmatpush2.bf16.msra.mxu0 0
      %1336 = vmatprep.subr.bf16.mxu0 0
      %1337 = vmatpush2.bf16.msra.mxu0 0
      %1338 = vmatprep.subr.bf16.mxu0 0
      %1339 = vmatpush2.bf16.msra.mxu0 0
      %1340 = vmatprep.mubr.bf16.mxu0 0
      %1341 = vmatmul.mubr.bf16.gmra.mxu0 %v1074
      %v1342 = vpop.f32.mrf.mxu0
      %v1343 = vadd.f32 0.0, %v1342
      %v1344 = vpop.f32.mrf.mxu0
      %v1345 = vadd.f32 0.0, %v1344
      %v1346 = vpop.f32.mrf.mxu0
      %v1347 = vpop.f32.mrf.mxu0
      %1348 = vdwg.mxu0
      %v1349 = vadd.f32 %v1070, %v1302
      %v1350 = vadd.f32 %v1071, %v1304
      %v1351 = vadd.f32 %v1072, %v1343
      %v1352 = vadd.f32 %v1073, %v1345
      %v1353 = vxor.u32 %v1349, 2147483648
      %v1354 = vxor.u32 %v1350, 2147483648
      %v1355 = vxor.u32 %v1351, 2147483648
      %v1356 = vmul.f32 %v1353, 1.442695
      %v1357 = vpow.pop %v1356
      %v1358 = vmul.f32 %v1354, 1.442695
      %v1359 = vpow.pop %v1358
      %v1360 = vmul.f32 %v1355, 1.442695
      %v1361 = vpow.pop %v1360
      %v1362 = vadd.f32 %v1357, 1.0
      %v1363 = vadd.f32 %v1359, 1.0
      %v1364 = vadd.f32 %v1361, 1.0
      %v1365 = vrcp.pop %v1362
      %v1366 = vmul.f32 1.0, %v1365
      %v1367 = vrcp.pop %v1363
      %v1368 = vmul.f32 1.0, %v1367
      %v1369 = vrcp.pop %v1364
      %v1370 = vmul.f32 1.0, %v1369
      %v1371 = vtanh.pop %v1352
      %v1372 = vmul.f32 %v1368, %v1068
      %v1373 = vmul.f32 %v1366, %v1371
      %v1374 = vadd.f32 %v1372, %v1373
      %v1375 = vtanh.pop %v1374
      %v1376 = vmul.f32 %v1370, %v1375
      %1377 = vst [vmem:[#allocation4] sm:$0xff] %v1374
      %1378 = vst [vmem:[#allocation3] sm:$0xff] %v1376
      %v1379 = vpack.c.bf16 %v1376, %v1376
      %s1380 = scalar_lea.vmem %s311, 8
      %1381 = vst [vmem:[%s1380] sm:$0xf] %v1379
      %v1382 = vld [vmem:[#allocation3] sm:$0xff]
      %v1383 = vld [vmem:[#allocation4] sm:$0xff]
      %s1384 = scalar_lea.vmem %s294, 96
      %v1385 = vld [vmem:[%s1384] sm:$0xff]
      %v1386 = vld [vmem:[%s1384 + $0x8] sm:$0xff]
      %v1387 = vld [vmem:[%s1384 + $0x10] sm:$0xff]
      %v1388 = vld [vmem:[%s1384 + $0x18] sm:$0xff]
      %v1389 = vpack.c.bf16 %v1382, %v1382
      %v1390 = vld [vmem:[#allocation2] sm:$0xff]
      %v1391 = vld [vmem:[#allocation2 + $0x8] sm:$0xff]
      %v1392 = vld [vmem:[#allocation2 + $0x10] sm:$0xff]
      %v1393 = vld [vmem:[#allocation2 + $0x18] sm:$0xff]
      %v1394 = vld [vmem:[#allocation2 + $0x20] sm:$0xff]
      %v1395 = vld [vmem:[#allocation2 + $0x28] sm:$0xff]
      %v1396 = vld [vmem:[#allocation2 + $0x30] sm:$0xff]
      %v1397 = vld [vmem:[#allocation2 + $0x38] sm:$0xff]
      %v1398 = vld [vmem:[#allocation2 + $0x40] sm:$0xff]
      %v1399 = vld [vmem:[#allocation2 + $0x48] sm:$0xff]
      %v1400 = vld [vmem:[#allocation2 + $0x50] sm:$0xff]
      %v1401 = vld [vmem:[#allocation2 + $0x58] sm:$0xff]
      %v1402 = vld [vmem:[#allocation2 + $0x60] sm:$0xff]
      %v1403 = vld [vmem:[#allocation2 + $0x68] sm:$0xff]
      %v1404 = vld [vmem:[#allocation2 + $0x70] sm:$0xff]
      %v1405 = vld [vmem:[#allocation2 + $0x78] sm:$0xff]
      %v1406 = vld [vmem:[#allocation2 + $0x80] sm:$0xff]
      %v1407 = vld [vmem:[#allocation2 + $0x88] sm:$0xff]
      %v1408 = vld [vmem:[#allocation2 + $0x90] sm:$0xff]
      %v1409 = vld [vmem:[#allocation2 + $0x98] sm:$0xff]
      %v1410 = vld [vmem:[#allocation2 + $0xa0] sm:$0xff]
      %v1411 = vld [vmem:[#allocation2 + $0xa8] sm:$0xff]
      %v1412 = vld [vmem:[#allocation2 + $0xb0] sm:$0xff]
      %v1413 = vld [vmem:[#allocation2 + $0xb8] sm:$0xff]
      %v1414 = vld [vmem:[#allocation2 + $0xc0] sm:$0xff]
      %v1415 = vld [vmem:[#allocation2 + $0xc8] sm:$0xff]
      %v1416 = vld [vmem:[#allocation2 + $0xd0] sm:$0xff]
      %v1417 = vld [vmem:[#allocation2 + $0xd8] sm:$0xff]
      %v1418 = vld [vmem:[#allocation2 + $0xe0] sm:$0xff]
      %v1419 = vld [vmem:[#allocation2 + $0xe8] sm:$0xff]
      %v1420 = vld [vmem:[#allocation2 + $0xf0] sm:$0xff]
      %v1421 = vld [vmem:[#allocation2 + $0xf8] sm:$0xff]
      %v1454 = vunpack.c.l.b16 %v1390
      %v1455 = vunpack.c.h.b16 %v1390
      %v1456 = vunpack.c.l.b16 %v1391
      %v1457 = vunpack.c.h.b16 %v1391
      %v1458 = vunpack.c.l.b16 %v1392
      %v1459 = vunpack.c.h.b16 %v1392
      %v1460 = vunpack.c.l.b16 %v1393
      %v1461 = vunpack.c.h.b16 %v1393
      %v1462 = vunpack.c.l.b16 %v1394
      %v1463 = vunpack.c.h.b16 %v1394
      %v1464 = vunpack.c.l.b16 %v1395
      %v1465 = vunpack.c.h.b16 %v1395
      %v1466 = vunpack.c.l.b16 %v1396
      %v1467 = vunpack.c.h.b16 %v1396
      %v1468 = vunpack.c.l.b16 %v1397
      %v1469 = vunpack.c.h.b16 %v1397
      %v1470 = vunpack.c.l.b16 %v1398
      %v1471 = vunpack.c.h.b16 %v1398
      %v1472 = vunpack.c.l.b16 %v1399
      %v1473 = vunpack.c.h.b16 %v1399
      %v1474 = vunpack.c.l.b16 %v1400
      %v1475 = vunpack.c.h.b16 %v1400
      %v1476 = vunpack.c.l.b16 %v1401
      %v1477 = vunpack.c.h.b16 %v1401
      %v1478 = vunpack.c.l.b16 %v1402
      %v1479 = vunpack.c.h.b16 %v1402
      %v1480 = vunpack.c.l.b16 %v1403
      %v1481 = vunpack.c.h.b16 %v1403
      %v1482 = vunpack.c.l.b16 %v1404
      %v1483 = vunpack.c.h.b16 %v1404
      %v1484 = vunpack.c.l.b16 %v1405
      %v1485 = vunpack.c.h.b16 %v1405
      %v1486 = vunpack.c.l.b16 %v1406
      %v1487 = vunpack.c.h.b16 %v1406
      %v1488 = vunpack.c.l.b16 %v1407
      %v1489 = vunpack.c.h.b16 %v1407
      %v1490 = vunpack.c.l.b16 %v1408
      %v1491 = vunpack.c.h.b16 %v1408
      %v1492 = vunpack.c.l.b16 %v1409
      %v1493 = vunpack.c.h.b16 %v1409
      %v1494 = vunpack.c.l.b16 %v1410
      %v1495 = vunpack.c.h.b16 %v1410
      %v1496 = vunpack.c.l.b16 %v1411
      %v1497 = vunpack.c.h.b16 %v1411
      %v1498 = vunpack.c.l.b16 %v1412
      %v1499 = vunpack.c.h.b16 %v1412
      %v1500 = vunpack.c.l.b16 %v1413
      %v1501 = vunpack.c.h.b16 %v1413
      %v1502 = vunpack.c.l.b16 %v1414
      %v1503 = vunpack.c.h.b16 %v1414
      %v1504 = vunpack.c.l.b16 %v1415
      %v1505 = vunpack.c.h.b16 %v1415
      %v1506 = vunpack.c.l.b16 %v1416
      %v1507 = vunpack.c.h.b16 %v1416
      %v1508 = vunpack.c.l.b16 %v1417
      %v1509 = vunpack.c.h.b16 %v1417
      %v1510 = vunpack.c.l.b16 %v1418
      %v1511 = vunpack.c.h.b16 %v1418
      %v1512 = vunpack.c.l.b16 %v1419
      %v1513 = vunpack.c.h.b16 %v1419
      %v1514 = vunpack.c.l.b16 %v1420
      %v1515 = vunpack.c.h.b16 %v1420
      %v1516 = vunpack.c.l.b16 %v1421
      %v1517 = vunpack.c.h.b16 %v1421
      %v1518 = vpack.c.b16 %v1458, %v1454
      %v1519 = vpack.c.b16 %v1459, %v1455
      %v1520 = vpack.c.b16 %v1460, %v1456
      %v1521 = vpack.c.b16 %v1461, %v1457
      %v1522 = vpack.c.b16 %v1466, %v1462
      %v1523 = vpack.c.b16 %v1467, %v1463
      %v1524 = vpack.c.b16 %v1468, %v1464
      %v1525 = vpack.c.b16 %v1469, %v1465
      %v1526 = vpack.c.b16 %v1474, %v1470
      %v1527 = vpack.c.b16 %v1475, %v1471
      %v1528 = vpack.c.b16 %v1476, %v1472
      %v1529 = vpack.c.b16 %v1477, %v1473
      %v1530 = vpack.c.b16 %v1482, %v1478
      %v1531 = vpack.c.b16 %v1483, %v1479
      %v1532 = vpack.c.b16 %v1484, %v1480
      %v1533 = vpack.c.b16 %v1485, %v1481
      %v1534 = vpack.c.b16 %v1490, %v1486
      %v1535 = vpack.c.b16 %v1491, %v1487
      %v1536 = vpack.c.b16 %v1492, %v1488
      %v1537 = vpack.c.b16 %v1493, %v1489
      %v1538 = vpack.c.b16 %v1498, %v1494
      %v1539 = vpack.c.b16 %v1499, %v1495
      %v1540 = vpack.c.b16 %v1500, %v1496
      %v1541 = vpack.c.b16 %v1501, %v1497
      %v1542 = vpack.c.b16 %v1506, %v1502
      %v1543 = vpack.c.b16 %v1507, %v1503
      %v1544 = vpack.c.b16 %v1508, %v1504
      %v1545 = vpack.c.b16 %v1509, %v1505
      %v1546 = vpack.c.b16 %v1514, %v1510
      %v1547 = vpack.c.b16 %v1515, %v1511
      %v1548 = vpack.c.b16 %v1516, %v1512
      %v1549 = vpack.c.b16 %v1517, %v1513
      %1582 = vmatprep.subr.bf16.mxu0 %v1547
      %1583 = vmatpush1.bf16.msra.mxu0 %v1546
      %1584 = vmatprep.subr.bf16.mxu0 %v1543
      %1585 = vmatpush1.bf16.msra.mxu0 %v1542
      %1586 = vmatprep.subr.bf16.mxu0 %v1539
      %1587 = vmatpush1.bf16.msra.mxu0 %v1538
      %1588 = vmatprep.subr.bf16.mxu0 %v1535
      %1589 = vmatpush1.bf16.msra.mxu0 %v1534
      %1590 = vmatprep.subr.bf16.mxu0 %v1531
      %1591 = vmatpush1.bf16.msra.mxu0 %v1530
      %1592 = vmatprep.subr.bf16.mxu0 %v1527
      %1593 = vmatpush1.bf16.msra.mxu0 %v1526
      %1594 = vmatprep.subr.bf16.mxu0 %v1523
      %1595 = vmatpush1.bf16.msra.mxu0 %v1522
      %1596 = vmatprep.subr.bf16.mxu0 %v1519
      %1597 = vmatpush1.bf16.msra.mxu0 %v1518
      %1598 = vmatprep.subr.bf16.mxu0 0
      %1599 = vmatpush2.bf16.msra.mxu0 0
      %1600 = vmatprep.subr.bf16.mxu0 0
      %1601 = vmatpush2.bf16.msra.mxu0 0
      %1602 = vmatprep.subr.bf16.mxu0 0
      %1603 = vmatpush2.bf16.msra.mxu0 0
      %1604 = vmatprep.subr.bf16.mxu0 0
      %1605 = vmatpush2.bf16.msra.mxu0 0
      %1606 = vmatprep.subr.bf16.mxu0 0
      %1607 = vmatpush2.bf16.msra.mxu0 0
      %1608 = vmatprep.subr.bf16.mxu0 0
      %1609 = vmatpush2.bf16.msra.mxu0 0
      %1610 = vmatprep.subr.bf16.mxu0 0
      %1611 = vmatpush2.bf16.msra.mxu0 0
      %1612 = vmatprep.subr.bf16.mxu0 0
      %1613 = vmatpush2.bf16.msra.mxu0 0
      %1614 = vmatprep.mubr.bf16.mxu0 0
      %1615 = vmatmul.mubr.bf16.gmra.mxu0 %v1389
      %v1616 = vpop.f32.mrf.mxu0
      %v1617 = vadd.f32 0.0, %v1616
      %v1618 = vpop.f32.mrf.mxu0
      %v1619 = vadd.f32 0.0, %v1618
      %v1620 = vpop.f32.mrf.mxu0
      %v1621 = vpop.f32.mrf.mxu0
      %1622 = vdwg.mxu0
      %1623 = vmatprep.subr.bf16.mxu0 %v1549
      %1624 = vmatpush1.bf16.msra.mxu0 %v1548
      %1625 = vmatprep.subr.bf16.mxu0 %v1545
      %1626 = vmatpush1.bf16.msra.mxu0 %v1544
      %1627 = vmatprep.subr.bf16.mxu0 %v1541
      %1628 = vmatpush1.bf16.msra.mxu0 %v1540
      %1629 = vmatprep.subr.bf16.mxu0 %v1537
      %1630 = vmatpush1.bf16.msra.mxu0 %v1536
      %1631 = vmatprep.subr.bf16.mxu0 %v1533
      %1632 = vmatpush1.bf16.msra.mxu0 %v1532
      %1633 = vmatprep.subr.bf16.mxu0 %v1529
      %1634 = vmatpush1.bf16.msra.mxu0 %v1528
      %1635 = vmatprep.subr.bf16.mxu0 %v1525
      %1636 = vmatpush1.bf16.msra.mxu0 %v1524
      %1637 = vmatprep.subr.bf16.mxu0 %v1521
      %1638 = vmatpush1.bf16.msra.mxu0 %v1520
      %1639 = vmatprep.subr.bf16.mxu0 0
      %1640 = vmatpush2.bf16.msra.mxu0 0
      %1641 = vmatprep.subr.bf16.mxu0 0
      %1642 = vmatpush2.bf16.msra.mxu0 0
      %1643 = vmatprep.subr.bf16.mxu0 0
      %1644 = vmatpush2.bf16.msra.mxu0 0
      %1645 = vmatprep.subr.bf16.mxu0 0
      %1646 = vmatpush2.bf16.msra.mxu0 0
      %1647 = vmatprep.subr.bf16.mxu0 0
      %1648 = vmatpush2.bf16.msra.mxu0 0
      %1649 = vmatprep.subr.bf16.mxu0 0
      %1650 = vmatpush2.bf16.msra.mxu0 0
      %1651 = vmatprep.subr.bf16.mxu0 0
      %1652 = vmatpush2.bf16.msra.mxu0 0
      %1653 = vmatprep.subr.bf16.mxu0 0
      %1654 = vmatpush2.bf16.msra.mxu0 0
      %1655 = vmatprep.mubr.bf16.mxu0 0
      %1656 = vmatmul.mubr.bf16.gmra.mxu0 %v1389
      %v1657 = vpop.f32.mrf.mxu0
      %v1658 = vadd.f32 0.0, %v1657
      %v1659 = vpop.f32.mrf.mxu0
      %v1660 = vadd.f32 0.0, %v1659
      %v1661 = vpop.f32.mrf.mxu0
      %v1662 = vpop.f32.mrf.mxu0
      %1663 = vdwg.mxu0
      %v1664 = vadd.f32 %v1385, %v1617
      %v1665 = vadd.f32 %v1386, %v1619
      %v1666 = vadd.f32 %v1387, %v1658
      %v1667 = vadd.f32 %v1388, %v1660
      %v1668 = vxor.u32 %v1664, 2147483648
      %v1669 = vxor.u32 %v1665, 2147483648
      %v1670 = vxor.u32 %v1666, 2147483648
      %v1671 = vmul.f32 %v1668, 1.442695
      %v1672 = vpow.pop %v1671
      %v1673 = vmul.f32 %v1669, 1.442695
      %v1674 = vpow.pop %v1673
      %v1675 = vmul.f32 %v1670, 1.442695
      %v1676 = vpow.pop %v1675
      %v1677 = vadd.f32 %v1672, 1.0
      %v1678 = vadd.f32 %v1674, 1.0
      %v1679 = vadd.f32 %v1676, 1.0
      %v1680 = vrcp.pop %v1677
      %v1681 = vmul.f32 1.0, %v1680
      %v1682 = vrcp.pop %v1678
      %v1683 = vmul.f32 1.0, %v1682
      %v1684 = vrcp.pop %v1679
      %v1685 = vmul.f32 1.0, %v1684
      %v1686 = vtanh.pop %v1667
      %v1687 = vmul.f32 %v1683, %v1383
      %v1688 = vmul.f32 %v1681, %v1686
      %v1689 = vadd.f32 %v1687, %v1688
      %v1690 = vtanh.pop %v1689
      %v1691 = vmul.f32 %v1685, %v1690
      %1692 = vst [vmem:[#allocation4] sm:$0xff] %v1689
      %1693 = vst [vmem:[#allocation3] sm:$0xff] %v1691
      %v1694 = vpack.c.bf16 %v1691, %v1691
      %s1695 = scalar_lea.vmem %s311, 12
      %1696 = vst [vmem:[%s1695] sm:$0xf] %v1694
      %v1697 = vld [vmem:[#allocation3] sm:$0xff]
      %v1698 = vld [vmem:[#allocation4] sm:$0xff]
      %s1699 = scalar_lea.vmem %s294, 128
      %v1700 = vld [vmem:[%s1699] sm:$0xff]
      %v1701 = vld [vmem:[%s1699 + $0x8] sm:$0xff]
      %v1702 = vld [vmem:[%s1699 + $0x10] sm:$0xff]
      %v1703 = vld [vmem:[%s1699 + $0x18] sm:$0xff]
      %v1704 = vpack.c.bf16 %v1697, %v1697
      %v1705 = vld [vmem:[#allocation2] sm:$0xff]
      %v1706 = vld [vmem:[#allocation2 + $0x8] sm:$0xff]
      %v1707 = vld [vmem:[#allocation2 + $0x10] sm:$0xff]
      %v1708 = vld [vmem:[#allocation2 + $0x18] sm:$0xff]
      %v1709 = vld [vmem:[#allocation2 + $0x20] sm:$0xff]
      %v1710 = vld [vmem:[#allocation2 + $0x28] sm:$0xff]
      %v1711 = vld [vmem:[#allocation2 + $0x30] sm:$0xff]
      %v1712 = vld [vmem:[#allocation2 + $0x38] sm:$0xff]
      %v1713 = vld [vmem:[#allocation2 + $0x40] sm:$0xff]
      %v1714 = vld [vmem:[#allocation2 + $0x48] sm:$0xff]
      %v1715 = vld [vmem:[#allocation2 + $0x50] sm:$0xff]
      %v1716 = vld [vmem:[#allocation2 + $0x58] sm:$0xff]
      %v1717 = vld [vmem:[#allocation2 + $0x60] sm:$0xff]
      %v1718 = vld [vmem:[#allocation2 + $0x68] sm:$0xff]
      %v1719 = vld [vmem:[#allocation2 + $0x70] sm:$0xff]
      %v1720 = vld [vmem:[#allocation2 + $0x78] sm:$0xff]
      %v1721 = vld [vmem:[#allocation2 + $0x80] sm:$0xff]
      %v1722 = vld [vmem:[#allocation2 + $0x88] sm:$0xff]
      %v1723 = vld [vmem:[#allocation2 + $0x90] sm:$0xff]
      %v1724 = vld [vmem:[#allocation2 + $0x98] sm:$0xff]
      %v1725 = vld [vmem:[#allocation2 + $0xa0] sm:$0xff]
      %v1726 = vld [vmem:[#allocation2 + $0xa8] sm:$0xff]
      %v1727 = vld [vmem:[#allocation2 + $0xb0] sm:$0xff]
      %v1728 = vld [vmem:[#allocation2 + $0xb8] sm:$0xff]
      %v1729 = vld [vmem:[#allocation2 + $0xc0] sm:$0xff]
      %v1730 = vld [vmem:[#allocation2 + $0xc8] sm:$0xff]
      %v1731 = vld [vmem:[#allocation2 + $0xd0] sm:$0xff]
      %v1732 = vld [vmem:[#allocation2 + $0xd8] sm:$0xff]
      %v1733 = vld [vmem:[#allocation2 + $0xe0] sm:$0xff]
      %v1734 = vld [vmem:[#allocation2 + $0xe8] sm:$0xff]
      %v1735 = vld [vmem:[#allocation2 + $0xf0] sm:$0xff]
      %v1736 = vld [vmem:[#allocation2 + $0xf8] sm:$0xff]
      %v1769 = vunpack.c.l.b16 %v1705
      %v1770 = vunpack.c.h.b16 %v1705
      %v1771 = vunpack.c.l.b16 %v1706
      %v1772 = vunpack.c.h.b16 %v1706
      %v1773 = vunpack.c.l.b16 %v1707
      %v1774 = vunpack.c.h.b16 %v1707
      %v1775 = vunpack.c.l.b16 %v1708
      %v1776 = vunpack.c.h.b16 %v1708
      %v1777 = vunpack.c.l.b16 %v1709
      %v1778 = vunpack.c.h.b16 %v1709
      %v1779 = vunpack.c.l.b16 %v1710
      %v1780 = vunpack.c.h.b16 %v1710
      %v1781 = vunpack.c.l.b16 %v1711
      %v1782 = vunpack.c.h.b16 %v1711
      %v1783 = vunpack.c.l.b16 %v1712
      %v1784 = vunpack.c.h.b16 %v1712
      %v1785 = vunpack.c.l.b16 %v1713
      %v1786 = vunpack.c.h.b16 %v1713
      %v1787 = vunpack.c.l.b16 %v1714
      %v1788 = vunpack.c.h.b16 %v1714
      %v1789 = vunpack.c.l.b16 %v1715
      %v1790 = vunpack.c.h.b16 %v1715
      %v1791 = vunpack.c.l.b16 %v1716
      %v1792 = vunpack.c.h.b16 %v1716
      %v1793 = vunpack.c.l.b16 %v1717
      %v1794 = vunpack.c.h.b16 %v1717
      %v1795 = vunpack.c.l.b16 %v1718
      %v1796 = vunpack.c.h.b16 %v1718
      %v1797 = vunpack.c.l.b16 %v1719
      %v1798 = vunpack.c.h.b16 %v1719
      %v1799 = vunpack.c.l.b16 %v1720
      %v1800 = vunpack.c.h.b16 %v1720
      %v1801 = vunpack.c.l.b16 %v1721
      %v1802 = vunpack.c.h.b16 %v1721
      %v1803 = vunpack.c.l.b16 %v1722
      %v1804 = vunpack.c.h.b16 %v1722
      %v1805 = vunpack.c.l.b16 %v1723
      %v1806 = vunpack.c.h.b16 %v1723
      %v1807 = vunpack.c.l.b16 %v1724
      %v1808 = vunpack.c.h.b16 %v1724
      %v1809 = vunpack.c.l.b16 %v1725
      %v1810 = vunpack.c.h.b16 %v1725
      %v1811 = vunpack.c.l.b16 %v1726
      %v1812 = vunpack.c.h.b16 %v1726
      %v1813 = vunpack.c.l.b16 %v1727
      %v1814 = vunpack.c.h.b16 %v1727
      %v1815 = vunpack.c.l.b16 %v1728
      %v1816 = vunpack.c.h.b16 %v1728
      %v1817 = vunpack.c.l.b16 %v1729
      %v1818 = vunpack.c.h.b16 %v1729
      %v1819 = vunpack.c.l.b16 %v1730
      %v1820 = vunpack.c.h.b16 %v1730
      %v1821 = vunpack.c.l.b16 %v1731
      %v1822 = vunpack.c.h.b16 %v1731
      %v1823 = vunpack.c.l.b16 %v1732
      %v1824 = vunpack.c.h.b16 %v1732
      %v1825 = vunpack.c.l.b16 %v1733
      %v1826 = vunpack.c.h.b16 %v1733
      %v1827 = vunpack.c.l.b16 %v1734
      %v1828 = vunpack.c.h.b16 %v1734
      %v1829 = vunpack.c.l.b16 %v1735
      %v1830 = vunpack.c.h.b16 %v1735
      %v1831 = vunpack.c.l.b16 %v1736
      %v1832 = vunpack.c.h.b16 %v1736
      %v1833 = vpack.c.b16 %v1773, %v1769
      %v1834 = vpack.c.b16 %v1774, %v1770
      %v1835 = vpack.c.b16 %v1775, %v1771
      %v1836 = vpack.c.b16 %v1776, %v1772
      %v1837 = vpack.c.b16 %v1781, %v1777
      %v1838 = vpack.c.b16 %v1782, %v1778
      %v1839 = vpack.c.b16 %v1783, %v1779
      %v1840 = vpack.c.b16 %v1784, %v1780
      %v1841 = vpack.c.b16 %v1789, %v1785
      %v1842 = vpack.c.b16 %v1790, %v1786
      %v1843 = vpack.c.b16 %v1791, %v1787
      %v1844 = vpack.c.b16 %v1792, %v1788
      %v1845 = vpack.c.b16 %v1797, %v1793
      %v1846 = vpack.c.b16 %v1798, %v1794
      %v1847 = vpack.c.b16 %v1799, %v1795
      %v1848 = vpack.c.b16 %v1800, %v1796
      %v1849 = vpack.c.b16 %v1805, %v1801
      %v1850 = vpack.c.b16 %v1806, %v1802
      %v1851 = vpack.c.b16 %v1807, %v1803
      %v1852 = vpack.c.b16 %v1808, %v1804
      %v1853 = vpack.c.b16 %v1813, %v1809
      %v1854 = vpack.c.b16 %v1814, %v1810
      %v1855 = vpack.c.b16 %v1815, %v1811
      %v1856 = vpack.c.b16 %v1816, %v1812
      %v1857 = vpack.c.b16 %v1821, %v1817
      %v1858 = vpack.c.b16 %v1822, %v1818
      %v1859 = vpack.c.b16 %v1823, %v1819
      %v1860 = vpack.c.b16 %v1824, %v1820
      %v1861 = vpack.c.b16 %v1829, %v1825
      %v1862 = vpack.c.b16 %v1830, %v1826
      %v1863 = vpack.c.b16 %v1831, %v1827
      %v1864 = vpack.c.b16 %v1832, %v1828
      %1897 = vmatprep.subr.bf16.mxu0 %v1862
      %1898 = vmatpush1.bf16.msra.mxu0 %v1861
      %1899 = vmatprep.subr.bf16.mxu0 %v1858
      %1900 = vmatpush1.bf16.msra.mxu0 %v1857
      %1901 = vmatprep.subr.bf16.mxu0 %v1854
      %1902 = vmatpush1.bf16.msra.mxu0 %v1853
      %1903 = vmatprep.subr.bf16.mxu0 %v1850
      %1904 = vmatpush1.bf16.msra.mxu0 %v1849
      %1905 = vmatprep.subr.bf16.mxu0 %v1846
      %1906 = vmatpush1.bf16.msra.mxu0 %v1845
      %1907 = vmatprep.subr.bf16.mxu0 %v1842
      %1908 = vmatpush1.bf16.msra.mxu0 %v1841
      %1909 = vmatprep.subr.bf16.mxu0 %v1838
      %1910 = vmatpush1.bf16.msra.mxu0 %v1837
      %1911 = vmatprep.subr.bf16.mxu0 %v1834
      %1912 = vmatpush1.bf16.msra.mxu0 %v1833
      %1913 = vmatprep.subr.bf16.mxu0 0
      %1914 = vmatpush2.bf16.msra.mxu0 0
      %1915 = vmatprep.subr.bf16.mxu0 0
      %1916 = vmatpush2.bf16.msra.mxu0 0
      %1917 = vmatprep.subr.bf16.mxu0 0
      %1918 = vmatpush2.bf16.msra.mxu0 0
      %1919 = vmatprep.subr.bf16.mxu0 0
      %1920 = vmatpush2.bf16.msra.mxu0 0
      %1921 = vmatprep.subr.bf16.mxu0 0
      %1922 = vmatpush2.bf16.msra.mxu0 0
      %1923 = vmatprep.subr.bf16.mxu0 0
      %1924 = vmatpush2.bf16.msra.mxu0 0
      %1925 = vmatprep.subr.bf16.mxu0 0
      %1926 = vmatpush2.bf16.msra.mxu0 0
      %1927 = vmatprep.subr.bf16.mxu0 0
      %1928 = vmatpush2.bf16.msra.mxu0 0
      %1929 = vmatprep.mubr.bf16.mxu0 0
      %1930 = vmatmul.mubr.bf16.gmra.mxu0 %v1704
      %v1931 = vpop.f32.mrf.mxu0
      %v1932 = vadd.f32 0.0, %v1931
      %v1933 = vpop.f32.mrf.mxu0
      %v1934 = vadd.f32 0.0, %v1933
      %v1935 = vpop.f32.mrf.mxu0
      %v1936 = vpop.f32.mrf.mxu0
      %1937 = vdwg.mxu0
      %1938 = vmatprep.subr.bf16.mxu0 %v1864
      %1939 = vmatpush1.bf16.msra.mxu0 %v1863
      %1940 = vmatprep.subr.bf16.mxu0 %v1860
      %1941 = vmatpush1.bf16.msra.mxu0 %v1859
      %1942 = vmatprep.subr.bf16.mxu0 %v1856
      %1943 = vmatpush1.bf16.msra.mxu0 %v1855
      %1944 = vmatprep.subr.bf16.mxu0 %v1852
      %1945 = vmatpush1.bf16.msra.mxu0 %v1851
      %1946 = vmatprep.subr.bf16.mxu0 %v1848
      %1947 = vmatpush1.bf16.msra.mxu0 %v1847
      %1948 = vmatprep.subr.bf16.mxu0 %v1844
      %1949 = vmatpush1.bf16.msra.mxu0 %v1843
      %1950 = vmatprep.subr.bf16.mxu0 %v1840
      %1951 = vmatpush1.bf16.msra.mxu0 %v1839
      %1952 = vmatprep.subr.bf16.mxu0 %v1836
      %1953 = vmatpush1.bf16.msra.mxu0 %v1835
      %1954 = vmatprep.subr.bf16.mxu0 0
      %1955 = vmatpush2.bf16.msra.mxu0 0
      %1956 = vmatprep.subr.bf16.mxu0 0
      %1957 = vmatpush2.bf16.msra.mxu0 0
      %1958 = vmatprep.subr.bf16.mxu0 0
      %1959 = vmatpush2.bf16.msra.mxu0 0
      %1960 = vmatprep.subr.bf16.mxu0 0
      %1961 = vmatpush2.bf16.msra.mxu0 0
      %1962 = vmatprep.subr.bf16.mxu0 0
      %1963 = vmatpush2.bf16.msra.mxu0 0
      %1964 = vmatprep.subr.bf16.mxu0 0
      %1965 = vmatpush2.bf16.msra.mxu0 0
      %1966 = vmatprep.subr.bf16.mxu0 0
      %1967 = vmatpush2.bf16.msra.mxu0 0
      %1968 = vmatprep.subr.bf16.mxu0 0
      %1969 = vmatpush2.bf16.msra.mxu0 0
      %1970 = vmatprep.mubr.bf16.mxu0 0
      %1971 = vmatmul.mubr.bf16.gmra.mxu0 %v1704
      %v1972 = vpop.f32.mrf.mxu0
      %v1973 = vadd.f32 0.0, %v1972
      %v1974 = vpop.f32.mrf.mxu0
      %v1975 = vadd.f32 0.0, %v1974
      %v1976 = vpop.f32.mrf.mxu0
      %v1977 = vpop.f32.mrf.mxu0
      %1978 = vdwg.mxu0
      %v1979 = vadd.f32 %v1700, %v1932
      %v1980 = vadd.f32 %v1701, %v1934
      %v1981 = vadd.f32 %v1702, %v1973
      %v1982 = vadd.f32 %v1703, %v1975
      %v1983 = vxor.u32 %v1979, 2147483648
      %v1984 = vxor.u32 %v1980, 2147483648
      %v1985 = vxor.u32 %v1981, 2147483648
      %v1986 = vmul.f32 %v1983, 1.442695
      %v1987 = vpow.pop %v1986
      %v1988 = vmul.f32 %v1984, 1.442695
      %v1989 = vpow.pop %v1988
      %v1990 = vmul.f32 %v1985, 1.442695
      %v1991 = vpow.pop %v1990
      %v1992 = vadd.f32 %v1987, 1.0
      %v1993 = vadd.f32 %v1989, 1.0
      %v1994 = vadd.f32 %v1991, 1.0
      %v1995 = vrcp.pop %v1992
      %v1996 = vmul.f32 1.0, %v1995
      %v1997 = vrcp.pop %v1993
      %v1998 = vmul.f32 1.0, %v1997
      %v1999 = vrcp.pop %v1994
      %v2000 = vmul.f32 1.0, %v1999
      %v2001 = vtanh.pop %v1982
      %v2002 = vmul.f32 %v1998, %v1698
      %v2003 = vmul.f32 %v1996, %v2001
      %v2004 = vadd.f32 %v2002, %v2003
      %v2005 = vtanh.pop %v2004
      %v2006 = vmul.f32 %v2000, %v2005
      %2007 = vst [vmem:[#allocation4] sm:$0xff] %v2004
      %2008 = vst [vmem:[#allocation3] sm:$0xff] %v2006
      %v2009 = vpack.c.bf16 %v2006, %v2006
      %s2010 = scalar_lea.vmem %s311, 16
      %2011 = vst [vmem:[%s2010] sm:$0xf] %v2009
      %v2012 = vld [vmem:[#allocation3] sm:$0xff]
      %v2013 = vld [vmem:[#allocation4] sm:$0xff]
      %s2014 = scalar_lea.vmem %s294, 160
      %v2015 = vld [vmem:[%s2014] sm:$0xff]
      %v2016 = vld [vmem:[%s2014 + $0x8] sm:$0xff]
      %v2017 = vld [vmem:[%s2014 + $0x10] sm:$0xff]
      %v2018 = vld [vmem:[%s2014 + $0x18] sm:$0xff]
      %v2019 = vpack.c.bf16 %v2012, %v2012
      %v2020 = vld [vmem:[#allocation2] sm:$0xff]
      %v2021 = vld [vmem:[#allocation2 + $0x8] sm:$0xff]
      %v2022 = vld [vmem:[#allocation2 + $0x10] sm:$0xff]
      %v2023 = vld [vmem:[#allocation2 + $0x18] sm:$0xff]
      %v2024 = vld [vmem:[#allocation2 + $0x20] sm:$0xff]
      %v2025 = vld [vmem:[#allocation2 + $0x28] sm:$0xff]
      %v2026 = vld [vmem:[#allocation2 + $0x30] sm:$0xff]
      %v2027 = vld [vmem:[#allocation2 + $0x38] sm:$0xff]
      %v2028 = vld [vmem:[#allocation2 + $0x40] sm:$0xff]
      %v2029 = vld [vmem:[#allocation2 + $0x48] sm:$0xff]
      %v2030 = vld [vmem:[#allocation2 + $0x50] sm:$0xff]
      %v2031 = vld [vmem:[#allocation2 + $0x58] sm:$0xff]
      %v2032 = vld [vmem:[#allocation2 + $0x60] sm:$0xff]
      %v2033 = vld [vmem:[#allocation2 + $0x68] sm:$0xff]
      %v2034 = vld [vmem:[#allocation2 + $0x70] sm:$0xff]
      %v2035 = vld [vmem:[#allocation2 + $0x78] sm:$0xff]
      %v2036 = vld [vmem:[#allocation2 + $0x80] sm:$0xff]
      %v2037 = vld [vmem:[#allocation2 + $0x88] sm:$0xff]
      %v2038 = vld [vmem:[#allocation2 + $0x90] sm:$0xff]
      %v2039 = vld [vmem:[#allocation2 + $0x98] sm:$0xff]
      %v2040 = vld [vmem:[#allocation2 + $0xa0] sm:$0xff]
      %v2041 = vld [vmem:[#allocation2 + $0xa8] sm:$0xff]
      %v2042 = vld [vmem:[#allocation2 + $0xb0] sm:$0xff]
      %v2043 = vld [vmem:[#allocation2 + $0xb8] sm:$0xff]
      %v2044 = vld [vmem:[#allocation2 + $0xc0] sm:$0xff]
      %v2045 = vld [vmem:[#allocation2 + $0xc8] sm:$0xff]
      %v2046 = vld [vmem:[#allocation2 + $0xd0] sm:$0xff]
      %v2047 = vld [vmem:[#allocation2 + $0xd8] sm:$0xff]
      %v2048 = vld [vmem:[#allocation2 + $0xe0] sm:$0xff]
      %v2049 = vld [vmem:[#allocation2 + $0xe8] sm:$0xff]
      %v2050 = vld [vmem:[#allocation2 + $0xf0] sm:$0xff]
      %v2051 = vld [vmem:[#allocation2 + $0xf8] sm:$0xff]
      %v2084 = vunpack.c.l.b16 %v2020
      %v2085 = vunpack.c.h.b16 %v2020
      %v2086 = vunpack.c.l.b16 %v2021
      %v2087 = vunpack.c.h.b16 %v2021
      %v2088 = vunpack.c.l.b16 %v2022
      %v2089 = vunpack.c.h.b16 %v2022
      %v2090 = vunpack.c.l.b16 %v2023
      %v2091 = vunpack.c.h.b16 %v2023
      %v2092 = vunpack.c.l.b16 %v2024
      %v2093 = vunpack.c.h.b16 %v2024
      %v2094 = vunpack.c.l.b16 %v2025
      %v2095 = vunpack.c.h.b16 %v2025
      %v2096 = vunpack.c.l.b16 %v2026
      %v2097 = vunpack.c.h.b16 %v2026
      %v2098 = vunpack.c.l.b16 %v2027
      %v2099 = vunpack.c.h.b16 %v2027
      %v2100 = vunpack.c.l.b16 %v2028
      %v2101 = vunpack.c.h.b16 %v2028
      %v2102 = vunpack.c.l.b16 %v2029
      %v2103 = vunpack.c.h.b16 %v2029
      %v2104 = vunpack.c.l.b16 %v2030
      %v2105 = vunpack.c.h.b16 %v2030
      %v2106 = vunpack.c.l.b16 %v2031
      %v2107 = vunpack.c.h.b16 %v2031
      %v2108 = vunpack.c.l.b16 %v2032
      %v2109 = vunpack.c.h.b16 %v2032
      %v2110 = vunpack.c.l.b16 %v2033
      %v2111 = vunpack.c.h.b16 %v2033
      %v2112 = vunpack.c.l.b16 %v2034
      %v2113 = vunpack.c.h.b16 %v2034
      %v2114 = vunpack.c.l.b16 %v2035
      %v2115 = vunpack.c.h.b16 %v2035
      %v2116 = vunpack.c.l.b16 %v2036
      %v2117 = vunpack.c.h.b16 %v2036
      %v2118 = vunpack.c.l.b16 %v2037
      %v2119 = vunpack.c.h.b16 %v2037
      %v2120 = vunpack.c.l.b16 %v2038
      %v2121 = vunpack.c.h.b16 %v2038
      %v2122 = vunpack.c.l.b16 %v2039
      %v2123 = vunpack.c.h.b16 %v2039
      %v2124 = vunpack.c.l.b16 %v2040
      %v2125 = vunpack.c.h.b16 %v2040
      %v2126 = vunpack.c.l.b16 %v2041
      %v2127 = vunpack.c.h.b16 %v2041
      %v2128 = vunpack.c.l.b16 %v2042
      %v2129 = vunpack.c.h.b16 %v2042
      %v2130 = vunpack.c.l.b16 %v2043
      %v2131 = vunpack.c.h.b16 %v2043
      %v2132 = vunpack.c.l.b16 %v2044
      %v2133 = vunpack.c.h.b16 %v2044
      %v2134 = vunpack.c.l.b16 %v2045
      %v2135 = vunpack.c.h.b16 %v2045
      %v2136 = vunpack.c.l.b16 %v2046
      %v2137 = vunpack.c.h.b16 %v2046
      %v2138 = vunpack.c.l.b16 %v2047
      %v2139 = vunpack.c.h.b16 %v2047
      %v2140 = vunpack.c.l.b16 %v2048
      %v2141 = vunpack.c.h.b16 %v2048
      %v2142 = vunpack.c.l.b16 %v2049
      %v2143 = vunpack.c.h.b16 %v2049
      %v2144 = vunpack.c.l.b16 %v2050
      %v2145 = vunpack.c.h.b16 %v2050
      %v2146 = vunpack.c.l.b16 %v2051
      %v2147 = vunpack.c.h.b16 %v2051
      %v2148 = vpack.c.b16 %v2088, %v2084
      %v2149 = vpack.c.b16 %v2089, %v2085
      %v2150 = vpack.c.b16 %v2090, %v2086
      %v2151 = vpack.c.b16 %v2091, %v2087
      %v2152 = vpack.c.b16 %v2096, %v2092
      %v2153 = vpack.c.b16 %v2097, %v2093
      %v2154 = vpack.c.b16 %v2098, %v2094
      %v2155 = vpack.c.b16 %v2099, %v2095
      %v2156 = vpack.c.b16 %v2104, %v2100
      %v2157 = vpack.c.b16 %v2105, %v2101
      %v2158 = vpack.c.b16 %v2106, %v2102
      %v2159 = vpack.c.b16 %v2107, %v2103
      %v2160 = vpack.c.b16 %v2112, %v2108
      %v2161 = vpack.c.b16 %v2113, %v2109
      %v2162 = vpack.c.b16 %v2114, %v2110
      %v2163 = vpack.c.b16 %v2115, %v2111
      %v2164 = vpack.c.b16 %v2120, %v2116
      %v2165 = vpack.c.b16 %v2121, %v2117
      %v2166 = vpack.c.b16 %v2122, %v2118
      %v2167 = vpack.c.b16 %v2123, %v2119
      %v2168 = vpack.c.b16 %v2128, %v2124
      %v2169 = vpack.c.b16 %v2129, %v2125
      %v2170 = vpack.c.b16 %v2130, %v2126
      %v2171 = vpack.c.b16 %v2131, %v2127
      %v2172 = vpack.c.b16 %v2136, %v2132
      %v2173 = vpack.c.b16 %v2137, %v2133
      %v2174 = vpack.c.b16 %v2138, %v2134
      %v2175 = vpack.c.b16 %v2139, %v2135
      %v2176 = vpack.c.b16 %v2144, %v2140
      %v2177 = vpack.c.b16 %v2145, %v2141
      %v2178 = vpack.c.b16 %v2146, %v2142
      %v2179 = vpack.c.b16 %v2147, %v2143
      %2212 = vmatprep.subr.bf16.mxu0 %v2177
      %2213 = vmatpush1.bf16.msra.mxu0 %v2176
      %2214 = vmatprep.subr.bf16.mxu0 %v2173
      %2215 = vmatpush1.bf16.msra.mxu0 %v2172
      %2216 = vmatprep.subr.bf16.mxu0 %v2169
      %2217 = vmatpush1.bf16.msra.mxu0 %v2168
      %2218 = vmatprep.subr.bf16.mxu0 %v2165
      %2219 = vmatpush1.bf16.msra.mxu0 %v2164
      %2220 = vmatprep.subr.bf16.mxu0 %v2161
      %2221 = vmatpush1.bf16.msra.mxu0 %v2160
      %2222 = vmatprep.subr.bf16.mxu0 %v2157
      %2223 = vmatpush1.bf16.msra.mxu0 %v2156
      %2224 = vmatprep.subr.bf16.mxu0 %v2153
      %2225 = vmatpush1.bf16.msra.mxu0 %v2152
      %2226 = vmatprep.subr.bf16.mxu0 %v2149
      %2227 = vmatpush1.bf16.msra.mxu0 %v2148
      %2228 = vmatprep.subr.bf16.mxu0 0
      %2229 = vmatpush2.bf16.msra.mxu0 0
      %2230 = vmatprep.subr.bf16.mxu0 0
      %2231 = vmatpush2.bf16.msra.mxu0 0
      %2232 = vmatprep.subr.bf16.mxu0 0
      %2233 = vmatpush2.bf16.msra.mxu0 0
      %2234 = vmatprep.subr.bf16.mxu0 0
      %2235 = vmatpush2.bf16.msra.mxu0 0
      %2236 = vmatprep.subr.bf16.mxu0 0
      %2237 = vmatpush2.bf16.msra.mxu0 0
      %2238 = vmatprep.subr.bf16.mxu0 0
      %2239 = vmatpush2.bf16.msra.mxu0 0
      %2240 = vmatprep.subr.bf16.mxu0 0
      %2241 = vmatpush2.bf16.msra.mxu0 0
      %2242 = vmatprep.subr.bf16.mxu0 0
      %2243 = vmatpush2.bf16.msra.mxu0 0
      %2244 = vmatprep.mubr.bf16.mxu0 0
      %2245 = vmatmul.mubr.bf16.gmra.mxu0 %v2019
      %v2246 = vpop.f32.mrf.mxu0
      %v2247 = vadd.f32 0.0, %v2246
      %v2248 = vpop.f32.mrf.mxu0
      %v2249 = vadd.f32 0.0, %v2248
      %v2250 = vpop.f32.mrf.mxu0
      %v2251 = vpop.f32.mrf.mxu0
      %2252 = vdwg.mxu0
      %2253 = vmatprep.subr.bf16.mxu0 %v2179
      %2254 = vmatpush1.bf16.msra.mxu0 %v2178
      %2255 = vmatprep.subr.bf16.mxu0 %v2175
      %2256 = vmatpush1.bf16.msra.mxu0 %v2174
      %2257 = vmatprep.subr.bf16.mxu0 %v2171
      %2258 = vmatpush1.bf16.msra.mxu0 %v2170
      %2259 = vmatprep.subr.bf16.mxu0 %v2167
      %2260 = vmatpush1.bf16.msra.mxu0 %v2166
      %2261 = vmatprep.subr.bf16.mxu0 %v2163
      %2262 = vmatpush1.bf16.msra.mxu0 %v2162
      %2263 = vmatprep.subr.bf16.mxu0 %v2159
      %2264 = vmatpush1.bf16.msra.mxu0 %v2158
      %2265 = vmatprep.subr.bf16.mxu0 %v2155
      %2266 = vmatpush1.bf16.msra.mxu0 %v2154
      %2267 = vmatprep.subr.bf16.mxu0 %v2151
      %2268 = vmatpush1.bf16.msra.mxu0 %v2150
      %2269 = vmatprep.subr.bf16.mxu0 0
      %2270 = vmatpush2.bf16.msra.mxu0 0
      %2271 = vmatprep.subr.bf16.mxu0 0
      %2272 = vmatpush2.bf16.msra.mxu0 0
      %2273 = vmatprep.subr.bf16.mxu0 0
      %2274 = vmatpush2.bf16.msra.mxu0 0
      %2275 = vmatprep.subr.bf16.mxu0 0
      %2276 = vmatpush2.bf16.msra.mxu0 0
      %2277 = vmatprep.subr.bf16.mxu0 0
      %2278 = vmatpush2.bf16.msra.mxu0 0
      %2279 = vmatprep.subr.bf16.mxu0 0
      %2280 = vmatpush2.bf16.msra.mxu0 0
      %2281 = vmatprep.subr.bf16.mxu0 0
      %2282 = vmatpush2.bf16.msra.mxu0 0
      %2283 = vmatprep.subr.bf16.mxu0 0
      %2284 = vmatpush2.bf16.msra.mxu0 0
      %2285 = vmatprep.mubr.bf16.mxu0 0
      %2286 = vmatmul.mubr.bf16.gmra.mxu0 %v2019
      %v2287 = vpop.f32.mrf.mxu0
      %v2288 = vadd.f32 0.0, %v2287
      %v2289 = vpop.f32.mrf.mxu0
      %v2290 = vadd.f32 0.0, %v2289
      %v2291 = vpop.f32.mrf.mxu0
      %v2292 = vpop.f32.mrf.mxu0
      %2293 = vdwg.mxu0
      %v2294 = vadd.f32 %v2015, %v2247
      %v2295 = vadd.f32 %v2016, %v2249
      %v2296 = vadd.f32 %v2017, %v2288
      %v2297 = vadd.f32 %v2018, %v2290
      %v2298 = vxor.u32 %v2294, 2147483648
      %v2299 = vxor.u32 %v2295, 2147483648
      %v2300 = vxor.u32 %v2296, 2147483648
      %v2301 = vmul.f32 %v2298, 1.442695
      %v2302 = vpow.pop %v2301
      %v2303 = vmul.f32 %v2299, 1.442695
      %v2304 = vpow.pop %v2303
      %v2305 = vmul.f32 %v2300, 1.442695
      %v2306 = vpow.pop %v2305
      %v2307 = vadd.f32 %v2302, 1.0
      %v2308 = vadd.f32 %v2304, 1.0
      %v2309 = vadd.f32 %v2306, 1.0
      %v2310 = vrcp.pop %v2307
      %v2311 = vmul.f32 1.0, %v2310
      %v2312 = vrcp.pop %v2308
      %v2313 = vmul.f32 1.0, %v2312
      %v2314 = vrcp.pop %v2309
      %v2315 = vmul.f32 1.0, %v2314
      %v2316 = vtanh.pop %v2297
      %v2317 = vmul.f32 %v2313, %v2013
      %v2318 = vmul.f32 %v2311, %v2316
      %v2319 = vadd.f32 %v2317, %v2318
      %v2320 = vtanh.pop %v2319
      %v2321 = vmul.f32 %v2315, %v2320
      %2322 = vst [vmem:[#allocation4] sm:$0xff] %v2319
      %2323 = vst [vmem:[#allocation3] sm:$0xff] %v2321
      %v2324 = vpack.c.bf16 %v2321, %v2321
      %s2325 = scalar_lea.vmem %s311, 20
      %2326 = vst [vmem:[%s2325] sm:$0xf] %v2324
      %v2327 = vld [vmem:[#allocation3] sm:$0xff]
      %v2328 = vld [vmem:[#allocation4] sm:$0xff]
      %s2329 = scalar_lea.vmem %s294, 192
      %v2330 = vld [vmem:[%s2329] sm:$0xff]
      %v2331 = vld [vmem:[%s2329 + $0x8] sm:$0xff]
      %v2332 = vld [vmem:[%s2329 + $0x10] sm:$0xff]
      %v2333 = vld [vmem:[%s2329 + $0x18] sm:$0xff]
      %v2334 = vpack.c.bf16 %v2327, %v2327
      %v2335 = vld [vmem:[#allocation2] sm:$0xff]
      %v2336 = vld [vmem:[#allocation2 + $0x8] sm:$0xff]
      %v2337 = vld [vmem:[#allocation2 + $0x10] sm:$0xff]
      %v2338 = vld [vmem:[#allocation2 + $0x18] sm:$0xff]
      %v2339 = vld [vmem:[#allocation2 + $0x20] sm:$0xff]
      %v2340 = vld [vmem:[#allocation2 + $0x28] sm:$0xff]
      %v2341 = vld [vmem:[#allocation2 + $0x30] sm:$0xff]
      %v2342 = vld [vmem:[#allocation2 + $0x38] sm:$0xff]
      %v2343 = vld [vmem:[#allocation2 + $0x40] sm:$0xff]
      %v2344 = vld [vmem:[#allocation2 + $0x48] sm:$0xff]
      %v2345 = vld [vmem:[#allocation2 + $0x50] sm:$0xff]
      %v2346 = vld [vmem:[#allocation2 + $0x58] sm:$0xff]
      %v2347 = vld [vmem:[#allocation2 + $0x60] sm:$0xff]
      %v2348 = vld [vmem:[#allocation2 + $0x68] sm:$0xff]
      %v2349 = vld [vmem:[#allocation2 + $0x70] sm:$0xff]
      %v2350 = vld [vmem:[#allocation2 + $0x78] sm:$0xff]
      %v2351 = vld [vmem:[#allocation2 + $0x80] sm:$0xff]
      %v2352 = vld [vmem:[#allocation2 + $0x88] sm:$0xff]
      %v2353 = vld [vmem:[#allocation2 + $0x90] sm:$0xff]
      %v2354 = vld [vmem:[#allocation2 + $0x98] sm:$0xff]
      %v2355 = vld [vmem:[#allocation2 + $0xa0] sm:$0xff]
      %v2356 = vld [vmem:[#allocation2 + $0xa8] sm:$0xff]
      %v2357 = vld [vmem:[#allocation2 + $0xb0] sm:$0xff]
      %v2358 = vld [vmem:[#allocation2 + $0xb8] sm:$0xff]
      %v2359 = vld [vmem:[#allocation2 + $0xc0] sm:$0xff]
      %v2360 = vld [vmem:[#allocation2 + $0xc8] sm:$0xff]
      %v2361 = vld [vmem:[#allocation2 + $0xd0] sm:$0xff]
      %v2362 = vld [vmem:[#allocation2 + $0xd8] sm:$0xff]
      %v2363 = vld [vmem:[#allocation2 + $0xe0] sm:$0xff]
      %v2364 = vld [vmem:[#allocation2 + $0xe8] sm:$0xff]
      %v2365 = vld [vmem:[#allocation2 + $0xf0] sm:$0xff]
      %v2366 = vld [vmem:[#allocation2 + $0xf8] sm:$0xff]
      %v2399 = vunpack.c.l.b16 %v2335
      %v2400 = vunpack.c.h.b16 %v2335
      %v2401 = vunpack.c.l.b16 %v2336
      %v2402 = vunpack.c.h.b16 %v2336
      %v2403 = vunpack.c.l.b16 %v2337
      %v2404 = vunpack.c.h.b16 %v2337
      %v2405 = vunpack.c.l.b16 %v2338
      %v2406 = vunpack.c.h.b16 %v2338
      %v2407 = vunpack.c.l.b16 %v2339
      %v2408 = vunpack.c.h.b16 %v2339
      %v2409 = vunpack.c.l.b16 %v2340
      %v2410 = vunpack.c.h.b16 %v2340
      %v2411 = vunpack.c.l.b16 %v2341
      %v2412 = vunpack.c.h.b16 %v2341
      %v2413 = vunpack.c.l.b16 %v2342
      %v2414 = vunpack.c.h.b16 %v2342
      %v2415 = vunpack.c.l.b16 %v2343
      %v2416 = vunpack.c.h.b16 %v2343
      %v2417 = vunpack.c.l.b16 %v2344
      %v2418 = vunpack.c.h.b16 %v2344
      %v2419 = vunpack.c.l.b16 %v2345
      %v2420 = vunpack.c.h.b16 %v2345
      %v2421 = vunpack.c.l.b16 %v2346
      %v2422 = vunpack.c.h.b16 %v2346
      %v2423 = vunpack.c.l.b16 %v2347
      %v2424 = vunpack.c.h.b16 %v2347
      %v2425 = vunpack.c.l.b16 %v2348
      %v2426 = vunpack.c.h.b16 %v2348
      %v2427 = vunpack.c.l.b16 %v2349
      %v2428 = vunpack.c.h.b16 %v2349
      %v2429 = vunpack.c.l.b16 %v2350
      %v2430 = vunpack.c.h.b16 %v2350
      %v2431 = vunpack.c.l.b16 %v2351
      %v2432 = vunpack.c.h.b16 %v2351
      %v2433 = vunpack.c.l.b16 %v2352
      %v2434 = vunpack.c.h.b16 %v2352
      %v2435 = vunpack.c.l.b16 %v2353
      %v2436 = vunpack.c.h.b16 %v2353
      %v2437 = vunpack.c.l.b16 %v2354
      %v2438 = vunpack.c.h.b16 %v2354
      %v2439 = vunpack.c.l.b16 %v2355
      %v2440 = vunpack.c.h.b16 %v2355
      %v2441 = vunpack.c.l.b16 %v2356
      %v2442 = vunpack.c.h.b16 %v2356
      %v2443 = vunpack.c.l.b16 %v2357
      %v2444 = vunpack.c.h.b16 %v2357
      %v2445 = vunpack.c.l.b16 %v2358
      %v2446 = vunpack.c.h.b16 %v2358
      %v2447 = vunpack.c.l.b16 %v2359
      %v2448 = vunpack.c.h.b16 %v2359
      %v2449 = vunpack.c.l.b16 %v2360
      %v2450 = vunpack.c.h.b16 %v2360
      %v2451 = vunpack.c.l.b16 %v2361
      %v2452 = vunpack.c.h.b16 %v2361
      %v2453 = vunpack.c.l.b16 %v2362
      %v2454 = vunpack.c.h.b16 %v2362
      %v2455 = vunpack.c.l.b16 %v2363
      %v2456 = vunpack.c.h.b16 %v2363
      %v2457 = vunpack.c.l.b16 %v2364
      %v2458 = vunpack.c.h.b16 %v2364
      %v2459 = vunpack.c.l.b16 %v2365
      %v2460 = vunpack.c.h.b16 %v2365
      %v2461 = vunpack.c.l.b16 %v2366
      %v2462 = vunpack.c.h.b16 %v2366
      %v2463 = vpack.c.b16 %v2403, %v2399
      %v2464 = vpack.c.b16 %v2404, %v2400
      %v2465 = vpack.c.b16 %v2405, %v2401
      %v2466 = vpack.c.b16 %v2406, %v2402
      %v2467 = vpack.c.b16 %v2411, %v2407
      %v2468 = vpack.c.b16 %v2412, %v2408
      %v2469 = vpack.c.b16 %v2413, %v2409
      %v2470 = vpack.c.b16 %v2414, %v2410
      %v2471 = vpack.c.b16 %v2419, %v2415
      %v2472 = vpack.c.b16 %v2420, %v2416
      %v2473 = vpack.c.b16 %v2421, %v2417
      %v2474 = vpack.c.b16 %v2422, %v2418
      %v2475 = vpack.c.b16 %v2427, %v2423
      %v2476 = vpack.c.b16 %v2428, %v2424
      %v2477 = vpack.c.b16 %v2429, %v2425
      %v2478 = vpack.c.b16 %v2430, %v2426
      %v2479 = vpack.c.b16 %v2435, %v2431
      %v2480 = vpack.c.b16 %v2436, %v2432
      %v2481 = vpack.c.b16 %v2437, %v2433
      %v2482 = vpack.c.b16 %v2438, %v2434
      %v2483 = vpack.c.b16 %v2443, %v2439
      %v2484 = vpack.c.b16 %v2444, %v2440
      %v2485 = vpack.c.b16 %v2445, %v2441
      %v2486 = vpack.c.b16 %v2446, %v2442
      %v2487 = vpack.c.b16 %v2451, %v2447
      %v2488 = vpack.c.b16 %v2452, %v2448
      %v2489 = vpack.c.b16 %v2453, %v2449
      %v2490 = vpack.c.b16 %v2454, %v2450
      %v2491 = vpack.c.b16 %v2459, %v2455
      %v2492 = vpack.c.b16 %v2460, %v2456
      %v2493 = vpack.c.b16 %v2461, %v2457
      %v2494 = vpack.c.b16 %v2462, %v2458
      %2527 = vmatprep.subr.bf16.mxu0 %v2492
      %2528 = vmatpush1.bf16.msra.mxu0 %v2491
      %2529 = vmatprep.subr.bf16.mxu0 %v2488
      %2530 = vmatpush1.bf16.msra.mxu0 %v2487
      %2531 = vmatprep.subr.bf16.mxu0 %v2484
      %2532 = vmatpush1.bf16.msra.mxu0 %v2483
      %2533 = vmatprep.subr.bf16.mxu0 %v2480
      %2534 = vmatpush1.bf16.msra.mxu0 %v2479
      %2535 = vmatprep.subr.bf16.mxu0 %v2476
      %2536 = vmatpush1.bf16.msra.mxu0 %v2475
      %2537 = vmatprep.subr.bf16.mxu0 %v2472
      %2538 = vmatpush1.bf16.msra.mxu0 %v2471
      %2539 = vmatprep.subr.bf16.mxu0 %v2468
      %2540 = vmatpush1.bf16.msra.mxu0 %v2467
      %2541 = vmatprep.subr.bf16.mxu0 %v2464
      %2542 = vmatpush1.bf16.msra.mxu0 %v2463
      %2543 = vmatprep.subr.bf16.mxu0 0
      %2544 = vmatpush2.bf16.msra.mxu0 0
      %2545 = vmatprep.subr.bf16.mxu0 0
      %2546 = vmatpush2.bf16.msra.mxu0 0
      %2547 = vmatprep.subr.bf16.mxu0 0
      %2548 = vmatpush2.bf16.msra.mxu0 0
      %2549 = vmatprep.subr.bf16.mxu0 0
      %2550 = vmatpush2.bf16.msra.mxu0 0
      %2551 = vmatprep.subr.bf16.mxu0 0
      %2552 = vmatpush2.bf16.msra.mxu0 0
      %2553 = vmatprep.subr.bf16.mxu0 0
      %2554 = vmatpush2.bf16.msra.mxu0 0
      %2555 = vmatprep.subr.bf16.mxu0 0
      %2556 = vmatpush2.bf16.msra.mxu0 0
      %2557 = vmatprep.subr.bf16.mxu0 0
      %2558 = vmatpush2.bf16.msra.mxu0 0
      %2559 = vmatprep.mubr.bf16.mxu0 0
      %2560 = vmatmul.mubr.bf16.gmra.mxu0 %v2334
      %v2561 = vpop.f32.mrf.mxu0
      %v2562 = vadd.f32 0.0, %v2561
      %v2563 = vpop.f32.mrf.mxu0
      %v2564 = vadd.f32 0.0, %v2563
      %v2565 = vpop.f32.mrf.mxu0
      %v2566 = vpop.f32.mrf.mxu0
      %2567 = vdwg.mxu0
      %2568 = vmatprep.subr.bf16.mxu0 %v2494
      %2569 = vmatpush1.bf16.msra.mxu0 %v2493
      %2570 = vmatprep.subr.bf16.mxu0 %v2490
      %2571 = vmatpush1.bf16.msra.mxu0 %v2489
      %2572 = vmatprep.subr.bf16.mxu0 %v2486
      %2573 = vmatpush1.bf16.msra.mxu0 %v2485
      %2574 = vmatprep.subr.bf16.mxu0 %v2482
      %2575 = vmatpush1.bf16.msra.mxu0 %v2481
      %2576 = vmatprep.subr.bf16.mxu0 %v2478
      %2577 = vmatpush1.bf16.msra.mxu0 %v2477
      %2578 = vmatprep.subr.bf16.mxu0 %v2474
      %2579 = vmatpush1.bf16.msra.mxu0 %v2473
      %2580 = vmatprep.subr.bf16.mxu0 %v2470
      %2581 = vmatpush1.bf16.msra.mxu0 %v2469
      %2582 = vmatprep.subr.bf16.mxu0 %v2466
      %2583 = vmatpush1.bf16.msra.mxu0 %v2465
      %2584 = vmatprep.subr.bf16.mxu0 0
      %2585 = vmatpush2.bf16.msra.mxu0 0
      %2586 = vmatprep.subr.bf16.mxu0 0
      %2587 = vmatpush2.bf16.msra.mxu0 0
      %2588 = vmatprep.subr.bf16.mxu0 0
      %2589 = vmatpush2.bf16.msra.mxu0 0
      %2590 = vmatprep.subr.bf16.mxu0 0
      %2591 = vmatpush2.bf16.msra.mxu0 0
      %2592 = vmatprep.subr.bf16.mxu0 0
      %2593 = vmatpush2.bf16.msra.mxu0 0
      %2594 = vmatprep.subr.bf16.mxu0 0
      %2595 = vmatpush2.bf16.msra.mxu0 0
      %2596 = vmatprep.subr.bf16.mxu0 0
      %2597 = vmatpush2.bf16.msra.mxu0 0
      %2598 = vmatprep.subr.bf16.mxu0 0
      %2599 = vmatpush2.bf16.msra.mxu0 0
      %2600 = vmatprep.mubr.bf16.mxu0 0
      %2601 = vmatmul.mubr.bf16.gmra.mxu0 %v2334
      %v2602 = vpop.f32.mrf.mxu0
      %v2603 = vadd.f32 0.0, %v2602
      %v2604 = vpop.f32.mrf.mxu0
      %v2605 = vadd.f32 0.0, %v2604
      %v2606 = vpop.f32.mrf.mxu0
      %v2607 = vpop.f32.mrf.mxu0
      %2608 = vdwg.mxu0
      %v2609 = vadd.f32 %v2330, %v2562
      %v2610 = vadd.f32 %v2331, %v2564
      %v2611 = vadd.f32 %v2332, %v2603
      %v2612 = vadd.f32 %v2333, %v2605
      %v2613 = vxor.u32 %v2609, 2147483648
      %v2614 = vxor.u32 %v2610, 2147483648
      %v2615 = vxor.u32 %v2611, 2147483648
      %v2616 = vmul.f32 %v2613, 1.442695
      %v2617 = vpow.pop %v2616
      %v2618 = vmul.f32 %v2614, 1.442695
      %v2619 = vpow.pop %v2618
      %v2620 = vmul.f32 %v2615, 1.442695
      %v2621 = vpow.pop %v2620
      %v2622 = vadd.f32 %v2617, 1.0
      %v2623 = vadd.f32 %v2619, 1.0
      %v2624 = vadd.f32 %v2621, 1.0
      %v2625 = vrcp.pop %v2622
      %v2626 = vmul.f32 1.0, %v2625
      %v2627 = vrcp.pop %v2623
      %v2628 = vmul.f32 1.0, %v2627
      %v2629 = vrcp.pop %v2624
      %v2630 = vmul.f32 1.0, %v2629
      %v2631 = vtanh.pop %v2612
      %v2632 = vmul.f32 %v2628, %v2328
      %v2633 = vmul.f32 %v2626, %v2631
      %v2634 = vadd.f32 %v2632, %v2633
      %v2635 = vtanh.pop %v2634
      %v2636 = vmul.f32 %v2630, %v2635
      %2637 = vst [vmem:[#allocation4] sm:$0xff] %v2634
      %2638 = vst [vmem:[#allocation3] sm:$0xff] %v2636
      %v2639 = vpack.c.bf16 %v2636, %v2636
      %s2640 = scalar_lea.vmem %s311, 24
      %2641 = vst [vmem:[%s2640] sm:$0xf] %v2639
      %v2642 = vld [vmem:[#allocation3] sm:$0xff]
      %v2643 = vld [vmem:[#allocation4] sm:$0xff]
      %s2644 = scalar_lea.vmem %s294, 224
      %v2645 = vld [vmem:[%s2644] sm:$0xff]
      %v2646 = vld [vmem:[%s2644 + $0x8] sm:$0xff]
      %v2647 = vld [vmem:[%s2644 + $0x10] sm:$0xff]
      %v2648 = vld [vmem:[%s2644 + $0x18] sm:$0xff]
      %v2649 = vpack.c.bf16 %v2642, %v2642
      %v2650 = vld [vmem:[#allocation2] sm:$0xff]
      %v2651 = vld [vmem:[#allocation2 + $0x8] sm:$0xff]
      %v2652 = vld [vmem:[#allocation2 + $0x10] sm:$0xff]
      %v2653 = vld [vmem:[#allocation2 + $0x18] sm:$0xff]
      %v2654 = vld [vmem:[#allocation2 + $0x20] sm:$0xff]
      %v2655 = vld [vmem:[#allocation2 + $0x28] sm:$0xff]
      %v2656 = vld [vmem:[#allocation2 + $0x30] sm:$0xff]
      %v2657 = vld [vmem:[#allocation2 + $0x38] sm:$0xff]
      %v2658 = vld [vmem:[#allocation2 + $0x40] sm:$0xff]
      %v2659 = vld [vmem:[#allocation2 + $0x48] sm:$0xff]
      %v2660 = vld [vmem:[#allocation2 + $0x50] sm:$0xff]
      %v2661 = vld [vmem:[#allocation2 + $0x58] sm:$0xff]
      %v2662 = vld [vmem:[#allocation2 + $0x60] sm:$0xff]
      %v2663 = vld [vmem:[#allocation2 + $0x68] sm:$0xff]
      %v2664 = vld [vmem:[#allocation2 + $0x70] sm:$0xff]
      %v2665 = vld [vmem:[#allocation2 + $0x78] sm:$0xff]
      %v2666 = vld [vmem:[#allocation2 + $0x80] sm:$0xff]
      %v2667 = vld [vmem:[#allocation2 + $0x88] sm:$0xff]
      %v2668 = vld [vmem:[#allocation2 + $0x90] sm:$0xff]
      %v2669 = vld [vmem:[#allocation2 + $0x98] sm:$0xff]
      %v2670 = vld [vmem:[#allocation2 + $0xa0] sm:$0xff]
      %v2671 = vld [vmem:[#allocation2 + $0xa8] sm:$0xff]
      %v2672 = vld [vmem:[#allocation2 + $0xb0] sm:$0xff]
      %v2673 = vld [vmem:[#allocation2 + $0xb8] sm:$0xff]
      %v2674 = vld [vmem:[#allocation2 + $0xc0] sm:$0xff]
      %v2675 = vld [vmem:[#allocation2 + $0xc8] sm:$0xff]
      %v2676 = vld [vmem:[#allocation2 + $0xd0] sm:$0xff]
      %v2677 = vld [vmem:[#allocation2 + $0xd8] sm:$0xff]
      %v2678 = vld [vmem:[#allocation2 + $0xe0] sm:$0xff]
      %v2679 = vld [vmem:[#allocation2 + $0xe8] sm:$0xff]
      %v2680 = vld [vmem:[#allocation2 + $0xf0] sm:$0xff]
      %v2681 = vld [vmem:[#allocation2 + $0xf8] sm:$0xff]
      %v2714 = vunpack.c.l.b16 %v2650
      %v2715 = vunpack.c.h.b16 %v2650
      %v2716 = vunpack.c.l.b16 %v2651
      %v2717 = vunpack.c.h.b16 %v2651
      %v2718 = vunpack.c.l.b16 %v2652
      %v2719 = vunpack.c.h.b16 %v2652
      %v2720 = vunpack.c.l.b16 %v2653
      %v2721 = vunpack.c.h.b16 %v2653
      %v2722 = vunpack.c.l.b16 %v2654
      %v2723 = vunpack.c.h.b16 %v2654
      %v2724 = vunpack.c.l.b16 %v2655
      %v2725 = vunpack.c.h.b16 %v2655
      %v2726 = vunpack.c.l.b16 %v2656
      %v2727 = vunpack.c.h.b16 %v2656
      %v2728 = vunpack.c.l.b16 %v2657
      %v2729 = vunpack.c.h.b16 %v2657
      %v2730 = vunpack.c.l.b16 %v2658
      %v2731 = vunpack.c.h.b16 %v2658
      %v2732 = vunpack.c.l.b16 %v2659
      %v2733 = vunpack.c.h.b16 %v2659
      %v2734 = vunpack.c.l.b16 %v2660
      %v2735 = vunpack.c.h.b16 %v2660
      %v2736 = vunpack.c.l.b16 %v2661
      %v2737 = vunpack.c.h.b16 %v2661
      %v2738 = vunpack.c.l.b16 %v2662
      %v2739 = vunpack.c.h.b16 %v2662
      %v2740 = vunpack.c.l.b16 %v2663
      %v2741 = vunpack.c.h.b16 %v2663
      %v2742 = vunpack.c.l.b16 %v2664
      %v2743 = vunpack.c.h.b16 %v2664
      %v2744 = vunpack.c.l.b16 %v2665
      %v2745 = vunpack.c.h.b16 %v2665
      %v2746 = vunpack.c.l.b16 %v2666
      %v2747 = vunpack.c.h.b16 %v2666
      %v2748 = vunpack.c.l.b16 %v2667
      %v2749 = vunpack.c.h.b16 %v2667
      %v2750 = vunpack.c.l.b16 %v2668
      %v2751 = vunpack.c.h.b16 %v2668
      %v2752 = vunpack.c.l.b16 %v2669
      %v2753 = vunpack.c.h.b16 %v2669
      %v2754 = vunpack.c.l.b16 %v2670
      %v2755 = vunpack.c.h.b16 %v2670
      %v2756 = vunpack.c.l.b16 %v2671
      %v2757 = vunpack.c.h.b16 %v2671
      %v2758 = vunpack.c.l.b16 %v2672
      %v2759 = vunpack.c.h.b16 %v2672
      %v2760 = vunpack.c.l.b16 %v2673
      %v2761 = vunpack.c.h.b16 %v2673
      %v2762 = vunpack.c.l.b16 %v2674
      %v2763 = vunpack.c.h.b16 %v2674
      %v2764 = vunpack.c.l.b16 %v2675
      %v2765 = vunpack.c.h.b16 %v2675
      %v2766 = vunpack.c.l.b16 %v2676
      %v2767 = vunpack.c.h.b16 %v2676
      %v2768 = vunpack.c.l.b16 %v2677
      %v2769 = vunpack.c.h.b16 %v2677
      %v2770 = vunpack.c.l.b16 %v2678
      %v2771 = vunpack.c.h.b16 %v2678
      %v2772 = vunpack.c.l.b16 %v2679
      %v2773 = vunpack.c.h.b16 %v2679
      %v2774 = vunpack.c.l.b16 %v2680
      %v2775 = vunpack.c.h.b16 %v2680
      %v2776 = vunpack.c.l.b16 %v2681
      %v2777 = vunpack.c.h.b16 %v2681
      %v2778 = vpack.c.b16 %v2718, %v2714
      %v2779 = vpack.c.b16 %v2719, %v2715
      %v2780 = vpack.c.b16 %v2720, %v2716
      %v2781 = vpack.c.b16 %v2721, %v2717
      %v2782 = vpack.c.b16 %v2726, %v2722
      %v2783 = vpack.c.b16 %v2727, %v2723
      %v2784 = vpack.c.b16 %v2728, %v2724
      %v2785 = vpack.c.b16 %v2729, %v2725
      %v2786 = vpack.c.b16 %v2734, %v2730
      %v2787 = vpack.c.b16 %v2735, %v2731
      %v2788 = vpack.c.b16 %v2736, %v2732
      %v2789 = vpack.c.b16 %v2737, %v2733
      %v2790 = vpack.c.b16 %v2742, %v2738
      %v2791 = vpack.c.b16 %v2743, %v2739
      %v2792 = vpack.c.b16 %v2744, %v2740
      %v2793 = vpack.c.b16 %v2745, %v2741
      %v2794 = vpack.c.b16 %v2750, %v2746
      %v2795 = vpack.c.b16 %v2751, %v2747
      %v2796 = vpack.c.b16 %v2752, %v2748
      %v2797 = vpack.c.b16 %v2753, %v2749
      %v2798 = vpack.c.b16 %v2758, %v2754
      %v2799 = vpack.c.b16 %v2759, %v2755
      %v2800 = vpack.c.b16 %v2760, %v2756
      %v2801 = vpack.c.b16 %v2761, %v2757
      %v2802 = vpack.c.b16 %v2766, %v2762
      %v2803 = vpack.c.b16 %v2767, %v2763
      %v2804 = vpack.c.b16 %v2768, %v2764
      %v2805 = vpack.c.b16 %v2769, %v2765
      %v2806 = vpack.c.b16 %v2774, %v2770
      %v2807 = vpack.c.b16 %v2775, %v2771
      %v2808 = vpack.c.b16 %v2776, %v2772
      %v2809 = vpack.c.b16 %v2777, %v2773
      %2842 = vmatprep.subr.bf16.mxu0 %v2807
      %2843 = vmatpush1.bf16.msra.mxu0 %v2806
      %2844 = vmatprep.subr.bf16.mxu0 %v2803
      %2845 = vmatpush1.bf16.msra.mxu0 %v2802
      %2846 = vmatprep.subr.bf16.mxu0 %v2799
      %2847 = vmatpush1.bf16.msra.mxu0 %v2798
      %2848 = vmatprep.subr.bf16.mxu0 %v2795
      %2849 = vmatpush1.bf16.msra.mxu0 %v2794
      %2850 = vmatprep.subr.bf16.mxu0 %v2791
      %2851 = vmatpush1.bf16.msra.mxu0 %v2790
      %2852 = vmatprep.subr.bf16.mxu0 %v2787
      %2853 = vmatpush1.bf16.msra.mxu0 %v2786
      %2854 = vmatprep.subr.bf16.mxu0 %v2783
      %2855 = vmatpush1.bf16.msra.mxu0 %v2782
      %2856 = vmatprep.subr.bf16.mxu0 %v2779
      %2857 = vmatpush1.bf16.msra.mxu0 %v2778
      %2858 = vmatprep.subr.bf16.mxu0 0
      %2859 = vmatpush2.bf16.msra.mxu0 0
      %2860 = vmatprep.subr.bf16.mxu0 0
      %2861 = vmatpush2.bf16.msra.mxu0 0
      %2862 = vmatprep.subr.bf16.mxu0 0
      %2863 = vmatpush2.bf16.msra.mxu0 0
      %2864 = vmatprep.subr.bf16.mxu0 0
      %2865 = vmatpush2.bf16.msra.mxu0 0
      %2866 = vmatprep.subr.bf16.mxu0 0
      %2867 = vmatpush2.bf16.msra.mxu0 0
      %2868 = vmatprep.subr.bf16.mxu0 0
      %2869 = vmatpush2.bf16.msra.mxu0 0
      %2870 = vmatprep.subr.bf16.mxu0 0
      %2871 = vmatpush2.bf16.msra.mxu0 0
      %2872 = vmatprep.subr.bf16.mxu0 0
      %2873 = vmatpush2.bf16.msra.mxu0 0
      %2874 = vmatprep.mubr.bf16.mxu0 0
      %2875 = vmatmul.mubr.bf16.gmra.mxu0 %v2649
      %v2876 = vpop.f32.mrf.mxu0
      %v2877 = vadd.f32 0.0, %v2876
      %v2878 = vpop.f32.mrf.mxu0
      %v2879 = vadd.f32 0.0, %v2878
      %v2880 = vpop.f32.mrf.mxu0
      %v2881 = vpop.f32.mrf.mxu0
      %2882 = vdwg.mxu0
      %2883 = vmatprep.subr.bf16.mxu0 %v2809
      %2884 = vmatpush1.bf16.msra.mxu0 %v2808
      %2885 = vmatprep.subr.bf16.mxu0 %v2805
      %2886 = vmatpush1.bf16.msra.mxu0 %v2804
      %2887 = vmatprep.subr.bf16.mxu0 %v2801
      %2888 = vmatpush1.bf16.msra.mxu0 %v2800
      %2889 = vmatprep.subr.bf16.mxu0 %v2797
      %2890 = vmatpush1.bf16.msra.mxu0 %v2796
      %2891 = vmatprep.subr.bf16.mxu0 %v2793
      %2892 = vmatpush1.bf16.msra.mxu0 %v2792
      %2893 = vmatprep.subr.bf16.mxu0 %v2789
      %2894 = vmatpush1.bf16.msra.mxu0 %v2788
      %2895 = vmatprep.subr.bf16.mxu0 %v2785
      %2896 = vmatpush1.bf16.msra.mxu0 %v2784
      %2897 = vmatprep.subr.bf16.mxu0 %v2781
      %2898 = vmatpush1.bf16.msra.mxu0 %v2780
      %2899 = vmatprep.subr.bf16.mxu0 0
      %2900 = vmatpush2.bf16.msra.mxu0 0
      %2901 = vmatprep.subr.bf16.mxu0 0
      %2902 = vmatpush2.bf16.msra.mxu0 0
      %2903 = vmatprep.subr.bf16.mxu0 0
      %2904 = vmatpush2.bf16.msra.mxu0 0
      %2905 = vmatprep.subr.bf16.mxu0 0
      %2906 = vmatpush2.bf16.msra.mxu0 0
      %2907 = vmatprep.subr.bf16.mxu0 0
      %2908 = vmatpush2.bf16.msra.mxu0 0
      %2909 = vmatprep.subr.bf16.mxu0 0
      %2910 = vmatpush2.bf16.msra.mxu0 0
      %2911 = vmatprep.subr.bf16.mxu0 0
      %2912 = vmatpush2.bf16.msra.mxu0 0
      %2913 = vmatprep.subr.bf16.mxu0 0
      %2914 = vmatpush2.bf16.msra.mxu0 0
      %2915 = vmatprep.mubr.bf16.mxu0 0
      %2916 = vmatmul.mubr.bf16.gmra.mxu0 %v2649
      %v2917 = vpop.f32.mrf.mxu0
      %v2918 = vadd.f32 0.0, %v2917
      %v2919 = vpop.f32.mrf.mxu0
      %v2920 = vadd.f32 0.0, %v2919
      %v2921 = vpop.f32.mrf.mxu0
      %v2922 = vpop.f32.mrf.mxu0
      %2923 = vdwg.mxu0
      %v2924 = vadd.f32 %v2645, %v2877
      %v2925 = vadd.f32 %v2646, %v2879
      %v2926 = vadd.f32 %v2647, %v2918
      %v2927 = vadd.f32 %v2648, %v2920
      %v2928 = vxor.u32 %v2924, 2147483648
      %v2929 = vxor.u32 %v2925, 2147483648
      %v2930 = vxor.u32 %v2926, 2147483648
      %v2931 = vmul.f32 %v2928, 1.442695
      %v2932 = vpow.pop %v2931
      %v2933 = vmul.f32 %v2929, 1.442695
      %v2934 = vpow.pop %v2933
      %v2935 = vmul.f32 %v2930, 1.442695
      %v2936 = vpow.pop %v2935
      %v2937 = vadd.f32 %v2932, 1.0
      %v2938 = vadd.f32 %v2934, 1.0
      %v2939 = vadd.f32 %v2936, 1.0
      %v2940 = vrcp.pop %v2937
      %v2941 = vmul.f32 1.0, %v2940
      %v2942 = vrcp.pop %v2938
      %v2943 = vmul.f32 1.0, %v2942
      %v2944 = vrcp.pop %v2939
      %v2945 = vmul.f32 1.0, %v2944
      %v2946 = vtanh.pop %v2927
      %v2947 = vmul.f32 %v2943, %v2643
      %v2948 = vmul.f32 %v2941, %v2946
      %v2949 = vadd.f32 %v2947, %v2948
      %v2950 = vtanh.pop %v2949
      %v2951 = vmul.f32 %v2945, %v2950
      %2952 = vst [vmem:[#allocation4] sm:$0xff] %v2949
      %2953 = vst [vmem:[#allocation3] sm:$0xff] %v2951
      %v2954 = vpack.c.bf16 %v2951, %v2951
      %s2955 = scalar_lea.vmem %s311, 28
      %2956 = vst [vmem:[%s2955] sm:$0xf] %v2954
      %p2957 = scmp.eq.s32.totalorder %s23, 1
      // Predicated region
      $region71: #{lm_lstm_forward.6} parent=31 // pred_check
        %p2958 = pneg %p2957
      $region72: #{lm_lstm_forward.6} parent=31 // pred_check_branch
        %2960 = sbr.rel (%p2958) target = $region74
      $region73: #{lm_lstm_forward.6} parent=31 // pred_region
        %v2961 = vld [vmem:[#allocation3] sm:$0xff]
        %2962 = vst [vmem:[%s316] sm:$0xff] %v2961
        %v2963 = vld [vmem:[#allocation4] sm:$0xff]
        %2964 = vst [vmem:[%s320] sm:$0xff] %v2963
      $region74: #{lm_lstm_forward.6} parent=31 // pred_fallthru
        _
      %s2965 = smul.u32 8, %s23
      %p2966 = scmp.lt.s32.totalorder %s2965, 15
      %s2967 = scalar_select %p2966, %s2965, 15
      %p2968 = scmp.lt.s32.totalorder %s22, 0
      %s2969 = scalar_select %p2968, %s22, 0
      %s2970 = sadd.s32 %s2969, %s2967
      %s2971 = smul.addr %s2970, 4
      %s2972 = scalar_lea.vmem %s4, %s2971
      %p2973 = scmp.lt.s32.totalorder %s22, 0
      %s2974 = scalar_select %p2973, %s22, 0
      %s2975 = smul.addr %s2974, 8
      %s2976 = scalar_lea.vmem %s5, %s2975
      %p2977 = scmp.lt.s32.totalorder %s22, 0
      %s2978 = scalar_select %p2977, %s22, 0
      %s2979 = smul.addr %s2978, 8
      %s2980 = scalar_lea.vmem %s6, %s2979
      // Predicated region
      $region75: #{lm_lstm_forward.6} parent=31 // pred_check
        %p2981 = pneg %p130
      $region76: #{lm_lstm_forward.6} parent=31 // pred_check_branch
        %2983 = sbr.rel (%p2981) target = $region78
      $region77: #{lm_lstm_forward.6} parent=31 // pred_region
        %s2984 = smul.u32 8, %s23
      $region78: #{lm_lstm_forward.6} parent=31 // pred_fallthru
        _
      // Predicated region
      $region79: #{lm_lstm_forward.6} parent=31 // pred_check
        %p2985 = pneg %p156
      $region80: #{lm_lstm_forward.6} parent=31 // pred_check_branch
        %2987 = sbr.rel (%p2985) target = $region82
      $region81: #{lm_lstm_forward.6} parent=31 // pred_region
        _
      $region82: #{lm_lstm_forward.6} parent=31 // pred_fallthru
        _
      // Predicated region
      $region83: #{lm_lstm_forward.6} parent=31 // pred_check
        %p2988 = pneg %p182
      $region84: #{lm_lstm_forward.6} parent=31 // pred_check_branch
        %2990 = sbr.rel (%p2988) target = $region86
      $region85: #{lm_lstm_forward.6} parent=31 // pred_region
        _
      $region86: #{lm_lstm_forward.6} parent=31 // pred_fallthru
        _
      // Predicated region
      $region87: #{lm_lstm_forward.6} parent=31 // pred_check
        %p2991 = pneg %p156
      $region88: #{lm_lstm_forward.6} parent=31 // pred_check_branch
        %2993 = sbr.rel (%p2991) target = $region90
      $region89: #{lm_lstm_forward.6} parent=31 // pred_region
        %p2994 = scmp.lt.s32.totalorder %s22, 0
        %s2995 = scalar_select %p2994, %s22, 0
        %s2996 = smul.addr %s2995, 8
        %s2997 = scalar_lea.vmem %s5, %s2996
      $region90: #{lm_lstm_forward.6} parent=31 // pred_fallthru
        _
      // Predicated region
      $region91: #{lm_lstm_forward.6} parent=31 // pred_check
        %p2998 = pneg %p182
      $region92: #{lm_lstm_forward.6} parent=31 // pred_check_branch
        %3000 = sbr.rel (%p2998) target = $region94
      $region93: #{lm_lstm_forward.6} parent=31 // pred_region
        %p3001 = scmp.lt.s32.totalorder %s22, 0
        %s3002 = scalar_select %p3001, %s22, 0
        %s3003 = smul.addr %s3002, 8
        %s3004 = scalar_lea.vmem %s6, %s3003
      $region94: #{lm_lstm_forward.6} parent=31 // pred_fallthru
        _
    $region32: #{lm_lstm_forward.6} parent=5 // pred_fallthru
      _
    %p3005 = scmp.le.s32.totalorder 2, %s13
    // Predicated region
    $region95: #{lm_lstm_forward.6} parent=5 // pred_check
      %p3006 = pneg %p3005
    $region96: #{lm_lstm_forward.6} parent=5 // pred_check_branch
      %3008 = sbr.rel (%p3006) target = $region98
    $region97: #{lm_lstm_forward.6} parent=5 // pred_region
      %s3009 = ssub.s32 %s13, 2
      // Predicated region
      $region99: #{lm_lstm_forward.6} parent=97 // pred_check
        %p3010 = pneg %p136
      $region100: #{lm_lstm_forward.6} parent=97 // pred_check_branch
        %3012 = sbr.rel (%p3010) target = $region102
      $region101: #{lm_lstm_forward.6} parent=97 // pred_region
        %s3013 = smul.u32 8, %s25
        %p3014 = scmp.lt.s32.totalorder %s3013, 15
        %s3015 = scalar_select %p3014, %s3013, 15
        %p3016 = scmp.lt.s32.totalorder %s24, 0
        %s3017 = scalar_select %p3016, %s24, 0
        %s3018 = sadd.s32 %s3017, %s3015
        %s3019 = smul.addr %s3018, 4
        %s3020 = scalar_lea.vmem %s4, %s3019
      $region102: #{lm_lstm_forward.6} parent=97 // pred_fallthru
        _
    $region98: #{lm_lstm_forward.6} parent=5 // pred_fallthru
      _
  $region6: #{lm_lstm_forward.6} parent=0 // loop_footer
    %s17 = sadd.s32 1, %s13
  $region7: #{lm_lstm_forward.6} parent=0 // loop_footer_branch
    %12 = sbr.rel target = $region3
  $region8: #{lm_lstm_forward.6} parent=0 // loop_exit
    _
  %3021 = vsyncmov [#allocation5]
  %s3022 = vpop.sfrf %3021
  %p3023 = scmp.eq.s32.totalorder %s3022, 0
  %p3024 = pneg %p3023
  %3026 = shalt.err (%p3024)

</llo_original>
